<compile_context>
chip_gen: v6e
topology: v6e:2x2x1
jax: 0.10.0
libtpu: 0.0.40
codegen_flags: <defaults>
</compile_context>

<pallas_src>
import functools

import jax
import jax.numpy as jnp
from jax.experimental import pallas as pl
from jax.experimental.pallas import tpu as pltpu

MAX_ROW_TILE = 1024          # row tile for the compute (MLP / edge) kernels
MIN_ROW_BLOCKS = 2           # >=2 grid steps so v7x megacore has a parallel axis
SEG_ROW_TILE = 512           # reduction row tile for the segment mean
SEG_TILE = 512               # segment (output) tile for the segment mean
_VMEM_LIMIT = 32 * 1024 * 1024


def _ceil_to(x, m):
    return ((x + m - 1) // m) * m


def _plan(rows, max_tile, min_blocks=1, gran=8):
    """Return (padded_rows, tile).  Single full block when small, else tiled."""
    rows = max(int(rows), 1)
    if min_blocks <= 1 and rows <= max_tile:
        p = _ceil_to(rows, gran)
        return p, p
    tile = min(max_tile, _ceil_to(-(-rows // min_blocks), gran))
    p = _ceil_to(rows, tile)
    return p, tile


def _pad_rows_to(x, target, fill=0):
    r = x.shape[0]
    if r == target:
        return x
    pad = jnp.full((target - r,) + x.shape[1:], fill, x.dtype)
    return jnp.concatenate([x, pad], axis=0)


def _mosaic(sem):
    return pltpu.CompilerParams(dimension_semantics=sem,
                                vmem_limit_bytes=_VMEM_LIMIT)


# --------------------------------------------------------------------------
# Fused edge kernel:
#   geometry (radial, Gaussian smearing) + edge_mlp (Linear-SiLU-Linear-SiLU)
#   + SchNet coord_update Linear.
#   Output layout (bf16, lane-padded to a multiple of 128):
#     [ edge_feat (Hh) | coord_diff*cu (3) | zeros | ones(count col, last) ]
# --------------------------------------------------------------------------
def _edge_fused_kernel(ex_ref, d_ref, off_ref, w1c_ref, w1r_ref, b1_ref,
                       w2_ref, b2_ref, wcg_ref, bc_ref, o_ref, *, coeff, Hh):
    d = d_ref[...]                                   # [T, 3] coord_diff (f32)
    T = d.shape[0]
    W = o_ref.shape[1]

    r2 = jnp.sum(d * d, axis=1, keepdims=True)       # radial = sum of squares
    ew = jnp.sqrt(r2)                                # edge_weight (norm)
    dd = ew - off_ref[...]                           # [T, G]
    gauss = jnp.exp(coeff * dd * dd)                 # GaussianSmearing (EUP)

    xb = ex_ref[...]                                 # [T, 2H+ea] bf16
    # single MXU pass: columns [0:Hh] = edge_mlp W1 (minus the radial row),
    # column [Hh] = coord_update weight rows for (nf_row, nf_col).
    hc = jnp.dot(xb, w1c_ref[...], preferred_element_type=jnp.float32)  # [T, Hh+1]

    h1 = hc[:, :Hh] + r2 * w1r_ref[...] + b1_ref[...]
    h1 = h1 * jax.nn.sigmoid(h1)                     # SiLU
    ef = jnp.dot(h1.astype(jnp.bfloat16), w2_ref[...],
                 preferred_element_type=jnp.float32) + b2_ref[...]
    ef = ef * jax.nn.sigmoid(ef)                     # SiLU -> edge_feat [T, Hh]

    # coord_update: gaussian head on VPU+XLU (no Dout=1 MXU pass)
    cu = (hc[:, Hh:Hh + 1]
          + jnp.sum(gauss * wcg_ref[...], axis=1, keepdims=True)
          + bc_ref[...])                             # [T, 1]

    o_ref[:, :Hh] = ef.astype(o_ref.dtype)
    o_ref[:, Hh:Hh + 3] = (d * cu).astype(o_ref.dtype)
    if W > Hh + 4:
        o_ref[:, Hh + 3:W - 1] = jnp.zeros((T, W - Hh - 4), o_ref.dtype)
    o_ref[:, W - 1:W] = jnp.ones((T, 1), o_ref.dtype)   # count column (last)


def pallas_edge_fused(ex, d, offset, coeff, w1c, w1r, b1, w2, b2, wcg_row, bc,
                      *, tile):
    Rp, Dex = ex.shape
    Hh = w2.shape[0]
    G = offset.shape[1]
    W = _ceil_to(Hh + 4, 128)
    return pl.pallas_call(
        functools.partial(_edge_fused_kernel, coeff=float(coeff), Hh=int(Hh)),
        out_shape=jax.ShapeDtypeStruct((Rp, W), jnp.bfloat16),
        grid=(Rp // tile,),
        in_specs=[
            pl.BlockSpec((tile, Dex), lambda i: (i, 0)),
            pl.BlockSpec((tile, 3), lambda i: (i, 0)),
            pl.BlockSpec((1, G), lambda i: (0, 0)),
            pl.BlockSpec((Dex, Hh + 1), lambda i: (0, 0)),
            pl.BlockSpec((1, Hh), lambda i: (0, 0)),
            pl.BlockSpec((1, Hh), lambda i: (0, 0)),
            pl.BlockSpec((Hh, Hh), lambda i: (0, 0)),
            pl.BlockSpec((1, Hh), lambda i: (0, 0)),
            pl.BlockSpec((1, G), lambda i: (0, 0)),
            pl.BlockSpec((1, 1), lambda i: (0, 0)),
        ],
        out_specs=pl.BlockSpec((tile, W), lambda i: (i, 0)),
        compiler_params=_mosaic(("parallel",)),
    )(ex.astype(jnp.bfloat16), d.astype(jnp.float32), offset,
      w1c.astype(jnp.bfloat16), w1r, b1.reshape(1, -1),
      w2.astype(jnp.bfloat16), b2.reshape(1, -1),
      wcg_row, bc.reshape(1, 1))


# --------------------------------------------------------------------------
# Fused virtual-edge kernel:
#   edge_mlp_virtual + coord_mlp_r_virtual + coord_mlp_v_virtual
#   output (bf16, lane-padded to 128-multiple) = [vef | r_fac | v_fac | zeros]
# --------------------------------------------------------------------------
def _virtual_edge_kernel(x_ref, w1_ref, b1_ref, w2_ref, b2_ref,
                         wrv1_ref, brv1_ref, wrv2_ref, o_ref):
    x = x_ref[...]                                           # bf16
    h1 = jnp.dot(x, w1_ref[...], preferred_element_type=jnp.float32) + b1_ref[...]
    h1 = h1 * jax.nn.sigmoid(h1)
    vef = jnp.dot(h1.astype(jnp.bfloat16), w2_ref[...],
                  preferred_element_type=jnp.float32) + b2_ref[...]
    vef = vef * jax.nn.sigmoid(vef)                          # [T, Hh]
    hrv = jnp.dot(vef.astype(jnp.bfloat16), wrv1_ref[...],
                  preferred_element_type=jnp.float32) + brv1_ref[...]
    hrv = hrv * jax.nn.sigmoid(hrv)                          # [T, 2*Hh]
    rv = jnp.dot(hrv.astype(jnp.bfloat16), wrv2_ref[...],
                 preferred_element_type=jnp.float32)         # [T, 2] bias-free heads

    T, Hh = vef.shape
    W = o_ref.shape[1]
    o_ref[:, :Hh] = vef.astype(o_ref.dtype)
    o_ref[:, Hh:Hh + 2] = rv.astype(o_ref.dtype)
    if W > Hh + 2:
        o_ref[:, Hh + 2:] = jnp.zeros((T, W - Hh - 2), o_ref.dtype)


def pallas_virtual_edge(x, w1, b1, w2, b2, wrv1, brv1, wrv2):
    x = x.astype(jnp.bfloat16)
    R, Dv = x.shape
    Hh = w2.shape[0]
    W = _ceil_to(Hh + 2, 128)
    Rp, T = _plan(R, MAX_ROW_TILE, MIN_ROW_BLOCKS, 16)
    xp = _pad_rows_to(x, Rp)
    out = pl.pallas_call(
        _virtual_edge_kernel,
        out_shape=jax.ShapeDtypeStruct((Rp, W), jnp.bfloat16),
        grid=(Rp // T,),
        in_specs=[
            pl.BlockSpec((T, Dv), lambda i: (i, 0)),
            pl.BlockSpec((Dv, Hh), lambda i: (0, 0)),
            pl.BlockSpec((1, Hh), lambda i: (0, 0)),
            pl.BlockSpec((Hh, Hh), lambda i: (0, 0)),
            pl.BlockSpec((1, Hh), lambda i: (0, 0)),
            pl.BlockSpec((Hh, 2 * Hh), lambda i: (0, 0)),
            pl.BlockSpec((1, 2 * Hh), lambda i: (0, 0)),
            pl.BlockSpec((2 * Hh, 2), lambda i: (0, 0)),
        ],
        out_specs=pl.BlockSpec((T, W), lambda i: (i, 0)),
        compiler_params=_mosaic(("parallel",)),
    )(xp, w1.astype(jnp.bfloat16), b1.reshape(1, -1),
      w2.astype(jnp.bfloat16), b2.reshape(1, -1),
      wrv1.astype(jnp.bfloat16), brv1.reshape(1, -1), wrv2.astype(jnp.bfloat16))
    return out[:R]


# --------------------------------------------------------------------------
# Generic 2-layer MLP: Linear -> SiLU -> Linear [-> SiLU]
# Output columns are zero-padded to a 128-lane multiple via padded weights
# (lane-dense stores), sliced back in the wrapper.
# --------------------------------------------------------------------------
def _mlp2_kernel(x_ref, w1_ref, b1_ref, w2_ref, b2_ref, o_ref, *, final_act):
    x = x_ref[...]                                           # bf16
    h = jnp.dot(x, w1_ref[...], preferred_element_type=jnp.float32) + b1_ref[...]
    h = h * jax.nn.sigmoid(h)
    o = jnp.dot(h.astype(jnp.bfloat16), w2_ref[...],
                preferred_element_type=jnp.float32) + b2_ref[...]
    if final_act:
        o = o * jax.nn.sigmoid(o)
    o_ref[...] = o


def pallas_mlp2(x, w1, b1, w2, b2, final_act=False):
    x = x.astype(jnp.bfloat16)
    R, Din = x.shape
    H1 = w1.shape[1]
    Dout = w2.shape[1]
    Dp = _ceil_to(Dout, 128)
    w2p = jnp.pad(w2, ((0, 0), (0, Dp - Dout)))
    b2p = jnp.pad(b2, (0, Dp - Dout))
    Rp, T = _plan(R, MAX_ROW_TILE, MIN_ROW_BLOCKS, 16)
    xp = _pad_rows_to(x, Rp)
    out = pl.pallas_call(
        functools.partial(_mlp2_kernel, final_act=final_act),
        out_shape=jax.ShapeDtypeStruct((Rp, Dp), jnp.float32),
        grid=(Rp // T,),
        in_specs=[
            pl.BlockSpec((T, Din), lambda i: (i, 0)),
            pl.BlockSpec((Din, H1), lambda i: (0, 0)),
            pl.BlockSpec((1, H1), lambda i: (0, 0)),
            pl.BlockSpec((H1, Dp), lambda i: (0, 0)),
            pl.BlockSpec((1, Dp), lambda i: (0, 0)),
        ],
        out_specs=pl.BlockSpec((T, Dp), lambda i: (i, 0)),
        compiler_params=_mosaic(("parallel",)),
    )(xp, w1.astype(jnp.bfloat16), b1.reshape(1, -1),
      w2p.astype(jnp.bfloat16), b2p.reshape(1, -1))
    return out[:R, :Dout]


# --------------------------------------------------------------------------
# Tiled, accumulating segment mean (scatter_mean / unsorted_segment_mean /
# global_mean_pool).  Grid = (segment tiles ['parallel'], row tiles
# ['arbitrary' reduction]).  Sums (including the count column, which is the
# LAST data column) accumulate in a [St, D] VMEM scratch via a bf16 one-hot
# MXU matmul; the mean is written once under pl.when(last row tile).
# --------------------------------------------------------------------------
def _segment_mean_kernel(ids_ref, data_ref, o_ref, sum_ref, *, seg_tile):
    r = pl.program_id(1)

    @pl.when(r == 0)
    def _():
        sum_ref[...] = jnp.zeros_like(sum_ref)

    data = data_ref[...]                                     # [T, D] bf16
    ids = ids_ref[...]                                       # [1, T] int32
    seg0 = pl.program_id(0) * seg_tile
    seg = seg0 + jax.lax.broadcasted_iota(jnp.int32, (seg_tile, data.shape[0]), 0)
    onehot = (seg == ids).astype(jnp.bfloat16)               # [St, T]
    sum_ref[...] += jnp.dot(onehot, data, preferred_element_type=jnp.float32)

    @pl.when(r == pl.num_programs(1) - 1)
    def _():
        s = sum_ref[...]
        o_ref[...] = s / jnp.maximum(s[:, -1:], 1.0)         # divide by count col


def pallas_segment_mean(data, seg_ids, num_segments, has_count_col=False):
    data = data.astype(jnp.bfloat16)
    d_orig = data.shape[1]
    if not has_count_col:
        ones = jnp.ones((data.shape[0], 1), jnp.bfloat16)
        data = jnp.concatenate([data, ones], axis=1)
    R, D = data.shape

    Rp, T = _plan(R, SEG_ROW_TILE, 1, 16)        # row (reduction) tile
    Sp, St = _plan(num_segments, SEG_TILE, 1, 8)  # segment (output) tile

    dp = _pad_rows_to(data, Rp)                                   # pad rows: 0 data, 0 count
    ids = _pad_rows_to(seg_ids.astype(jnp.int32), Rp, num_segments)  # pad ids out of range
    ids = ids.reshape(1, Rp)

    out = pl.pallas_call(
        functools.partial(_segment_mean_kernel, seg_tile=St),
        out_shape=jax.ShapeDtypeStruct((Sp, D), jnp.float32),
        grid=(Sp // St, Rp // T),
        in_specs=[
            pl.BlockSpec((1, T), lambda s, r: (0, r)),
            pl.BlockSpec((T, D), lambda s, r: (r, 0)),
        ],
        out_specs=pl.BlockSpec((St, D), lambda s, r: (s, 0)),
        scratch_shapes=[pltpu.VMEM((St, D), jnp.float32)],
        compiler_params=_mosaic(("parallel", "arbitrary")),
    )(ids, dp)
    out = out[:num_segments]
    return out if has_count_col else out[:, :d_orig]


# ------------------ parameters ----------------------------------------------
def init_params(key, hidden, node_feat_nf, node_feat_out_nf, node_attr_nf,
                edge_attr_nf, C, num_gaussians, cutoff):
    ks = iter(jax.random.split(key, 32))

    def lin(din, dout, scale=1.0):
        w = scale * jax.random.normal(next(ks), (din, dout), jnp.float32) / jnp.sqrt(din)
        b = jnp.zeros((dout,), jnp.float32)
        return w, b

    def mlp(din, dh, dout):
        w1, b1 = lin(din, dh)
        w2, b2 = lin(dh, dout)
        return (w1, b1, w2, b2)

    def coord_mlp(dh):                       # Linear -> SiLU -> Linear(dh,1,bias=False)
        w1, b1 = lin(dh, dh)
        w2, _ = lin(dh, 1, scale=0.001)      # gain=0.001 init of the reference
        return (w1, b1, w2)

    offset = jnp.linspace(0.0, cutoff, num_gaussians).reshape(1, -1).astype(jnp.float32)
    coeff = -0.5 / float(cutoff / (num_gaussians - 1)) ** 2

    return {
        "gauss_offset": offset,
        "gauss_coeff": coeff,
        "coord_update": lin(num_gaussians + 2 * hidden, 1),
        "edge_mlp": mlp(2 * node_feat_nf + 1 + edge_attr_nf, hidden, hidden),
        "edge_mlp_virtual": mlp(2 * node_feat_nf + 1 + C, hidden, hidden),
        "coord_mlp_r_virtual": coord_mlp(hidden),
        "coord_mlp_v_virtual": coord_mlp(hidden),
        "node_mlp": mlp(hidden + hidden + C * hidden + node_attr_nf, hidden, node_feat_out_nf),
        "node_mlp_virtual": mlp(hidden + hidden, hidden, node_feat_out_nf),
    }


# ------------------ SchNet_GCL forward ---------------------------------------
def schnet_gcl_forward(params, node_feat, edge_index, coord, node_vel,
                       virtual_coord, virtual_node_feat, data_batch,
                       edge_attr, node_attr):
    del node_vel  # coord_mlp_vel is defined but never used by the reference forward
    row, col = edge_index[0], edge_index[1]
    N, H = node_feat.shape
    B, _, C = virtual_coord.shape
    E = row.shape[0]
    ea = edge_attr.shape[1]
    Hh = params["edge_mlp"][0].shape[1]
    G = params["gauss_offset"].shape[1]
    coeff = params["gauss_coeff"]

    nf_bf = node_feat.astype(jnp.bfloat16)

    # ---- fused per-edge path: pad edge rows ONCE, keep padded layout ----
    E_pad, T_e = _plan(E, MAX_ROW_TILE, MIN_ROW_BLOCKS, 16)
    rowg = _pad_rows_to(row.astype(jnp.int32), E_pad, 0)      # gather indices
    colg = _pad_rows_to(col.astype(jnp.int32), E_pad, 0)
    row_seg = _pad_rows_to(row.astype(jnp.int32), E_pad, N)   # out-of-range for pad rows

    ex = jnp.concatenate([nf_bf[rowg], nf_bf[colg],
                          _pad_rows_to(edge_attr.astype(jnp.bfloat16), E_pad)], axis=1)
    d_edges = coord[rowg] - coord[colg]                       # coord_diff [E_pad, 3] f32

    # build fused weights (tiny reshuffles)
    ew1, eb1, ew2, eb2 = params["edge_mlp"]                   # ew1: [nf_r|nf_c|radial|ea, Hh]
    cw, cb = params["coord_update"]                           # cw:  [gauss|nf_r|nf_c, 1]
    w1_x = jnp.concatenate([ew1[:2 * H], ew1[2 * H + 1:]], axis=0)       # drop radial row
    w1_r = ew1[2 * H:2 * H + 1]                                          # (1, Hh)
    wc_x = jnp.concatenate([cw[G:G + 2 * H], jnp.zeros((ea, 1), jnp.float32)], axis=0)
    w1c = jnp.concatenate([w1_x, wc_x], axis=1)                          # (2H+ea, Hh+1)
    wcg_row = cw[:G].reshape(1, G)                                       # (1, G) gaussian head

    eo = pallas_edge_fused(ex, d_edges, params["gauss_offset"], coeff,
                           w1c, w1_r, eb1, ew2, eb2, wcg_row, cb,
                           tile=T_e)                          # [E_pad, W] bf16

    # ---- virtual geometry + m_X (tiny glue) ----
    coord_mean = pallas_segment_mean(coord, data_batch, B)               # [B, 3]
    mx0 = virtual_coord - coord_mean[:, :, None]                         # [B, 3, C]
    m_X = jnp.einsum("bji,bjk->bik", mx0, mx0)                           # [B, C, C]

    vcd = virtual_coord[data_batch] - coord[:, :, None]                  # [N, 3, C] f32
    vrad = jnp.sqrt(jnp.sum(vcd * vcd, axis=1, keepdims=True))           # [N, 1, C]

    # ---- fused virtual-edge path (edge_mlp_virtual + both coord heads) ----
    feat_R = jnp.broadcast_to(nf_bf[:, :, None], (N, H, C))
    feat_V = virtual_node_feat.astype(jnp.bfloat16)[data_batch]          # [N, H, C]
    mix_V = m_X.astype(jnp.bfloat16)[data_batch]                         # [N, C, C]
    vin = jnp.concatenate([feat_R, feat_V, vrad.astype(jnp.bfloat16), mix_V],
                          axis=1)                                        # [N, 2H+1+C, C]
    vin_p = jnp.transpose(vin, (0, 2, 1)).reshape(N * C, 2 * H + 1 + C)  # bf16 slab

    vw1, vb1, vw2, vb2 = params["edge_mlp_virtual"]
    cr_w1, cr_b1, cr_w2 = params["coord_mlp_r_virtual"]
    cv_w1, cv_b1, cv_w2 = params["coord_mlp_v_virtual"]
    wrv1 = jnp.concatenate([cr_w1, cv_w1], axis=1)                       # (Hh, 2Hh)
    brv1 = jnp.concatenate([cr_b1, cv_b1], axis=0)                       # (2Hh,)
    wrv2 = jnp.concatenate(
        [jnp.concatenate([cr_w2, jnp.zeros_like(cr_w2)], axis=1),
         jnp.concatenate([jnp.zeros_like(cv_w2), cv_w2], axis=1)], axis=0)  # (2Hh, 2)

    vo = pallas_virtual_edge(vin_p, vw1, vb1, vw2, vb2, wrv1, brv1, wrv2)   # [N*C, Wv]
    vef = vo[:, :Hh]                                                        # bf16
    virtual_edge_feat = jnp.transpose(vef.reshape(N, C, Hh), (0, 2, 1))     # [N, Hh, C]
    r_fac = vo[:, Hh].reshape(N, 1, C).astype(jnp.float32)
    v_fac = vo[:, Hh + 1].reshape(N, 1, C).astype(jnp.float32)

    # ---- SchNet coordinate update + node aggregation (one shared segment mean) ----
    # TODO(synk): the SchNet InteractionBlock (CFConv) updates h, but that h is
    # discarded by SchNet_GCL, so it is intentionally not computed here.
    # scatter_mean over `row`; nodes without out-edges get a zero aggregate
    # (count clamped to 1), matching scatter_mean-with-zero-fill semantics.
    comb = pallas_segment_mean(eo, row_seg, N, has_count_col=True)       # [N, W]
    agg_e = comb[:, :Hh]                                                 # unsorted_segment_mean(edge_feat)
    coord = coord + comb[:, Hh:Hh + 3]                                   # SchNet pos update

    # coord_model (gravity=None)
    trans_v = jnp.mean(-vcd * r_fac, axis=-1)                            # [N, 3]
    coord_out = coord + trans_v

    # coord_model_virtual + node_model_virtual pooling (one shared segment mean)
    trans_flat = (vcd * v_fac).reshape(N, 3 * C)
    vef_flat = virtual_edge_feat.reshape(N, Hh * C)                      # bf16
    pooled = pallas_segment_mean(
        jnp.concatenate([trans_flat.astype(jnp.bfloat16), vef_flat], axis=1),
        data_batch, B)                                                   # [B, 3C + Hh*C]
    virtual_coord_out = virtual_coord + pooled[:, :3 * C].reshape(B, 3, C)
    agg_vn = pooled[:, 3 * C:].reshape(B, Hh, C)

    # node_model (residual=True, node_attr provided)
    node_in = jnp.concatenate([nf_bf, agg_e.astype(jnp.bfloat16),
                               vef_flat, node_attr.astype(jnp.bfloat16)], axis=1)
    node_out = pallas_mlp2(node_in, *params["node_mlp"], final_act=False)
    node_feat_out = node_feat + node_out

    # node_model_virtual (residual=True)
    vn_in = jnp.concatenate([virtual_node_feat.astype(jnp.bfloat16),
                             agg_vn.astype(jnp.bfloat16)], axis=1)       # [B, 2Hh, C]
    vn_p = jnp.transpose(vn_in, (0, 2, 1)).reshape(B * C, 2 * Hh)
    vn_out = pallas_mlp2(vn_p, *params["node_mlp_virtual"], final_act=False)
    Hout = vn_out.shape[1]
    vn_out = jnp.transpose(vn_out.reshape(B, C, Hout), (0, 2, 1))        # [B, Hout, C]
    virtual_node_feat_out = virtual_node_feat + vn_out

    return node_feat_out, coord_out, virtual_node_feat_out, virtual_coord_out


# ------------------ demo -----------------------------------------------------
if __name__ == "__main__":
    key = jax.random.PRNGKey(0)

    hidden_nf = 32
    node_feat_nf = 32        # SchNet consumes node_feat as its hidden h -> must equal hidden_nf
    node_feat_out_nf = 32    # residual connection requires == node_feat_nf
    node_attr_nf = 4
    edge_attr_nf = 4
    C = 4                    # virtual_channels
    num_gaussians = 50
    cutoff = 10.0

    B = 2
    nodes_per_graph = 8
    N = B * nodes_per_graph

    # edges: each node i connects to i+1, i+2, i+3 (mod nodes_per_graph) within its graph
    rows, cols = [], []
    for g in range(B):
        base = g * nodes_per_graph
        for i in range(nodes_per_graph):
            for dlt in (1, 2, 3):
                rows.append(base + i)
                cols.append(base + (i + dlt) % nodes_per_graph)
    edge_index = jnp.array([rows, cols], dtype=jnp.int32)
    E = edge_index.shape[1]
    data_batch = jnp.repeat(jnp.arange(B, dtype=jnp.int32), nodes_per_graph)

    ks = jax.random.split(key, 8)
    node_feat = jax.random.normal(ks[0], (N, node_feat_nf), jnp.float32)
    coord = jax.random.normal(ks[1], (N, 3), jnp.float32)
    node_vel = jax.random.normal(ks[2], (N, 3), jnp.float32)
    virtual_coord = jax.random.normal(ks[3], (B, 3, C), jnp.float32)
    virtual_node_feat = jax.random.normal(ks[4], (B, hidden_nf, C), jnp.float32)
    edge_attr = jax.random.normal(ks[5], (E, edge_attr_nf), jnp.float32)
    node_attr = jax.random.normal(ks[6], (N, node_attr_nf), jnp.float32)

    params = init_params(ks[7], hidden_nf, node_feat_nf, node_feat_out_nf,
                         node_attr_nf, edge_attr_nf, C, num_gaussians, cutoff)

    fwd = jax.jit(functools.partial(schnet_gcl_forward, params))
    out = fwd(node_feat, edge_index, coord, node_vel, virtual_coord,
              virtual_node_feat, data_batch, edge_attr, node_attr)
    out = jax.block_until_ready(out)

    nf, co, vnf, vco = out
    assert nf.shape == (N, node_feat_out_nf)
    assert co.shape == (N, 3)
    assert vnf.shape == (B, hidden_nf, C)
    assert vco.shape == (B, 3, C)
    assert all(bool(jnp.all(jnp.isfinite(o))) for o in out)
    print("KERNEL_OK")
</pallas_src>

<mosaic_0001>
module attributes {stable_mosaic.version = 11 : i64} {
  func.func @_segment_mean_kernel(%arg0: i32, %arg1: i32, %arg2: memref<1x16xi32, #tpu.memory_space<vmem>>, %arg3: memref<16x4xbf16, #tpu.memory_space<vmem>>, %arg4: memref<8x4xf32, #tpu.memory_space<vmem>>, %arg5: memref<8x4xf32, #tpu.memory_space<vmem>>) attributes {dimension_semantics = [#tpu.dimension_semantics<parallel>, #tpu.dimension_semantics<arbitrary>], iteration_bounds = array<i64: 1, 1>, scalar_prefetch = 0 : i64, scratch_operands = 1 : i64, tpu.core_type = #tpu.core_type<tc>, window_params = [{transform_indices = @transform_0, window_bounds = array<i64: 1, 16>}, {transform_indices = @transform_1, window_bounds = array<i64: 16, 4>}, {transform_indices = @transform_2, window_bounds = array<i64: 8, 4>}]} {
    %c0_i32 = arith.constant 0 : i32
    %0 = arith.cmpi eq, %arg1, %c0_i32 : i32
    %1 = arith.extui %0 : i1 to i32
    %c0_i32_0 = arith.constant 0 : i32
    %2 = arith.cmpi ne, %1, %c0_i32_0 : i32
    scf.if %2 {
      %cst_10 = arith.constant 0.000000e+00 : f32
      %21 = vector.broadcast %cst_10 : f32 to vector<8x4xf32>
      %c0_11 = arith.constant 0 : index
      %c0_12 = arith.constant 0 : index
      %22 = vector.load %arg5[%c0_11, %c0_12] : memref<8x4xf32, #tpu.memory_space<vmem>>, vector<8x4xf32>
      tpu.vector_store %arg5[%c0_11, %c0_12], %21 {strides = array<i32>} : memref<8x4xf32, #tpu.memory_space<vmem>>, vector<8x4xf32>,
    } else {
    }
    %c0 = arith.constant 0 : index
    %c0_1 = arith.constant 0 : index
    %3 = vector.load %arg3[%c0, %c0_1] : memref<16x4xbf16, #tpu.memory_space<vmem>>, vector<16x4xbf16>
    %c0_2 = arith.constant 0 : index
    %c0_3 = arith.constant 0 : index
    %4 = vector.load %arg2[%c0_2, %c0_3] : memref<1x16xi32, #tpu.memory_space<vmem>>, vector<1x16xi32>
    %c8_i32 = arith.constant 8 : i32
    %5 = arith.muli %arg0, %c8_i32 : i32
    %6 = tpu.iota {dimensions = array<i32: 0>} : vector<8x16xi32>
    %7 = vector.broadcast %5 : i32 to vector<8x16xi32>
    %8 = arith.addi %7, %6 : vector<8x16xi32>
    %9 = vector.broadcast %4 : vector<1x16xi32> to vector<8x16xi32>
    %10 = arith.cmpi eq, %8, %9 : vector<8x16xi32>
    %11 = arith.extui %10 : vector<8x16xi1> to vector<8x16xi32>
    %12 = arith.sitofp %11 : vector<8x16xi32> to vector<8x16xf32>
    %13 = arith.truncf %12 : vector<8x16xf32> to vector<8x16xbf16>
    %c0_4 = arith.constant 0 : index
    %c0_5 = arith.constant 0 : index
    %14 = vector.load %arg5[%c0_4, %c0_5] : memref<8x4xf32, #tpu.memory_space<vmem>>, vector<8x4xf32>
    %cst = arith.constant dense<0.000000e+00> : vector<8x4xf32>
    %15 = tpu.matmul %13, %3, %cst {dimension_numbers = #tpu.dot_dimension_numbers<[1], [0], [0], [1], [0, 0, 1, 1], [], []>} : vector<8x16xbf16>, vector<16x4xbf16>, vector<8x4xf32> -> vector<8x4xf32>
    %16 = arith.addf %14, %15 : vector<8x4xf32>
    %c0_6 = arith.constant 0 : index
    %c0_7 = arith.constant 0 : index
    %17 = vector.load %arg5[%c0_6, %c0_7] : memref<8x4xf32, #tpu.memory_space<vmem>>, vector<8x4xf32>
    tpu.vector_store %arg5[%c0_6, %c0_7], %16 {strides = array<i32>} : memref<8x4xf32, #tpu.memory_space<vmem>>, vector<8x4xf32>,
    %c0_i32_8 = arith.constant 0 : i32
    %18 = arith.cmpi eq, %arg1, %c0_i32_8 : i32
    %19 = arith.extui %18 : i1 to i32
    %c0_i32_9 = arith.constant 0 : i32
    %20 = arith.cmpi ne, %19, %c0_i32_9 : i32
    scf.if %20 {
      %c0_10 = arith.constant 0 : index
      %c0_11 = arith.constant 0 : index
      %21 = vector.load %arg5[%c0_10, %c0_11] : memref<8x4xf32, #tpu.memory_space<vmem>>, vector<8x4xf32>
      %22 = vector.extract_strided_slice %21 {offsets = [0, 3], sizes = [8, 1], strides = [1, 1]} : vector<8x4xf32> to vector<8x1xf32>
      %cst_12 = arith.constant 1.000000e+00 : f32
      %23 = vector.broadcast %cst_12 : f32 to vector<8x1xf32>
      %24 = arith.maximumf %22, %23 : vector<8x1xf32>
      %25 = vector.broadcast %24 : vector<8x1xf32> to vector<8x4xf32>
      %26 = arith.divf %21, %25 : vector<8x4xf32>
      %c0_13 = arith.constant 0 : index
      %c0_14 = arith.constant 0 : index
      %27 = vector.load %arg4[%c0_13, %c0_14] : memref<8x4xf32, #tpu.memory_space<vmem>>, vector<8x4xf32>
      tpu.vector_store %arg4[%c0_13, %c0_14], %26 {strides = array<i32>} : memref<8x4xf32, #tpu.memory_space<vmem>>, vector<8x4xf32>,
    } else {
    }
    return
  }
  func.func @transform_0(%arg0: i32, %arg1: i32) -> (i32, i32) {
    %c0_i32 = arith.constant 0 : i32
    %c0_i32_0 = arith.constant 0 : i32
    return %c0_i32, %arg1 : i32, i32
  }
  func.func @transform_1(%arg0: i32, %arg1: i32) -> (i32, i32) {
    %c0_i32 = arith.constant 0 : i32
    %c0_i32_0 = arith.constant 0 : i32
    return %arg1, %c0_i32 : i32, i32
  }
  func.func @transform_2(%arg0: i32, %arg1: i32) -> (i32, i32) {
    %c0_i32 = arith.constant 0 : i32
    %c0_i32_0 = arith.constant 0 : i32
    return %arg0, %c0_i32 : i32, i32
  }
}

module attributes {stable_mosaic.version = 11 : i64} {
  func.func @_virtual_edge_kernel(%arg0: i32, %arg1: memref<32x69xbf16, #tpu.memory_space<vmem>>, %arg2: memref<69x32xbf16, #tpu.memory_space<vmem>>, %arg3: memref<1x32xf32, #tpu.memory_space<vmem>>, %arg4: memref<32x32xbf16, #tpu.memory_space<vmem>>, %arg5: memref<1x32xf32, #tpu.memory_space<vmem>>, %arg6: memref<32x64xbf16, #tpu.memory_space<vmem>>, %arg7: memref<1x64xf32, #tpu.memory_space<vmem>>, %arg8: memref<64x2xbf16, #tpu.memory_space<vmem>>, %arg9: memref<32x128xbf16, #tpu.memory_space<vmem>>) attributes {dimension_semantics = [#tpu.dimension_semantics<parallel>], iteration_bounds = array<i64: 2>, scalar_prefetch = 0 : i64, scratch_operands = 0 : i64, tpu.core_type = #tpu.core_type<tc>, window_params = [{transform_indices = @transform_0, window_bounds = array<i64: 32, 69>}, {pipeline_mode = #tpu.pipeline_mode<synchronous>, transform_indices = @transform_1, window_bounds = array<i64: 69, 32>}, {pipeline_mode = #tpu.pipeline_mode<synchronous>, transform_indices = @transform_2, window_bounds = array<i64: 1, 32>}, {pipeline_mode = #tpu.pipeline_mode<synchronous>, transform_indices = @transform_3, window_bounds = array<i64: 32, 32>}, {pipeline_mode = #tpu.pipeline_mode<synchronous>, transform_indices = @transform_4, window_bounds = array<i64: 1, 32>}, {pipeline_mode = #tpu.pipeline_mode<synchronous>, transform_indices = @transform_5, window_bounds = array<i64: 32, 64>}, {pipeline_mode = #tpu.pipeline_mode<synchronous>, transform_indices = @transform_6, window_bounds = array<i64: 1, 64>}, {pipeline_mode = #tpu.pipeline_mode<synchronous>, transform_indices = @transform_7, window_bounds = array<i64: 64, 2>}, {transform_indices = @transform_8, window_bounds = array<i64: 32, 128>}]} {
    %c0 = arith.constant 0 : index
    %c0_0 = arith.constant 0 : index
    %0 = vector.load %arg1[%c0, %c0_0] : memref<32x69xbf16, #tpu.memory_space<vmem>>, vector<32x69xbf16>
    %c0_1 = arith.constant 0 : index
    %c0_2 = arith.constant 0 : index
    %1 = vector.load %arg2[%c0_1, %c0_2] : memref<69x32xbf16, #tpu.memory_space<vmem>>, vector<69x32xbf16>
    %cst = arith.constant dense<0.000000e+00> : vector<32x32xf32>
    %2 = tpu.matmul %0, %1, %cst {dimension_numbers = #tpu.dot_dimension_numbers<[1], [0], [0], [1], [0, 0, 1, 1], [], []>} : vector<32x69xbf16>, vector<69x32xbf16>, vector<32x32xf32> -> vector<32x32xf32>
    %c0_3 = arith.constant 0 : index
    %c0_4 = arith.constant 0 : index
    %3 = vector.load %arg3[%c0_3, %c0_4] : memref<1x32xf32, #tpu.memory_space<vmem>>, vector<1x32xf32>
    %4 = vector.broadcast %3 : vector<1x32xf32> to vector<32x32xf32>
    %5 = arith.addf %2, %4 : vector<32x32xf32>
    %6 = arith.negf %5 : vector<32x32xf32>
    %7 = math.exp %6 : vector<32x32xf32>
    %cst_5 = arith.constant 1.000000e+00 : f32
    %8 = vector.broadcast %cst_5 : f32 to vector<32x32xf32>
    %9 = arith.addf %8, %7 : vector<32x32xf32>
    %10 = arith.divf %8, %9 : vector<32x32xf32>
    %11 = arith.mulf %5, %10 : vector<32x32xf32>
    %12 = arith.truncf %11 : vector<32x32xf32> to vector<32x32xbf16>
    %c0_6 = arith.constant 0 : index
    %c0_7 = arith.constant 0 : index
    %13 = vector.load %arg4[%c0_6, %c0_7] : memref<32x32xbf16, #tpu.memory_space<vmem>>, vector<32x32xbf16>
    %cst_8 = arith.constant dense<0.000000e+00> : vector<32x32xf32>
    %14 = tpu.matmul %12, %13, %cst_8 {dimension_numbers = #tpu.dot_dimension_numbers<[1], [0], [0], [1], [0, 0, 1, 1], [], []>} : vector<32x32xbf16>, vector<32x32xbf16>, vector<32x32xf32> -> vector<32x32xf32>
    %c0_9 = arith.constant 0 : index
    %c0_10 = arith.constant 0 : index
    %15 = vector.load %arg5[%c0_9, %c0_10] : memref<1x32xf32, #tpu.memory_space<vmem>>, vector<1x32xf32>
    %16 = vector.broadcast %15 : vector<1x32xf32> to vector<32x32xf32>
    %17 = arith.addf %14, %16 : vector<32x32xf32>
    %18 = arith.negf %17 : vector<32x32xf32>
    %19 = math.exp %18 : vector<32x32xf32>
    %cst_11 = arith.constant 1.000000e+00 : f32
    %20 = vector.broadcast %cst_11 : f32 to vector<32x32xf32>
    %21 = arith.addf %20, %19 : vector<32x32xf32>
    %22 = arith.divf %20, %21 : vector<32x32xf32>
    %23 = arith.mulf %17, %22 : vector<32x32xf32>
    %24 = arith.truncf %23 : vector<32x32xf32> to vector<32x32xbf16>
    %c0_12 = arith.constant 0 : index
    %c0_13 = arith.constant 0 : index
    %25 = vector.load %arg6[%c0_12, %c0_13] : memref<32x64xbf16, #tpu.memory_space<vmem>>, vector<32x64xbf16>
    %cst_14 = arith.constant dense<0.000000e+00> : vector<32x64xf32>
    %26 = tpu.matmul %24, %25, %cst_14 {dimension_numbers = #tpu.dot_dimension_numbers<[1], [0], [0], [1], [0, 0, 1, 1], [], []>} : vector<32x32xbf16>, vector<32x64xbf16>, vector<32x64xf32> -> vector<32x64xf32>
    %c0_15 = arith.constant 0 : index
    %c0_16 = arith.constant 0 : index
    %27 = vector.load %arg7[%c0_15, %c0_16] : memref<1x64xf32, #tpu.memory_space<vmem>>, vector<1x64xf32>
    %28 = vector.broadcast %27 : vector<1x64xf32> to vector<32x64xf32>
    %29 = arith.addf %26, %28 : vector<32x64xf32>
    %30 = arith.negf %29 : vector<32x64xf32>
    %31 = math.exp %30 : vector<32x64xf32>
    %cst_17 = arith.constant 1.000000e+00 : f32
    %32 = vector.broadcast %cst_17 : f32 to vector<32x64xf32>
    %33 = arith.addf %32, %31 : vector<32x64xf32>
    %34 = arith.divf %32, %33 : vector<32x64xf32>
    %35 = arith.mulf %29, %34 : vector<32x64xf32>
    %36 = arith.truncf %35 : vector<32x64xf32> to vector<32x64xbf16>
    %c0_18 = arith.constant 0 : index
    %c0_19 = arith.constant 0 : index
    %37 = vector.load %arg8[%c0_18, %c0_19] : memref<64x2xbf16, #tpu.memory_space<vmem>>, vector<64x2xbf16>
    %cst_20 = arith.constant dense<0.000000e+00> : vector<32x2xf32>
    %38 = tpu.matmul %36, %37, %cst_20 {dimension_numbers = #tpu.dot_dimension_numbers<[1], [0], [0], [1], [0, 0, 1, 1], [], []>} : vector<32x64xbf16>, vector<64x2xbf16>, vector<32x2xf32> -> vector<32x2xf32>
    %39 = arith.truncf %23 : vector<32x32xf32> to vector<32x32xbf16>
    %c0_21 = arith.constant 0 : index
    %c0_22 = arith.constant 0 : index
    %40 = vector.load %arg9[%c0_21, %c0_22] : memref<32x128xbf16, #tpu.memory_space<vmem>>, vector<32x32xbf16>
    tpu.vector_store %arg9[%c0_21, %c0_22], %39 {strides = array<i32>} : memref<32x128xbf16, #tpu.memory_space<vmem>>, vector<32x32xbf16>,
    %41 = arith.truncf %38 : vector<32x2xf32> to vector<32x2xbf16>
    %c0_23 = arith.constant 0 : index
    %c32 = arith.constant 32 : index
    %42 = vector.load %arg9[%c0_23, %c32] : memref<32x128xbf16, #tpu.memory_space<vmem>>, vector<32x2xbf16>
    tpu.vector_store %arg9[%c0_23, %c32], %41 {strides = array<i32>} : memref<32x128xbf16, #tpu.memory_space<vmem>>, vector<32x2xbf16>,
    %cst_24 = arith.constant 0.000000e+00 : bf16
    %43 = vector.broadcast %cst_24 : bf16 to vector<32x94xbf16>
    %c0_25 = arith.constant 0 : index
    %c34 = arith.constant 34 : index
    %44 = vector.load %arg9[%c0_25, %c34] : memref<32x128xbf16, #tpu.memory_space<vmem>>, vector<32x94xbf16>
    tpu.vector_store %arg9[%c0_25, %c34], %43 {strides = array<i32>} : memref<32x128xbf16, #tpu.memory_space<vmem>>, vector<32x94xbf16>,
    return
  }
  func.func @transform_0(%arg0: i32) -> (i32, i32) {
    %c0_i32 = arith.constant 0 : i32
    %c0_i32_0 = arith.constant 0 : i32
    return %arg0, %c0_i32 : i32, i32
  }
  func.func @transform_1(%arg0: i32) -> (i32, i32) {
    %c0_i32 = arith.constant 0 : i32
    %c0_i32_0 = arith.constant 0 : i32
    %c0_i32_1 = arith.constant 0 : i32
    return %c0_i32, %c0_i32_0 : i32, i32
  }
  func.func @transform_2(%arg0: i32) -> (i32, i32) {
    %c0_i32 = arith.constant 0 : i32
    %c0_i32_0 = arith.constant 0 : i32
    %c0_i32_1 = arith.constant 0 : i32
    return %c0_i32, %c0_i32_0 : i32, i32
  }
  func.func @transform_3(%arg0: i32) -> (i32, i32) {
    %c0_i32 = arith.constant 0 : i32
    %c0_i32_0 = arith.constant 0 : i32
    %c0_i32_1 = arith.constant 0 : i32
    return %c0_i32, %c0_i32_0 : i32, i32
  }
  func.func @transform_4(%arg0: i32) -> (i32, i32) {
    %c0_i32 = arith.constant 0 : i32
    %c0_i32_0 = arith.constant 0 : i32
    %c0_i32_1 = arith.constant 0 : i32
    return %c0_i32, %c0_i32_0 : i32, i32
  }
  func.func @transform_5(%arg0: i32) -> (i32, i32) {
    %c0_i32 = arith.constant 0 : i32
    %c0_i32_0 = arith.constant 0 : i32
    %c0_i32_1 = arith.constant 0 : i32
    return %c0_i32, %c0_i32_0 : i32, i32
  }
  func.func @transform_6(%arg0: i32) -> (i32, i32) {
    %c0_i32 = arith.constant 0 : i32
    %c0_i32_0 = arith.constant 0 : i32
    %c0_i32_1 = arith.constant 0 : i32
    return %c0_i32, %c0_i32_0 : i32, i32
  }
  func.func @transform_7(%arg0: i32) -> (i32, i32) {
    %c0_i32 = arith.constant 0 : i32
    %c0_i32_0 = arith.constant 0 : i32
    %c0_i32_1 = arith.constant 0 : i32
    return %c0_i32, %c0_i32_0 : i32, i32
  }
  func.func @transform_8(%arg0: i32) -> (i32, i32) {
    %c0_i32 = arith.constant 0 : i32
    %c0_i32_0 = arith.constant 0 : i32
    return %arg0, %c0_i32 : i32, i32
  }
}

module attributes {stable_mosaic.version = 11 : i64} {
  func.func @_edge_fused_kernel(%arg0: i32, %arg1: memref<32x68xbf16, #tpu.memory_space<vmem>>, %arg2: memref<32x3xf32, #tpu.memory_space<vmem>>, %arg3: memref<1x50xf32, #tpu.memory_space<vmem>>, %arg4: memref<68x33xbf16, #tpu.memory_space<vmem>>, %arg5: memref<1x32xf32, #tpu.memory_space<vmem>>, %arg6: memref<1x32xf32, #tpu.memory_space<vmem>>, %arg7: memref<32x32xbf16, #tpu.memory_space<vmem>>, %arg8: memref<1x32xf32, #tpu.memory_space<vmem>>, %arg9: memref<1x50xf32, #tpu.memory_space<vmem>>, %arg10: memref<1x1xf32, #tpu.memory_space<vmem>>, %arg11: memref<32x128xbf16, #tpu.memory_space<vmem>>) attributes {dimension_semantics = [#tpu.dimension_semantics<parallel>], iteration_bounds = array<i64: 2>, scalar_prefetch = 0 : i64, scratch_operands = 0 : i64, tpu.core_type = #tpu.core_type<tc>, window_params = [{transform_indices = @transform_0, window_bounds = array<i64: 32, 68>}, {transform_indices = @transform_1, window_bounds = array<i64: 32, 3>}, {pipeline_mode = #tpu.pipeline_mode<synchronous>, transform_indices = @transform_2, window_bounds = array<i64: 1, 50>}, {pipeline_mode = #tpu.pipeline_mode<synchronous>, transform_indices = @transform_3, window_bounds = array<i64: 68, 33>}, {pipeline_mode = #tpu.pipeline_mode<synchronous>, transform_indices = @transform_4, window_bounds = array<i64: 1, 32>}, {pipeline_mode = #tpu.pipeline_mode<synchronous>, transform_indices = @transform_5, window_bounds = array<i64: 1, 32>}, {pipeline_mode = #tpu.pipeline_mode<synchronous>, transform_indices = @transform_6, window_bounds = array<i64: 32, 32>}, {pipeline_mode = #tpu.pipeline_mode<synchronous>, transform_indices = @transform_7, window_bounds = array<i64: 1, 32>}, {pipeline_mode = #tpu.pipeline_mode<synchronous>, transform_indices = @transform_8, window_bounds = array<i64: 1, 50>}, {pipeline_mode = #tpu.pipeline_mode<synchronous>, transform_indices = @transform_9, window_bounds = array<i64: 1, 1>}, {transform_indices = @transform_10, window_bounds = array<i64: 32, 128>}]} {
    %c0 = arith.constant 0 : index
    %c0_0 = arith.constant 0 : index
    %0 = vector.load %arg2[%c0, %c0_0] : memref<32x3xf32, #tpu.memory_space<vmem>>, vector<32x3xf32>
    %1 = arith.mulf %0, %0 : vector<32x3xf32>
    %cst = arith.constant dense<0.000000e+00> : vector<32xf32>
    %2 = vector.multi_reduction <add>, %1, %cst [1] : vector<32x3xf32> to vector<32xf32>
    %3 = vector.shape_cast %2 : vector<32xf32> to vector<32x1xf32>
    %4 = math.sqrt %3 : vector<32x1xf32>
    %c0_1 = arith.constant 0 : index
    %c0_2 = arith.constant 0 : index
    %5 = vector.load %arg3[%c0_1, %c0_2] : memref<1x50xf32, #tpu.memory_space<vmem>>, vector<1x50xf32>
    %6 = vector.broadcast %4 : vector<32x1xf32> to vector<32x50xf32>
    %7 = vector.broadcast %5 : vector<1x50xf32> to vector<32x50xf32>
    %8 = arith.subf %6, %7 : vector<32x50xf32>
    %cst_3 = arith.constant -1.200500e+01 : f32
    %9 = vector.broadcast %cst_3 : f32 to vector<32x50xf32>
    %10 = arith.mulf %9, %8 : vector<32x50xf32>
    %11 = arith.mulf %10, %8 : vector<32x50xf32>
    %12 = math.exp %11 : vector<32x50xf32>
    %c0_4 = arith.constant 0 : index
    %c0_5 = arith.constant 0 : index
    %13 = vector.load %arg1[%c0_4, %c0_5] : memref<32x68xbf16, #tpu.memory_space<vmem>>, vector<32x68xbf16>
    %c0_6 = arith.constant 0 : index
    %c0_7 = arith.constant 0 : index
    %14 = vector.load %arg4[%c0_6, %c0_7] : memref<68x33xbf16, #tpu.memory_space<vmem>>, vector<68x33xbf16>
    %cst_8 = arith.constant dense<0.000000e+00> : vector<32x33xf32>
    %15 = tpu.matmul %13, %14, %cst_8 {dimension_numbers = #tpu.dot_dimension_numbers<[1], [0], [0], [1], [0, 0, 1, 1], [], []>} : vector<32x68xbf16>, vector<68x33xbf16>, vector<32x33xf32> -> vector<32x33xf32>
    %16 = vector.extract_strided_slice %15 {offsets = [0, 0], sizes = [32, 32], strides = [1, 1]} : vector<32x33xf32> to vector<32x32xf32>
    %c0_9 = arith.constant 0 : index
    %c0_10 = arith.constant 0 : index
    %17 = vector.load %arg5[%c0_9, %c0_10] : memref<1x32xf32, #tpu.memory_space<vmem>>, vector<1x32xf32>
    %18 = vector.broadcast %3 : vector<32x1xf32> to vector<32x32xf32>
    %19 = vector.broadcast %17 : vector<1x32xf32> to vector<32x32xf32>
    %20 = arith.mulf %18, %19 : vector<32x32xf32>
    %21 = arith.addf %16, %20 : vector<32x32xf32>
    %c0_11 = arith.constant 0 : index
    %c0_12 = arith.constant 0 : index
    %22 = vector.load %arg6[%c0_11, %c0_12] : memref<1x32xf32, #tpu.memory_space<vmem>>, vector<1x32xf32>
    %23 = vector.broadcast %22 : vector<1x32xf32> to vector<32x32xf32>
    %24 = arith.addf %21, %23 : vector<32x32xf32>
    %25 = arith.negf %24 : vector<32x32xf32>
    %26 = math.exp %25 : vector<32x32xf32>
    %cst_13 = arith.constant 1.000000e+00 : f32
    %27 = vector.broadcast %cst_13 : f32 to vector<32x32xf32>
    %28 = arith.addf %27, %26 : vector<32x32xf32>
    %29 = arith.divf %27, %28 : vector<32x32xf32>
    %30 = arith.mulf %24, %29 : vector<32x32xf32>
    %31 = arith.truncf %30 : vector<32x32xf32> to vector<32x32xbf16>
    %c0_14 = arith.constant 0 : index
    %c0_15 = arith.constant 0 : index
    %32 = vector.load %arg7[%c0_14, %c0_15] : memref<32x32xbf16, #tpu.memory_space<vmem>>, vector<32x32xbf16>
    %cst_16 = arith.constant dense<0.000000e+00> : vector<32x32xf32>
    %33 = tpu.matmul %31, %32, %cst_16 {dimension_numbers = #tpu.dot_dimension_numbers<[1], [0], [0], [1], [0, 0, 1, 1], [], []>} : vector<32x32xbf16>, vector<32x32xbf16>, vector<32x32xf32> -> vector<32x32xf32>
    %c0_17 = arith.constant 0 : index
    %c0_18 = arith.constant 0 : index
    %34 = vector.load %arg8[%c0_17, %c0_18] : memref<1x32xf32, #tpu.memory_space<vmem>>, vector<1x32xf32>
    %35 = vector.broadcast %34 : vector<1x32xf32> to vector<32x32xf32>
    %36 = arith.addf %33, %35 : vector<32x32xf32>
    %37 = arith.negf %36 : vector<32x32xf32>
    %38 = math.exp %37 : vector<32x32xf32>
    %cst_19 = arith.constant 1.000000e+00 : f32
    %39 = vector.broadcast %cst_19 : f32 to vector<32x32xf32>
    %40 = arith.addf %39, %38 : vector<32x32xf32>
    %41 = arith.divf %39, %40 : vector<32x32xf32>
    %42 = arith.mulf %36, %41 : vector<32x32xf32>
    %43 = vector.extract_strided_slice %15 {offsets = [0, 32], sizes = [32, 1], strides = [1, 1]} : vector<32x33xf32> to vector<32x1xf32>
    %c0_20 = arith.constant 0 : index
    %c0_21 = arith.constant 0 : index
    %44 = vector.load %arg9[%c0_20, %c0_21] : memref<1x50xf32, #tpu.memory_space<vmem>>, vector<1x50xf32>
    %45 = vector.broadcast %44 : vector<1x50xf32> to vector<32x50xf32>
    %46 = arith.mulf %12, %45 : vector<32x50xf32>
    %cst_22 = arith.constant dense<0.000000e+00> : vector<32xf32>
    %47 = vector.multi_reduction <add>, %46, %cst_22 [1] : vector<32x50xf32> to vector<32xf32>
    %48 = vector.shape_cast %47 : vector<32xf32> to vector<32x1xf32>
    %49 = arith.addf %43, %48 : vector<32x1xf32>
    %c0_23 = arith.constant 0 : index
    %c0_24 = arith.constant 0 : index
    %50 = vector.load %arg10[%c0_23, %c0_24] : memref<1x1xf32, #tpu.memory_space<vmem>>, vector<1x1xf32>
    %51 = vector.broadcast %50 : vector<1x1xf32> to vector<32x1xf32>
    %52 = arith.addf %49, %51 : vector<32x1xf32>
    %53 = arith.truncf %42 : vector<32x32xf32> to vector<32x32xbf16>
    %c0_25 = arith.constant 0 : index
    %c0_26 = arith.constant 0 : index
    %54 = vector.load %arg11[%c0_25, %c0_26] : memref<32x128xbf16, #tpu.memory_space<vmem>>, vector<32x32xbf16>
    tpu.vector_store %arg11[%c0_25, %c0_26], %53 {strides = array<i32>} : memref<32x128xbf16, #tpu.memory_space<vmem>>, vector<32x32xbf16>,
    %55 = vector.broadcast %52 : vector<32x1xf32> to vector<32x3xf32>
    %56 = arith.mulf %0, %55 : vector<32x3xf32>
    %57 = arith.truncf %56 : vector<32x3xf32> to vector<32x3xbf16>
    %c0_27 = arith.constant 0 : index
    %c32 = arith.constant 32 : index
    %58 = vector.load %arg11[%c0_27, %c32] : memref<32x128xbf16, #tpu.memory_space<vmem>>, vector<32x3xbf16>
    tpu.vector_store %arg11[%c0_27, %c32], %57 {strides = array<i32>} : memref<32x128xbf16, #tpu.memory_space<vmem>>, vector<32x3xbf16>,
    %cst_28 = arith.constant 0.000000e+00 : bf16
    %59 = vector.broadcast %cst_28 : bf16 to vector<32x92xbf16>
    %c0_29 = arith.constant 0 : index
    %c35 = arith.constant 35 : index
    %60 = vector.load %arg11[%c0_29, %c35] : memref<32x128xbf16, #tpu.memory_space<vmem>>, vector<32x92xbf16>
    tpu.vector_store %arg11[%c0_29, %c35], %59 {strides = array<i32>} : memref<32x128xbf16, #tpu.memory_space<vmem>>, vector<32x92xbf16>,
    %cst_30 = arith.constant 1.000000e+00 : bf16
    %61 = vector.broadcast %cst_30 : bf16 to vector<32x1xbf16>
    %c0_31 = arith.constant 0 : index
    %c127 = arith.constant 127 : index
    %62 = vector.load %arg11[%c0_31, %c127] : memref<32x128xbf16, #tpu.memory_space<vmem>>, vector<32x1xbf16>
    tpu.vector_store %arg11[%c0_31, %c127], %61 {strides = array<i32>} : memref<32x128xbf16, #tpu.memory_space<vmem>>, vector<32x1xbf16>,
    return
  }
  func.func @transform_0(%arg0: i32) -> (i32, i32) {
    %c0_i32 = arith.constant 0 : i32
    %c0_i32_0 = arith.constant 0 : i32
    return %arg0, %c0_i32 : i32, i32
  }
  func.func @transform_1(%arg0: i32) -> (i32, i32) {
    %c0_i32 = arith.constant 0 : i32
    %c0_i32_0 = arith.constant 0 : i32
    return %arg0, %c0_i32 : i32, i32
  }
  func.func @transform_2(%arg0: i32) -> (i32, i32) {
    %c0_i32 = arith.constant 0 : i32
    %c0_i32_0 = arith.constant 0 : i32
    %c0_i32_1 = arith.constant 0 : i32
    return %c0_i32, %c0_i32_0 : i32, i32
  }
  func.func @transform_3(%arg0: i32) -> (i32, i32) {
    %c0_i32 = arith.constant 0 : i32
    %c0_i32_0 = arith.constant 0 : i32
    %c0_i32_1 = arith.constant 0 : i32
    return %c0_i32, %c0_i32_0 : i32, i32
  }
  func.func @transform_4(%arg0: i32) -> (i32, i32) {
    %c0_i32 = arith.constant 0 : i32
    %c0_i32_0 = arith.constant 0 : i32
    %c0_i32_1 = arith.constant 0 : i32
    return %c0_i32, %c0_i32_0 : i32, i32
  }
  func.func @transform_5(%arg0: i32) -> (i32, i32) {
    %c0_i32 = arith.constant 0 : i32
    %c0_i32_0 = arith.constant 0 : i32
    %c0_i32_1 = arith.constant 0 : i32
    return %c0_i32, %c0_i32_0 : i32, i32
  }
  func.func @transform_6(%arg0: i32) -> (i32, i32) {
    %c0_i32 = arith.constant 0 : i32
    %c0_i32_0 = arith.constant 0 : i32
    %c0_i32_1 = arith.constant 0 : i32
    return %c0_i32, %c0_i32_0 : i32, i32
  }
  func.func @transform_7(%arg0: i32) -> (i32, i32) {
    %c0_i32 = arith.constant 0 : i32
    %c0_i32_0 = arith.constant 0 : i32
    %c0_i32_1 = arith.constant 0 : i32
    return %c0_i32, %c0_i32_0 : i32, i32
  }
  func.func @transform_8(%arg0: i32) -> (i32, i32) {
    %c0_i32 = arith.constant 0 : i32
    %c0_i32_0 = arith.constant 0 : i32
    %c0_i32_1 = arith.constant 0 : i32
    return %c0_i32, %c0_i32_0 : i32, i32
  }
  func.func @transform_9(%arg0: i32) -> (i32, i32) {
    %c0_i32 = arith.constant 0 : i32
    %c0_i32_0 = arith.constant 0 : i32
    %c0_i32_1 = arith.constant 0 : i32
    return %c0_i32, %c0_i32_0 : i32, i32
  }
  func.func @transform_10(%arg0: i32) -> (i32, i32) {
    %c0_i32 = arith.constant 0 : i32
    %c0_i32_0 = arith.constant 0 : i32
    return %arg0, %c0_i32 : i32, i32
  }
}

module attributes {stable_mosaic.version = 11 : i64} {
  func.func @_segment_mean_kernel(%arg0: i32, %arg1: i32, %arg2: memref<1x64xi32, #tpu.memory_space<vmem>>, %arg3: memref<64x128xbf16, #tpu.memory_space<vmem>>, %arg4: memref<16x128xf32, #tpu.memory_space<vmem>>, %arg5: memref<16x128xf32, #tpu.memory_space<vmem>>) attributes {dimension_semantics = [#tpu.dimension_semantics<parallel>, #tpu.dimension_semantics<arbitrary>], iteration_bounds = array<i64: 1, 1>, scalar_prefetch = 0 : i64, scratch_operands = 1 : i64, tpu.core_type = #tpu.core_type<tc>, window_params = [{transform_indices = @transform_0, window_bounds = array<i64: 1, 64>}, {transform_indices = @transform_1, window_bounds = array<i64: 64, 128>}, {transform_indices = @transform_2, window_bounds = array<i64: 16, 128>}]} {
    %c0_i32 = arith.constant 0 : i32
    %0 = arith.cmpi eq, %arg1, %c0_i32 : i32
    %1 = arith.extui %0 : i1 to i32
    %c0_i32_0 = arith.constant 0 : i32
    %2 = arith.cmpi ne, %1, %c0_i32_0 : i32
    scf.if %2 {
      %cst_10 = arith.constant 0.000000e+00 : f32
      %21 = vector.broadcast %cst_10 : f32 to vector<16x128xf32>
      %c0_11 = arith.constant 0 : index
      %c0_12 = arith.constant 0 : index
      %22 = vector.load %arg5[%c0_11, %c0_12] : memref<16x128xf32, #tpu.memory_space<vmem>>, vector<16x128xf32>
      tpu.vector_store %arg5[%c0_11, %c0_12], %21 {strides = array<i32>} : memref<16x128xf32, #tpu.memory_space<vmem>>, vector<16x128xf32>,
    } else {
    }
    %c0 = arith.constant 0 : index
    %c0_1 = arith.constant 0 : index
    %3 = vector.load %arg3[%c0, %c0_1] : memref<64x128xbf16, #tpu.memory_space<vmem>>, vector<64x128xbf16>
    %c0_2 = arith.constant 0 : index
    %c0_3 = arith.constant 0 : index
    %4 = vector.load %arg2[%c0_2, %c0_3] : memref<1x64xi32, #tpu.memory_space<vmem>>, vector<1x64xi32>
    %c16_i32 = arith.constant 16 : i32
    %5 = arith.muli %arg0, %c16_i32 : i32
    %6 = tpu.iota {dimensions = array<i32: 0>} : vector<16x64xi32>
    %7 = vector.broadcast %5 : i32 to vector<16x64xi32>
    %8 = arith.addi %7, %6 : vector<16x64xi32>
    %9 = vector.broadcast %4 : vector<1x64xi32> to vector<16x64xi32>
    %10 = arith.cmpi eq, %8, %9 : vector<16x64xi32>
    %11 = arith.extui %10 : vector<16x64xi1> to vector<16x64xi32>
    %12 = arith.sitofp %11 : vector<16x64xi32> to vector<16x64xf32>
    %13 = arith.truncf %12 : vector<16x64xf32> to vector<16x64xbf16>
    %c0_4 = arith.constant 0 : index
    %c0_5 = arith.constant 0 : index
    %14 = vector.load %arg5[%c0_4, %c0_5] : memref<16x128xf32, #tpu.memory_space<vmem>>, vector<16x128xf32>
    %cst = arith.constant dense<0.000000e+00> : vector<16x128xf32>
    %15 = tpu.matmul %13, %3, %cst {dimension_numbers = #tpu.dot_dimension_numbers<[1], [0], [0], [1], [0, 0, 1, 1], [], []>} : vector<16x64xbf16>, vector<64x128xbf16>, vector<16x128xf32> -> vector<16x128xf32>
    %16 = arith.addf %14, %15 : vector<16x128xf32>
    %c0_6 = arith.constant 0 : index
    %c0_7 = arith.constant 0 : index
    %17 = vector.load %arg5[%c0_6, %c0_7] : memref<16x128xf32, #tpu.memory_space<vmem>>, vector<16x128xf32>
    tpu.vector_store %arg5[%c0_6, %c0_7], %16 {strides = array<i32>} : memref<16x128xf32, #tpu.memory_space<vmem>>, vector<16x128xf32>,
    %c0_i32_8 = arith.constant 0 : i32
    %18 = arith.cmpi eq, %arg1, %c0_i32_8 : i32
    %19 = arith.extui %18 : i1 to i32
    %c0_i32_9 = arith.constant 0 : i32
    %20 = arith.cmpi ne, %19, %c0_i32_9 : i32
    scf.if %20 {
      %c0_10 = arith.constant 0 : index
      %c0_11 = arith.constant 0 : index
      %21 = vector.load %arg5[%c0_10, %c0_11] : memref<16x128xf32, #tpu.memory_space<vmem>>, vector<16x128xf32>
      %22 = vector.extract_strided_slice %21 {offsets = [0, 127], sizes = [16, 1], strides = [1, 1]} : vector<16x128xf32> to vector<16x1xf32>
      %cst_12 = arith.constant 1.000000e+00 : f32
      %23 = vector.broadcast %cst_12 : f32 to vector<16x1xf32>
      %24 = arith.maximumf %22, %23 : vector<16x1xf32>
      %25 = vector.broadcast %24 : vector<16x1xf32> to vector<16x128xf32>
      %26 = arith.divf %21, %25 : vector<16x128xf32>
      %c0_13 = arith.constant 0 : index
      %c0_14 = arith.constant 0 : index
      %27 = vector.load %arg4[%c0_13, %c0_14] : memref<16x128xf32, #tpu.memory_space<vmem>>, vector<16x128xf32>
      tpu.vector_store %arg4[%c0_13, %c0_14], %26 {strides = array<i32>} : memref<16x128xf32, #tpu.memory_space<vmem>>, vector<16x128xf32>,
    } else {
    }
    return
  }
  func.func @transform_0(%arg0: i32, %arg1: i32) -> (i32, i32) {
    %c0_i32 = arith.constant 0 : i32
    %c0_i32_0 = arith.constant 0 : i32
    return %c0_i32, %arg1 : i32, i32
  }
  func.func @transform_1(%arg0: i32, %arg1: i32) -> (i32, i32) {
    %c0_i32 = arith.constant 0 : i32
    %c0_i32_0 = arith.constant 0 : i32
    return %arg1, %c0_i32 : i32, i32
  }
  func.func @transform_2(%arg0: i32, %arg1: i32) -> (i32, i32) {
    %c0_i32 = arith.constant 0 : i32
    %c0_i32_0 = arith.constant 0 : i32
    return %arg0, %c0_i32 : i32, i32
  }
}

module attributes {stable_mosaic.version = 11 : i64} {
  func.func @_segment_mean_kernel(%arg0: i32, %arg1: i32, %arg2: memref<1x16xi32, #tpu.memory_space<vmem>>, %arg3: memref<16x141xbf16, #tpu.memory_space<vmem>>, %arg4: memref<8x141xf32, #tpu.memory_space<vmem>>, %arg5: memref<8x141xf32, #tpu.memory_space<vmem>>) attributes {dimension_semantics = [#tpu.dimension_semantics<parallel>, #tpu.dimension_semantics<arbitrary>], iteration_bounds = array<i64: 1, 1>, scalar_prefetch = 0 : i64, scratch_operands = 1 : i64, tpu.core_type = #tpu.core_type<tc>, window_params = [{transform_indices = @transform_0, window_bounds = array<i64: 1, 16>}, {transform_indices = @transform_1, window_bounds = array<i64: 16, 141>}, {transform_indices = @transform_2, window_bounds = array<i64: 8, 141>}]} {
    %c0_i32 = arith.constant 0 : i32
    %0 = arith.cmpi eq, %arg1, %c0_i32 : i32
    %1 = arith.extui %0 : i1 to i32
    %c0_i32_0 = arith.constant 0 : i32
    %2 = arith.cmpi ne, %1, %c0_i32_0 : i32
    scf.if %2 {
      %cst_10 = arith.constant 0.000000e+00 : f32
      %21 = vector.broadcast %cst_10 : f32 to vector<8x141xf32>
      %c0_11 = arith.constant 0 : index
      %c0_12 = arith.constant 0 : index
      %22 = vector.load %arg5[%c0_11, %c0_12] : memref<8x141xf32, #tpu.memory_space<vmem>>, vector<8x141xf32>
      tpu.vector_store %arg5[%c0_11, %c0_12], %21 {strides = array<i32>} : memref<8x141xf32, #tpu.memory_space<vmem>>, vector<8x141xf32>,
    } else {
    }
    %c0 = arith.constant 0 : index
    %c0_1 = arith.constant 0 : index
    %3 = vector.load %arg3[%c0, %c0_1] : memref<16x141xbf16, #tpu.memory_space<vmem>>, vector<16x141xbf16>
    %c0_2 = arith.constant 0 : index
    %c0_3 = arith.constant 0 : index
    %4 = vector.load %arg2[%c0_2, %c0_3] : memref<1x16xi32, #tpu.memory_space<vmem>>, vector<1x16xi32>
    %c8_i32 = arith.constant 8 : i32
    %5 = arith.muli %arg0, %c8_i32 : i32
    %6 = tpu.iota {dimensions = array<i32: 0>} : vector<8x16xi32>
    %7 = vector.broadcast %5 : i32 to vector<8x16xi32>
    %8 = arith.addi %7, %6 : vector<8x16xi32>
    %9 = vector.broadcast %4 : vector<1x16xi32> to vector<8x16xi32>
    %10 = arith.cmpi eq, %8, %9 : vector<8x16xi32>
    %11 = arith.extui %10 : vector<8x16xi1> to vector<8x16xi32>
    %12 = arith.sitofp %11 : vector<8x16xi32> to vector<8x16xf32>
    %13 = arith.truncf %12 : vector<8x16xf32> to vector<8x16xbf16>
    %c0_4 = arith.constant 0 : index
    %c0_5 = arith.constant 0 : index
    %14 = vector.load %arg5[%c0_4, %c0_5] : memref<8x141xf32, #tpu.memory_space<vmem>>, vector<8x141xf32>
    %cst = arith.constant dense<0.000000e+00> : vector<8x141xf32>
    %15 = tpu.matmul %13, %3, %cst {dimension_numbers = #tpu.dot_dimension_numbers<[1], [0], [0], [1], [0, 0, 1, 1], [], []>} : vector<8x16xbf16>, vector<16x141xbf16>, vector<8x141xf32> -> vector<8x141xf32>
    %16 = arith.addf %14, %15 : vector<8x141xf32>
    %c0_6 = arith.constant 0 : index
    %c0_7 = arith.constant 0 : index
    %17 = vector.load %arg5[%c0_6, %c0_7] : memref<8x141xf32, #tpu.memory_space<vmem>>, vector<8x141xf32>
    tpu.vector_store %arg5[%c0_6, %c0_7], %16 {strides = array<i32>} : memref<8x141xf32, #tpu.memory_space<vmem>>, vector<8x141xf32>,
    %c0_i32_8 = arith.constant 0 : i32
    %18 = arith.cmpi eq, %arg1, %c0_i32_8 : i32
    %19 = arith.extui %18 : i1 to i32
    %c0_i32_9 = arith.constant 0 : i32
    %20 = arith.cmpi ne, %19, %c0_i32_9 : i32
    scf.if %20 {
      %c0_10 = arith.constant 0 : index
      %c0_11 = arith.constant 0 : index
      %21 = vector.load %arg5[%c0_10, %c0_11] : memref<8x141xf32, #tpu.memory_space<vmem>>, vector<8x141xf32>
      %22 = vector.extract_strided_slice %21 {offsets = [0, 140], sizes = [8, 1], strides = [1, 1]} : vector<8x141xf32> to vector<8x1xf32>
      %cst_12 = arith.constant 1.000000e+00 : f32
      %23 = vector.broadcast %cst_12 : f32 to vector<8x1xf32>
      %24 = arith.maximumf %22, %23 : vector<8x1xf32>
      %25 = vector.broadcast %24 : vector<8x1xf32> to vector<8x141xf32>
      %26 = arith.divf %21, %25 : vector<8x141xf32>
      %c0_13 = arith.constant 0 : index
      %c0_14 = arith.constant 0 : index
      %27 = vector.load %arg4[%c0_13, %c0_14] : memref<8x141xf32, #tpu.memory_space<vmem>>, vector<8x141xf32>
      tpu.vector_store %arg4[%c0_13, %c0_14], %26 {strides = array<i32>} : memref<8x141xf32, #tpu.memory_space<vmem>>, vector<8x141xf32>,
    } else {
    }
    return
  }
  func.func @transform_0(%arg0: i32, %arg1: i32) -> (i32, i32) {
    %c0_i32 = arith.constant 0 : i32
    %c0_i32_0 = arith.constant 0 : i32
    return %c0_i32, %arg1 : i32, i32
  }
  func.func @transform_1(%arg0: i32, %arg1: i32) -> (i32, i32) {
    %c0_i32 = arith.constant 0 : i32
    %c0_i32_0 = arith.constant 0 : i32
    return %arg1, %c0_i32 : i32, i32
  }
  func.func @transform_2(%arg0: i32, %arg1: i32) -> (i32, i32) {
    %c0_i32 = arith.constant 0 : i32
    %c0_i32_0 = arith.constant 0 : i32
    return %arg0, %c0_i32 : i32, i32
  }
}

module attributes {stable_mosaic.version = 11 : i64} {
  func.func @_mlp2_kernel(%arg0: i32, %arg1: memref<16x64xbf16, #tpu.memory_space<vmem>>, %arg2: memref<64x32xbf16, #tpu.memory_space<vmem>>, %arg3: memref<1x32xf32, #tpu.memory_space<vmem>>, %arg4: memref<32x128xbf16, #tpu.memory_space<vmem>>, %arg5: memref<1x128xf32, #tpu.memory_space<vmem>>, %arg6: memref<16x128xf32, #tpu.memory_space<vmem>>) attributes {dimension_semantics = [#tpu.dimension_semantics<parallel>], iteration_bounds = array<i64: 1>, scalar_prefetch = 0 : i64, scratch_operands = 0 : i64, tpu.core_type = #tpu.core_type<tc>, window_params = [{transform_indices = @transform_0, window_bounds = array<i64: 16, 64>}, {pipeline_mode = #tpu.pipeline_mode<synchronous>, transform_indices = @transform_1, window_bounds = array<i64: 64, 32>}, {pipeline_mode = #tpu.pipeline_mode<synchronous>, transform_indices = @transform_2, window_bounds = array<i64: 1, 32>}, {pipeline_mode = #tpu.pipeline_mode<synchronous>, transform_indices = @transform_3, window_bounds = array<i64: 32, 128>}, {pipeline_mode = #tpu.pipeline_mode<synchronous>, transform_indices = @transform_4, window_bounds = array<i64: 1, 128>}, {transform_indices = @transform_5, window_bounds = array<i64: 16, 128>}]} {
    %c0 = arith.constant 0 : index
    %c0_0 = arith.constant 0 : index
    %0 = vector.load %arg1[%c0, %c0_0] : memref<16x64xbf16, #tpu.memory_space<vmem>>, vector<16x64xbf16>
    %c0_1 = arith.constant 0 : index
    %c0_2 = arith.constant 0 : index
    %1 = vector.load %arg2[%c0_1, %c0_2] : memref<64x32xbf16, #tpu.memory_space<vmem>>, vector<64x32xbf16>
    %cst = arith.constant dense<0.000000e+00> : vector<16x32xf32>
    %2 = tpu.matmul %0, %1, %cst {dimension_numbers = #tpu.dot_dimension_numbers<[1], [0], [0], [1], [0, 0, 1, 1], [], []>} : vector<16x64xbf16>, vector<64x32xbf16>, vector<16x32xf32> -> vector<16x32xf32>
    %c0_3 = arith.constant 0 : index
    %c0_4 = arith.constant 0 : index
    %3 = vector.load %arg3[%c0_3, %c0_4] : memref<1x32xf32, #tpu.memory_space<vmem>>, vector<1x32xf32>
    %4 = vector.broadcast %3 : vector<1x32xf32> to vector<16x32xf32>
    %5 = arith.addf %2, %4 : vector<16x32xf32>
    %6 = arith.negf %5 : vector<16x32xf32>
    %7 = math.exp %6 : vector<16x32xf32>
    %cst_5 = arith.constant 1.000000e+00 : f32
    %8 = vector.broadcast %cst_5 : f32 to vector<16x32xf32>
    %9 = arith.addf %8, %7 : vector<16x32xf32>
    %10 = arith.divf %8, %9 : vector<16x32xf32>
    %11 = arith.mulf %5, %10 : vector<16x32xf32>
    %12 = arith.truncf %11 : vector<16x32xf32> to vector<16x32xbf16>
    %c0_6 = arith.constant 0 : index
    %c0_7 = arith.constant 0 : index
    %13 = vector.load %arg4[%c0_6, %c0_7] : memref<32x128xbf16, #tpu.memory_space<vmem>>, vector<32x128xbf16>
    %cst_8 = arith.constant dense<0.000000e+00> : vector<16x128xf32>
    %14 = tpu.matmul %12, %13, %cst_8 {dimension_numbers = #tpu.dot_dimension_numbers<[1], [0], [0], [1], [0, 0, 1, 1], [], []>} : vector<16x32xbf16>, vector<32x128xbf16>, vector<16x128xf32> -> vector<16x128xf32>
    %c0_9 = arith.constant 0 : index
    %c0_10 = arith.constant 0 : index
    %15 = vector.load %arg5[%c0_9, %c0_10] : memref<1x128xf32, #tpu.memory_space<vmem>>, vector<1x128xf32>
    %16 = vector.broadcast %15 : vector<1x128xf32> to vector<16x128xf32>
    %17 = arith.addf %14, %16 : vector<16x128xf32>
    %c0_11 = arith.constant 0 : index
    %c0_12 = arith.constant 0 : index
    %18 = vector.load %arg6[%c0_11, %c0_12] : memref<16x128xf32, #tpu.memory_space<vmem>>, vector<16x128xf32>
    tpu.vector_store %arg6[%c0_11, %c0_12], %17 {strides = array<i32>} : memref<16x128xf32, #tpu.memory_space<vmem>>, vector<16x128xf32>,
    return
  }
  func.func @transform_0(%arg0: i32) -> (i32, i32) {
    %c0_i32 = arith.constant 0 : i32
    %c0_i32_0 = arith.constant 0 : i32
    return %arg0, %c0_i32 : i32, i32
  }
  func.func @transform_1(%arg0: i32) -> (i32, i32) {
    %c0_i32 = arith.constant 0 : i32
    %c0_i32_0 = arith.constant 0 : i32
    %c0_i32_1 = arith.constant 0 : i32
    return %c0_i32, %c0_i32_0 : i32, i32
  }
  func.func @transform_2(%arg0: i32) -> (i32, i32) {
    %c0_i32 = arith.constant 0 : i32
    %c0_i32_0 = arith.constant 0 : i32
    %c0_i32_1 = arith.constant 0 : i32
    return %c0_i32, %c0_i32_0 : i32, i32
  }
  func.func @transform_3(%arg0: i32) -> (i32, i32) {
    %c0_i32 = arith.constant 0 : i32
    %c0_i32_0 = arith.constant 0 : i32
    %c0_i32_1 = arith.constant 0 : i32
    return %c0_i32, %c0_i32_0 : i32, i32
  }
  func.func @transform_4(%arg0: i32) -> (i32, i32) {
    %c0_i32 = arith.constant 0 : i32
    %c0_i32_0 = arith.constant 0 : i32
    %c0_i32_1 = arith.constant 0 : i32
    return %c0_i32, %c0_i32_0 : i32, i32
  }
  func.func @transform_5(%arg0: i32) -> (i32, i32) {
    %c0_i32 = arith.constant 0 : i32
    %c0_i32_0 = arith.constant 0 : i32
    return %arg0, %c0_i32 : i32, i32
  }
}

module attributes {stable_mosaic.version = 11 : i64} {
  func.func @_mlp2_kernel(%arg0: i32, %arg1: memref<16x196xbf16, #tpu.memory_space<vmem>>, %arg2: memref<196x32xbf16, #tpu.memory_space<vmem>>, %arg3: memref<1x32xf32, #tpu.memory_space<vmem>>, %arg4: memref<32x128xbf16, #tpu.memory_space<vmem>>, %arg5: memref<1x128xf32, #tpu.memory_space<vmem>>, %arg6: memref<16x128xf32, #tpu.memory_space<vmem>>) attributes {dimension_semantics = [#tpu.dimension_semantics<parallel>], iteration_bounds = array<i64: 1>, scalar_prefetch = 0 : i64, scratch_operands = 0 : i64, tpu.core_type = #tpu.core_type<tc>, window_params = [{transform_indices = @transform_0, window_bounds = array<i64: 16, 196>}, {pipeline_mode = #tpu.pipeline_mode<synchronous>, transform_indices = @transform_1, window_bounds = array<i64: 196, 32>}, {pipeline_mode = #tpu.pipeline_mode<synchronous>, transform_indices = @transform_2, window_bounds = array<i64: 1, 32>}, {pipeline_mode = #tpu.pipeline_mode<synchronous>, transform_indices = @transform_3, window_bounds = array<i64: 32, 128>}, {pipeline_mode = #tpu.pipeline_mode<synchronous>, transform_indices = @transform_4, window_bounds = array<i64: 1, 128>}, {transform_indices = @transform_5, window_bounds = array<i64: 16, 128>}]} {
    %c0 = arith.constant 0 : index
    %c0_0 = arith.constant 0 : index
    %0 = vector.load %arg1[%c0, %c0_0] : memref<16x196xbf16, #tpu.memory_space<vmem>>, vector<16x196xbf16>
    %c0_1 = arith.constant 0 : index
    %c0_2 = arith.constant 0 : index
    %1 = vector.load %arg2[%c0_1, %c0_2] : memref<196x32xbf16, #tpu.memory_space<vmem>>, vector<196x32xbf16>
    %cst = arith.constant dense<0.000000e+00> : vector<16x32xf32>
    %2 = tpu.matmul %0, %1, %cst {dimension_numbers = #tpu.dot_dimension_numbers<[1], [0], [0], [1], [0, 0, 1, 1], [], []>} : vector<16x196xbf16>, vector<196x32xbf16>, vector<16x32xf32> -> vector<16x32xf32>
    %c0_3 = arith.constant 0 : index
    %c0_4 = arith.constant 0 : index
    %3 = vector.load %arg3[%c0_3, %c0_4] : memref<1x32xf32, #tpu.memory_space<vmem>>, vector<1x32xf32>
    %4 = vector.broadcast %3 : vector<1x32xf32> to vector<16x32xf32>
    %5 = arith.addf %2, %4 : vector<16x32xf32>
    %6 = arith.negf %5 : vector<16x32xf32>
    %7 = math.exp %6 : vector<16x32xf32>
    %cst_5 = arith.constant 1.000000e+00 : f32
    %8 = vector.broadcast %cst_5 : f32 to vector<16x32xf32>
    %9 = arith.addf %8, %7 : vector<16x32xf32>
    %10 = arith.divf %8, %9 : vector<16x32xf32>
    %11 = arith.mulf %5, %10 : vector<16x32xf32>
    %12 = arith.truncf %11 : vector<16x32xf32> to vector<16x32xbf16>
    %c0_6 = arith.constant 0 : index
    %c0_7 = arith.constant 0 : index
    %13 = vector.load %arg4[%c0_6, %c0_7] : memref<32x128xbf16, #tpu.memory_space<vmem>>, vector<32x128xbf16>
    %cst_8 = arith.constant dense<0.000000e+00> : vector<16x128xf32>
    %14 = tpu.matmul %12, %13, %cst_8 {dimension_numbers = #tpu.dot_dimension_numbers<[1], [0], [0], [1], [0, 0, 1, 1], [], []>} : vector<16x32xbf16>, vector<32x128xbf16>, vector<16x128xf32> -> vector<16x128xf32>
    %c0_9 = arith.constant 0 : index
    %c0_10 = arith.constant 0 : index
    %15 = vector.load %arg5[%c0_9, %c0_10] : memref<1x128xf32, #tpu.memory_space<vmem>>, vector<1x128xf32>
    %16 = vector.broadcast %15 : vector<1x128xf32> to vector<16x128xf32>
    %17 = arith.addf %14, %16 : vector<16x128xf32>
    %c0_11 = arith.constant 0 : index
    %c0_12 = arith.constant 0 : index
    %18 = vector.load %arg6[%c0_11, %c0_12] : memref<16x128xf32, #tpu.memory_space<vmem>>, vector<16x128xf32>
    tpu.vector_store %arg6[%c0_11, %c0_12], %17 {strides = array<i32>} : memref<16x128xf32, #tpu.memory_space<vmem>>, vector<16x128xf32>,
    return
  }
  func.func @transform_0(%arg0: i32) -> (i32, i32) {
    %c0_i32 = arith.constant 0 : i32
    %c0_i32_0 = arith.constant 0 : i32
    return %arg0, %c0_i32 : i32, i32
  }
  func.func @transform_1(%arg0: i32) -> (i32, i32) {
    %c0_i32 = arith.constant 0 : i32
    %c0_i32_0 = arith.constant 0 : i32
    %c0_i32_1 = arith.constant 0 : i32
    return %c0_i32, %c0_i32_0 : i32, i32
  }
  func.func @transform_2(%arg0: i32) -> (i32, i32) {
    %c0_i32 = arith.constant 0 : i32
    %c0_i32_0 = arith.constant 0 : i32
    %c0_i32_1 = arith.constant 0 : i32
    return %c0_i32, %c0_i32_0 : i32, i32
  }
  func.func @transform_3(%arg0: i32) -> (i32, i32) {
    %c0_i32 = arith.constant 0 : i32
    %c0_i32_0 = arith.constant 0 : i32
    %c0_i32_1 = arith.constant 0 : i32
    return %c0_i32, %c0_i32_0 : i32, i32
  }
  func.func @transform_4(%arg0: i32) -> (i32, i32) {
    %c0_i32 = arith.constant 0 : i32
    %c0_i32_0 = arith.constant 0 : i32
    %c0_i32_1 = arith.constant 0 : i32
    return %c0_i32, %c0_i32_0 : i32, i32
  }
  func.func @transform_5(%arg0: i32) -> (i32, i32) {
    %c0_i32 = arith.constant 0 : i32
    %c0_i32_0 = arith.constant 0 : i32
    return %arg0, %c0_i32 : i32, i32
  }
}

</mosaic_0001>

<llo_original>
// kernel: sub.9
$region0: #{sub.9}
  #allocation0 [shape = 's32[1]{0}', space=sflag, size = 0x4, scoped, tag = 'scoped memory for sub.9']
  %s0 = inlined_call_operand.vmem [shape: f32[64,3], index: 0, kind: input, shape index: {}]
  %s1 = inlined_call_operand.vmem [shape: f32[64,3], index: 1, kind: input, shape index: {}]
  %s2 = inlined_call_operand.vmem [shape: f32[64,3], index: 2, kind: output, shape index: {}]
  %v3 = vld [vmem:[%s0] sm:$0xff]
  %v4 = vld [vmem:[%s1] sm:$0xff]
  %5 = xla_tuple %v3, %v4
  %6 = xla_tuple %5
  %v7 = vsub.f32 %v3, %v4
  %8 = xla_tuple %v7
  %9 = vst [vmem:[%s2] sm:$0xff] %v7
  %s10 = scalar_lea.vmem %s0, 8
  %v11 = vld [vmem:[%s10] sm:$0xff]
  %s12 = scalar_lea.vmem %s1, 8
  %v13 = vld [vmem:[%s12] sm:$0xff]
  %14 = xla_tuple %v11, %v13
  %15 = xla_tuple %14
  %v16 = vsub.f32 %v11, %v13
  %17 = xla_tuple %v16
  %s18 = scalar_lea.vmem %s2, 8
  %19 = vst [vmem:[%s18] sm:$0xff] %v16
  %s20 = scalar_lea.vmem %s0, 16
  %v21 = vld [vmem:[%s20] sm:$0xff]
  %s22 = scalar_lea.vmem %s1, 16
  %v23 = vld [vmem:[%s22] sm:$0xff]
  %24 = xla_tuple %v21, %v23
  %25 = xla_tuple %24
  %v26 = vsub.f32 %v21, %v23
  %27 = xla_tuple %v26
  %s28 = scalar_lea.vmem %s2, 16
  %29 = vst [vmem:[%s28] sm:$0xff] %v26
  %s30 = scalar_lea.vmem %s0, 24
  %v31 = vld [vmem:[%s30] sm:$0xff]
  %s32 = scalar_lea.vmem %s1, 24
  %v33 = vld [vmem:[%s32] sm:$0xff]
  %34 = xla_tuple %v31, %v33
  %35 = xla_tuple %34
  %v36 = vsub.f32 %v31, %v33
  %37 = xla_tuple %v36
  %s38 = scalar_lea.vmem %s2, 24
  %39 = vst [vmem:[%s38] sm:$0xff] %v36
  %s40 = scalar_lea.vmem %s0, 32
  %v41 = vld [vmem:[%s40] sm:$0xff]
  %s42 = scalar_lea.vmem %s1, 32
  %v43 = vld [vmem:[%s42] sm:$0xff]
  %44 = xla_tuple %v41, %v43
  %45 = xla_tuple %44
  %v46 = vsub.f32 %v41, %v43
  %47 = xla_tuple %v46
  %s48 = scalar_lea.vmem %s2, 32
  %49 = vst [vmem:[%s48] sm:$0xff] %v46
  %s50 = scalar_lea.vmem %s0, 40
  %v51 = vld [vmem:[%s50] sm:$0xff]
  %s52 = scalar_lea.vmem %s1, 40
  %v53 = vld [vmem:[%s52] sm:$0xff]
  %54 = xla_tuple %v51, %v53
  %55 = xla_tuple %54
  %v56 = vsub.f32 %v51, %v53
  %57 = xla_tuple %v56
  %s58 = scalar_lea.vmem %s2, 40
  %59 = vst [vmem:[%s58] sm:$0xff] %v56
  %s60 = scalar_lea.vmem %s0, 48
  %v61 = vld [vmem:[%s60] sm:$0xff]
  %s62 = scalar_lea.vmem %s1, 48
  %v63 = vld [vmem:[%s62] sm:$0xff]
  %64 = xla_tuple %v61, %v63
  %65 = xla_tuple %64
  %v66 = vsub.f32 %v61, %v63
  %67 = xla_tuple %v66
  %s68 = scalar_lea.vmem %s2, 48
  %69 = vst [vmem:[%s68] sm:$0xff] %v66
  %s70 = scalar_lea.vmem %s0, 56
  %v71 = vld [vmem:[%s70] sm:$0xff]
  %s72 = scalar_lea.vmem %s1, 56
  %v73 = vld [vmem:[%s72] sm:$0xff]
  %74 = xla_tuple %v71, %v73
  %75 = xla_tuple %74
  %v76 = vsub.f32 %v71, %v73
  %77 = xla_tuple %v76
  %s78 = scalar_lea.vmem %s2, 56
  %79 = vst [vmem:[%s78] sm:$0xff] %v76

// kernel: schnet_gcl_forward.8
$region0: #{schnet_gcl_forward.8}
  #allocation0 [shape = 'u32[]', space=smem, size = 0x4, offset = 0x4, fixed_abs, tag = 'smem constant byte address 0x4 - core index']
  #allocation1 [shape = 'u32[144,128]{1,0:T(1,128)}', space=vmem, size = 0x12000, scoped, tag = 'internal scratch']
  #allocation2 [shape = 'f32[8,4]{1,0:T(8,128)}', space=vmem, size = 0x1000, scoped, tag = 'scratch operand']
  %s0 = inlined_call_operand.vmem [shape: s32[1,16], index: 0, kind: input, shape index: {}]
  %s1 = inlined_call_operand.vmem [shape: bf16[16,4], index: 1, kind: input, shape index: {}]
  %s2 = inlined_call_operand.vmem [shape: f32[8,4], index: 2, kind: output, shape index: {}]
  %s3 = sld [smem:[#allocation0]]
  $region26: #{schnet_gcl_forward.8} parent=0
    _
  %s5 = ssub.s32 1, %s3
  %s6 = scalar_select 0, %s5, %s3
  // Predicated region
  $region2: #{schnet_gcl_forward.8} parent=0 // pred_check
    _
  $region3: #{schnet_gcl_forward.8} parent=0 // pred_check_branch
    %8 = sbr.rel (0) target = $region5
  $region4: #{schnet_gcl_forward.8} parent=0 // pred_region
    _
  $region5: #{schnet_gcl_forward.8} parent=0 // pred_fallthru
    _
  // Predicated region
  $region6: #{schnet_gcl_forward.8} parent=0 // pred_check
    _
  $region7: #{schnet_gcl_forward.8} parent=0 // pred_check_branch
    %10 = sbr.rel (0) target = $region9
  $region8: #{schnet_gcl_forward.8} parent=0 // pred_region
    _
  $region9: #{schnet_gcl_forward.8} parent=0 // pred_fallthru
    _
  %p12 = scmp.eq.s32.totalorder 0, 0
  // Predicated region
  $region10: #{schnet_gcl_forward.8} parent=0 // pred_check
    %p13 = pneg %p12
  $region11: #{schnet_gcl_forward.8} parent=0 // pred_check_branch
    %15 = sbr.rel (%p13) target = $region13
  $region12: #{schnet_gcl_forward.8} parent=0 // pred_region
    %vm16 = vcmask 31744
    %17 = vst.msk [vmem:[#allocation2] sm:$0xff] %vm16, 0.0
  $region13: #{schnet_gcl_forward.8} parent=0 // pred_fallthru
    _
  %v18 = vld [vmem:[%s1] sm:$0xf]
  %v19 = vld [vmem:[%s1 + $0x4] sm:$0xf]
  %v20 = vld [vmem:[%s0] sm:$0x1]
  %s21 = smul.u32 0, 8
  %v22 = vlaneseq
  %v23 = vshrl.u32 %v22, 7
  %v24 = vstv %s21
  %v25 = vadd.s32 %v24, %v23
  %v26 = vlaneseq
  %v27 = vshrl.u32 %v26, 7
  %v28 = vsub.s32 0, %v27
  %v29 = vrot.slane %v20, %v28
  %vm30 = vcmp.eq.s32.totalorder %v25, %v29
  %v31 = vsel %vm30, 1, 0
  %v32 = vcvt.s32.f32 %v31
  %v33 = vpack.c.bf16 %v32, %v32
  %v34 = vld [vmem:[#allocation2] sm:$0xff]
  %v37 = vunpack.c.l.b16 %v18
  %v38 = vunpack.c.l.b16 %v19
  %v39 = vpack.c.b16 %v38, %v37
  %vm41 = vcmask 130048
  %v43 = vsel %vm41, %v33, 0
  %45 = vmatprep.subr.bf16.mxu0 0
  %46 = vmatpush1.bf16.msra.mxu0 0
  %47 = vmatprep.subr.bf16.mxu0 0
  %48 = vmatpush1.bf16.msra.mxu0 0
  %49 = vmatprep.subr.bf16.mxu0 0
  %50 = vmatpush1.bf16.msra.mxu0 0
  %51 = vmatprep.subr.bf16.mxu0 0
  %52 = vmatpush1.bf16.msra.mxu0 0
  %53 = vmatprep.subr.bf16.mxu0 0
  %54 = vmatpush1.bf16.msra.mxu0 0
  %55 = vmatprep.subr.bf16.mxu0 0
  %56 = vmatpush1.bf16.msra.mxu0 0
  %57 = vmatprep.subr.bf16.mxu0 0
  %58 = vmatpush1.bf16.msra.mxu0 0
  %59 = vmatprep.subr.bf16.mxu0 0
  %60 = vmatpush1.bf16.msra.mxu0 %v39
  %61 = vmatprep.subr.bf16.mxu0 0
  %62 = vmatpush2.bf16.msra.mxu0 0
  %63 = vmatprep.subr.bf16.mxu0 0
  %64 = vmatpush2.bf16.msra.mxu0 0
  %65 = vmatprep.subr.bf16.mxu0 0
  %66 = vmatpush2.bf16.msra.mxu0 0
  %67 = vmatprep.subr.bf16.mxu0 0
  %68 = vmatpush2.bf16.msra.mxu0 0
  %69 = vmatprep.subr.bf16.mxu0 0
  %70 = vmatpush2.bf16.msra.mxu0 0
  %71 = vmatprep.subr.bf16.mxu0 0
  %72 = vmatpush2.bf16.msra.mxu0 0
  %73 = vmatprep.subr.bf16.mxu0 0
  %74 = vmatpush2.bf16.msra.mxu0 0
  %75 = vmatprep.subr.bf16.mxu0 0
  %76 = vmatpush2.bf16.msra.mxu0 0
  %77 = vmatprep.mubr.bf16.mxu0 0
  %78 = vmatmul.mubr.bf16.gmra.mxu0 %v43
  %v79 = vpop.f32.mrf.mxu0
  %v80 = vadd.f32 0.0, %v79
  %v81 = vpop.f32.mrf.mxu0
  %v82 = vpop.f32.mrf.mxu0
  %v83 = vpop.f32.mrf.mxu0
  %84 = vdwg.mxu0
  %v85 = vadd.f32 %v34, %v80
  %vm86 = vcmask 31744
  %87 = vst.msk [vmem:[#allocation2] sm:$0xff] %vm86, %v85
  // Predicated region
  $region14: #{schnet_gcl_forward.8} parent=0 // pred_check
    %p88 = pneg %p12
  $region15: #{schnet_gcl_forward.8} parent=0 // pred_check_branch
    %90 = sbr.rel (%p88) target = $region17
  $region16: #{schnet_gcl_forward.8} parent=0 // pred_region
    %v91 = vld [vmem:[#allocation2] sm:$0xff]
    %v92 = vmax.f32 %v91, 1.0
    %94 = vset.pattern.permute.xlu0 3
    %95 = vperm.xlu0 %94, %v92
    %v96 = vpop.permute.xlu0 %95
    %v98 = vrcp.pop %v96
    %v99 = vmul.f32 %v91, %v98
    %100 = vst.msk [vmem:[%s2] sm:$0xff] %vm86, %v99
  $region17: #{schnet_gcl_forward.8} parent=0 // pred_fallthru
    _
  // Predicated region
  $region18: #{schnet_gcl_forward.8} parent=0 // pred_check
    _
  $region19: #{schnet_gcl_forward.8} parent=0 // pred_check_branch
    %102 = sbr.rel (0) target = $region21
  $region20: #{schnet_gcl_forward.8} parent=0 // pred_region
    _
  $region21: #{schnet_gcl_forward.8} parent=0 // pred_fallthru
    _
  // Predicated region
  $region22: #{schnet_gcl_forward.8} parent=0 // pred_check
    _
  $region23: #{schnet_gcl_forward.8} parent=0 // pred_check_branch
    %104 = sbr.rel (0) target = $region25
  $region24: #{schnet_gcl_forward.8} parent=0 // pred_region
    _
  $region25: #{schnet_gcl_forward.8} parent=0 // pred_fallthru
    _

// kernel: schnet_gcl_forward.9
$region0: #{schnet_gcl_forward.9}
  #allocation0 [shape = 'u32[]', space=smem, size = 0x4, offset = 0x4, fixed_abs, tag = 'smem constant byte address 0x4 - core index']
  #allocation1 [shape = 'u32[144,128]{1,0:T(1,128)}', space=vmem, size = 0x12000, scoped, tag = 'internal scratch']
  %s0 = inlined_call_operand.vmem [shape: bf16[64,69], index: 0, kind: input, shape index: {}]
  %s1 = inlined_call_operand.vmem [shape: bf16[69,32], index: 1, kind: input, shape index: {}]
  %s2 = inlined_call_operand.vmem [shape: f32[1,32], index: 2, kind: input, shape index: {}, may-alias: {2,4}]
  %s3 = inlined_call_operand.vmem [shape: bf16[32,32], index: 3, kind: input, shape index: {}]
  %s4 = inlined_call_operand.vmem [shape: f32[1,32], index: 4, kind: input, shape index: {}, may-alias: {2,4}]
  %s5 = inlined_call_operand.vmem [shape: bf16[32,64], index: 5, kind: input, shape index: {}]
  %s6 = inlined_call_operand.vmem [shape: f32[1,64], index: 6, kind: input, shape index: {}]
  %s7 = inlined_call_operand.vmem [shape: bf16[64,2], index: 7, kind: input, shape index: {}]
  %s8 = inlined_call_operand.vmem [shape: bf16[64,128], index: 8, kind: output, shape index: {}]
  %s9 = sld [smem:[#allocation0]]
  $region65: #{schnet_gcl_forward.9} parent=0
    _
  %s11 = ssub.s32 1, %s9
  %s12 = scalar_select 0, %s11, %s9
  loop: start=0, step=1, limit=4
  $region2: #{schnet_gcl_forward.9} parent=0 // loop_pre_header
    _
  $region3: #{schnet_gcl_forward.9} parent=0 // loop_header
    %s14 = sphi 0, %s18
    %p15 = scmp.ge.s32.totalorder %s14, 4
    %s24 = sphi 0, %s26
    %s27 = sphi 0, %s24
    %s28 = sphi 0, %s27
    %s44 = sphi 0, %s28
    %s48 = sphi 0, %s48
    %s50 = sphi 0, %s48
    %s51 = sphi 0, %s50
    %s65 = sphi 0, %s51
    %s69 = sphi 0, %s69
    %s71 = sphi 0, %s69
    %s72 = sphi 0, %s71
    %s86 = sphi 0, %s72
    %s90 = sphi 0, %s90
    %s92 = sphi 0, %s90
    %s93 = sphi 0, %s92
    %s107 = sphi 0, %s93
    %s111 = sphi 0, %s111
    %s113 = sphi 0, %s111
    %s114 = sphi 0, %s113
    %s128 = sphi 0, %s114
    %s132 = sphi 0, %s132
    %s134 = sphi 0, %s132
    %s135 = sphi 0, %s134
    %s149 = sphi 0, %s135
    %s153 = sphi 0, %s153
    %s155 = sphi 0, %s153
    %s156 = sphi 0, %s155
    %s170 = sphi 0, %s156
    %s174 = sphi 0, %s174
    %s176 = sphi 0, %s174
    %s177 = sphi 0, %s176
    %s191 = sphi 0, %s177
    %s197 = sphi 0, %s199
    %s200 = sphi 0, %s197
    %s201 = sphi 0, %s200
    %s217 = sphi 0, %s201
  $region4: #{schnet_gcl_forward.9} parent=0 // loop_header_branch
    %17 = sbr.rel (%p15) target = $region8
  $region5: #{schnet_gcl_forward.9} parent=0 // loop_body
    %s19 = ssub.s32 %s14, 1
    %s20 = ssub.s32 %s14, 2
    %s21 = sadd.s32 %s14, 1
    %s22 = ssub.s32 %s14, %s21
    %p23 = scmp.eq.s32.totalorder %s22, 0
    %s25 = sadd.s32 %s24, 1
    %s26 = scalar_select %p23, %s24, %s25
    %p29 = pneg %p23
    %p30 = scmp.eq.s32.totalorder %s14, 1
    %p31 = por %p29, %p30
    %p32 = scmp.ne.s32.totalorder %s24, %s27
    %p33 = scmp.eq.s32.totalorder %s14, 0
    %p34 = por %p32, %p33
    %p35 = scmp.ne.s32.totalorder %s24, %s27
    %p36 = scmp.eq.s32.totalorder %s19, 1
    %p37 = por %p35, %p36
    %p38 = scmp.ne.s32.totalorder %s27, %s28
    %p39 = scmp.eq.s32.totalorder %s19, 0
    %p40 = por %p38, %p39
    %p41 = scmp.ne.s32.totalorder %s27, %s28
    %p42 = scmp.eq.s32.totalorder %s20, 1
    %p43 = por %p41, %p42
    %p45 = scmp.ne.s32.totalorder %s28, %s44
    %p46 = scmp.eq.s32.totalorder %s20, 0
    %p47 = por %p45, %p46
    %s49 = sadd.s32 %s48, 1
    %p52 = scmp.eq.s32.totalorder %s14, 1
    %p53 = scmp.ne.s32.totalorder %s48, %s50
    %p54 = scmp.eq.s32.totalorder %s14, 0
    %p55 = por %p53, %p54
    %p56 = scmp.ne.s32.totalorder %s48, %s50
    %p57 = scmp.eq.s32.totalorder %s19, 1
    %p58 = por %p56, %p57
    %p59 = scmp.ne.s32.totalorder %s50, %s51
    %p60 = scmp.eq.s32.totalorder %s19, 0
    %p61 = por %p59, %p60
    %p62 = scmp.ne.s32.totalorder %s50, %s51
    %p63 = scmp.eq.s32.totalorder %s20, 1
    %p64 = por %p62, %p63
    %p66 = scmp.ne.s32.totalorder %s51, %s65
    %p67 = scmp.eq.s32.totalorder %s20, 0
    %p68 = por %p66, %p67
    %s70 = sadd.s32 %s69, 1
    %p73 = scmp.eq.s32.totalorder %s14, 1
    %p74 = scmp.ne.s32.totalorder %s69, %s71
    %p75 = scmp.eq.s32.totalorder %s14, 0
    %p76 = por %p74, %p75
    %p77 = scmp.ne.s32.totalorder %s69, %s71
    %p78 = scmp.eq.s32.totalorder %s19, 1
    %p79 = por %p77, %p78
    %p80 = scmp.ne.s32.totalorder %s71, %s72
    %p81 = scmp.eq.s32.totalorder %s19, 0
    %p82 = por %p80, %p81
    %p83 = scmp.ne.s32.totalorder %s71, %s72
    %p84 = scmp.eq.s32.totalorder %s20, 1
    %p85 = por %p83, %p84
    %p87 = scmp.ne.s32.totalorder %s72, %s86
    %p88 = scmp.eq.s32.totalorder %s20, 0
    %p89 = por %p87, %p88
    %s91 = sadd.s32 %s90, 1
    %p94 = scmp.eq.s32.totalorder %s14, 1
    %p95 = scmp.ne.s32.totalorder %s90, %s92
    %p96 = scmp.eq.s32.totalorder %s14, 0
    %p97 = por %p95, %p96
    %p98 = scmp.ne.s32.totalorder %s90, %s92
    %p99 = scmp.eq.s32.totalorder %s19, 1
    %p100 = por %p98, %p99
    %p101 = scmp.ne.s32.totalorder %s92, %s93
    %p102 = scmp.eq.s32.totalorder %s19, 0
    %p103 = por %p101, %p102
    %p104 = scmp.ne.s32.totalorder %s92, %s93
    %p105 = scmp.eq.s32.totalorder %s20, 1
    %p106 = por %p104, %p105
    %p108 = scmp.ne.s32.totalorder %s93, %s107
    %p109 = scmp.eq.s32.totalorder %s20, 0
    %p110 = por %p108, %p109
    %s112 = sadd.s32 %s111, 1
    %p115 = scmp.eq.s32.totalorder %s14, 1
    %p116 = scmp.ne.s32.totalorder %s111, %s113
    %p117 = scmp.eq.s32.totalorder %s14, 0
    %p118 = por %p116, %p117
    %p119 = scmp.ne.s32.totalorder %s111, %s113
    %p120 = scmp.eq.s32.totalorder %s19, 1
    %p121 = por %p119, %p120
    %p122 = scmp.ne.s32.totalorder %s113, %s114
    %p123 = scmp.eq.s32.totalorder %s19, 0
    %p124 = por %p122, %p123
    %p125 = scmp.ne.s32.totalorder %s113, %s114
    %p126 = scmp.eq.s32.totalorder %s20, 1
    %p127 = por %p125, %p126
    %p129 = scmp.ne.s32.totalorder %s114, %s128
    %p130 = scmp.eq.s32.totalorder %s20, 0
    %p131 = por %p129, %p130
    %s133 = sadd.s32 %s132, 1
    %p136 = scmp.eq.s32.totalorder %s14, 1
    %p137 = scmp.ne.s32.totalorder %s132, %s134
    %p138 = scmp.eq.s32.totalorder %s14, 0
    %p139 = por %p137, %p138
    %p140 = scmp.ne.s32.totalorder %s132, %s134
    %p141 = scmp.eq.s32.totalorder %s19, 1
    %p142 = por %p140, %p141
    %p143 = scmp.ne.s32.totalorder %s134, %s135
    %p144 = scmp.eq.s32.totalorder %s19, 0
    %p145 = por %p143, %p144
    %p146 = scmp.ne.s32.totalorder %s134, %s135
    %p147 = scmp.eq.s32.totalorder %s20, 1
    %p148 = por %p146, %p147
    %p150 = scmp.ne.s32.totalorder %s135, %s149
    %p151 = scmp.eq.s32.totalorder %s20, 0
    %p152 = por %p150, %p151
    %s154 = sadd.s32 %s153, 1
    %p157 = scmp.eq.s32.totalorder %s14, 1
    %p158 = scmp.ne.s32.totalorder %s153, %s155
    %p159 = scmp.eq.s32.totalorder %s14, 0
    %p160 = por %p158, %p159
    %p161 = scmp.ne.s32.totalorder %s153, %s155
    %p162 = scmp.eq.s32.totalorder %s19, 1
    %p163 = por %p161, %p162
    %p164 = scmp.ne.s32.totalorder %s155, %s156
    %p165 = scmp.eq.s32.totalorder %s19, 0
    %p166 = por %p164, %p165
    %p167 = scmp.ne.s32.totalorder %s155, %s156
    %p168 = scmp.eq.s32.totalorder %s20, 1
    %p169 = por %p167, %p168
    %p171 = scmp.ne.s32.totalorder %s156, %s170
    %p172 = scmp.eq.s32.totalorder %s20, 0
    %p173 = por %p171, %p172
    %s175 = sadd.s32 %s174, 1
    %p178 = scmp.eq.s32.totalorder %s14, 1
    %p179 = scmp.ne.s32.totalorder %s174, %s176
    %p180 = scmp.eq.s32.totalorder %s14, 0
    %p181 = por %p179, %p180
    %p182 = scmp.ne.s32.totalorder %s174, %s176
    %p183 = scmp.eq.s32.totalorder %s19, 1
    %p184 = por %p182, %p183
    %p185 = scmp.ne.s32.totalorder %s176, %s177
    %p186 = scmp.eq.s32.totalorder %s19, 0
    %p187 = por %p185, %p186
    %p188 = scmp.ne.s32.totalorder %s176, %s177
    %p189 = scmp.eq.s32.totalorder %s20, 1
    %p190 = por %p188, %p189
    %p192 = scmp.ne.s32.totalorder %s177, %s191
    %p193 = scmp.eq.s32.totalorder %s20, 0
    %p194 = por %p192, %p193
    %s195 = ssub.s32 %s14, %s21
    %p196 = scmp.eq.s32.totalorder %s195, 0
    %s198 = sadd.s32 %s197, 1
    %s199 = scalar_select %p196, %s197, %s198
    %p202 = pneg %p196
    %p203 = scmp.eq.s32.totalorder %s14, 1
    %p204 = por %p202, %p203
    %p205 = scmp.ne.s32.totalorder %s197, %s200
    %p206 = scmp.eq.s32.totalorder %s14, 0
    %p207 = por %p205, %p206
    %p208 = scmp.ne.s32.totalorder %s197, %s200
    %p209 = scmp.eq.s32.totalorder %s19, 1
    %p210 = por %p208, %p209
    %p211 = scmp.ne.s32.totalorder %s200, %s201
    %p212 = scmp.eq.s32.totalorder %s19, 0
    %p213 = por %p211, %p212
    %p214 = scmp.ne.s32.totalorder %s200, %s201
    %p215 = scmp.eq.s32.totalorder %s20, 1
    %p216 = por %p214, %p215
    %p218 = scmp.ne.s32.totalorder %s201, %s217
    %p219 = scmp.eq.s32.totalorder %s20, 0
    %p220 = por %p218, %p219
    %p221 = scmp.le.s32.totalorder 1, %s14
    %p222 = scmp.lt.s32.totalorder %s14, 3
    %p223 = pnand %p221, %p222
    %p224 = pneg %p223
    // Predicated region
    $region9: #{schnet_gcl_forward.9} parent=5 // pred_check
      _
    $region10: #{schnet_gcl_forward.9} parent=5 // pred_check_branch
      %226 = sbr.rel (%p223) target = $region12
    $region11: #{schnet_gcl_forward.9} parent=5 // pred_region
      %s227 = ssub.s32 %s14, 1
      // Predicated region
      $region13: #{schnet_gcl_forward.9} parent=11 // pred_check
        %p228 = pneg %p61
      $region14: #{schnet_gcl_forward.9} parent=11 // pred_check_branch
        %230 = sbr.rel (%p228) target = $region16
      $region15: #{schnet_gcl_forward.9} parent=11 // pred_region
        _
      $region16: #{schnet_gcl_forward.9} parent=11 // pred_fallthru
        _
      // Predicated region
      $region17: #{schnet_gcl_forward.9} parent=11 // pred_check
        %p231 = pneg %p82
      $region18: #{schnet_gcl_forward.9} parent=11 // pred_check_branch
        %233 = sbr.rel (%p231) target = $region20
      $region19: #{schnet_gcl_forward.9} parent=11 // pred_region
        _
      $region20: #{schnet_gcl_forward.9} parent=11 // pred_fallthru
        _
      // Predicated region
      $region21: #{schnet_gcl_forward.9} parent=11 // pred_check
        %p234 = pneg %p103
      $region22: #{schnet_gcl_forward.9} parent=11 // pred_check_branch
        %236 = sbr.rel (%p234) target = $region24
      $region23: #{schnet_gcl_forward.9} parent=11 // pred_region
        _
      $region24: #{schnet_gcl_forward.9} parent=11 // pred_fallthru
        _
      // Predicated region
      $region25: #{schnet_gcl_forward.9} parent=11 // pred_check
        %p237 = pneg %p124
      $region26: #{schnet_gcl_forward.9} parent=11 // pred_check_branch
        %239 = sbr.rel (%p237) target = $region28
      $region27: #{schnet_gcl_forward.9} parent=11 // pred_region
        _
      $region28: #{schnet_gcl_forward.9} parent=11 // pred_fallthru
        _
      // Predicated region
      $region29: #{schnet_gcl_forward.9} parent=11 // pred_check
        %p240 = pneg %p145
      $region30: #{schnet_gcl_forward.9} parent=11 // pred_check_branch
        %242 = sbr.rel (%p240) target = $region32
      $region31: #{schnet_gcl_forward.9} parent=11 // pred_region
        _
      $region32: #{schnet_gcl_forward.9} parent=11 // pred_fallthru
        _
      // Predicated region
      $region33: #{schnet_gcl_forward.9} parent=11 // pred_check
        %p243 = pneg %p166
      $region34: #{schnet_gcl_forward.9} parent=11 // pred_check_branch
        %245 = sbr.rel (%p243) target = $region36
      $region35: #{schnet_gcl_forward.9} parent=11 // pred_region
        _
      $region36: #{schnet_gcl_forward.9} parent=11 // pred_fallthru
        _
      // Predicated region
      $region37: #{schnet_gcl_forward.9} parent=11 // pred_check
        %p246 = pneg %p187
      $region38: #{schnet_gcl_forward.9} parent=11 // pred_check_branch
        %248 = sbr.rel (%p246) target = $region40
      $region39: #{schnet_gcl_forward.9} parent=11 // pred_region
        _
      $region40: #{schnet_gcl_forward.9} parent=11 // pred_fallthru
        _
    $region12: #{schnet_gcl_forward.9} parent=5 // pred_fallthru
      _
    %p249 = scmp.lt.s32.totalorder %s14, 2
    // Predicated region
    $region41: #{schnet_gcl_forward.9} parent=5 // pred_check
      %p250 = pneg %p249
    $region42: #{schnet_gcl_forward.9} parent=5 // pred_check_branch
      %252 = sbr.rel (%p250) target = $region44
    $region43: #{schnet_gcl_forward.9} parent=5 // pred_region
      // Predicated region
      $region45: #{schnet_gcl_forward.9} parent=43 // pred_check
        %p253 = pneg %p34
      $region46: #{schnet_gcl_forward.9} parent=43 // pred_check_branch
        %255 = sbr.rel (%p253) target = $region48
      $region47: #{schnet_gcl_forward.9} parent=43 // pred_region
        %s256 = smul.u32 4, %s14
        %p257 = scmp.lt.s32.totalorder %s256, 7
        %s258 = scalar_select %p257, %s256, 7
        %s259 = smul.addr %s258, 4
        %s260 = scalar_lea.vmem %s0, %s259
        %s261 = smul.u32 4, %s14
      $region48: #{schnet_gcl_forward.9} parent=43 // pred_fallthru
        _
    $region44: #{schnet_gcl_forward.9} parent=5 // pred_fallthru
      _
    %p262 = scmp.le.s32.totalorder 1, %s14
    %p263 = scmp.lt.s32.totalorder %s14, 3
    %p264 = pnand %p262, %p263
    %p265 = pneg %p264
    // Predicated region
    $region49: #{schnet_gcl_forward.9} parent=5 // pred_check
      _
    $region50: #{schnet_gcl_forward.9} parent=5 // pred_check_branch
      %267 = sbr.rel (%p264) target = $region52
    $region51: #{schnet_gcl_forward.9} parent=5 // pred_region
      %s268 = ssub.s32 %s14, 1
      %s269 = smul.u32 4, %s19
      %p270 = scmp.lt.s32.totalorder %s269, 7
      %s271 = scalar_select %p270, %s269, 7
      %s272 = smul.addr %s271, 4
      %s273 = scalar_lea.vmem %s0, %s272
      %p274 = pneg %p40
      %p275 = pneg %p37
      %p276 = pneg %p61
      %p277 = pneg %p58
      %p278 = pneg %p82
      %p279 = pneg %p79
      %p280 = pneg %p103
      %p281 = pneg %p100
      %p282 = pneg %p124
      %p283 = pneg %p121
      %p284 = pneg %p145
      %p285 = pneg %p142
      %p286 = pneg %p166
      %p287 = pneg %p163
      %p288 = pneg %p187
      %p289 = pneg %p184
      %p290 = pneg %p213
      %p291 = pneg %p210
      %s292 = smul.u32 4, %s19
      %p293 = scmp.lt.s32.totalorder %s292, 7
      %s294 = scalar_select %p293, %s292, 7
      %s295 = smul.addr %s294, 4
      %s296 = scalar_lea.vmem %s8, %s295
      %s297 = smul.u32 4, %s19
      %p298 = scmp.lt.s32.totalorder %s297, 7
      %s299 = scalar_select %p298, %s297, 7
      %s300 = smul.addr %s299, 4
      %s301 = scalar_lea.vmem %s0, %s300
      %s302 = smul.u32 4, %s19
      %s303 = smul.u32 4, %s19
      %p304 = scmp.lt.s32.totalorder %s303, 7
      %s305 = scalar_select %p304, %s303, 7
      %s306 = smul.addr %s305, 4
      %s307 = scalar_lea.vmem %s8, %s306
      %s308 = smul.u32 4, %s19
      %v310 = vld [vmem:[%s301] sm:$0xf]
      %v311 = vld [vmem:[%s301 + $0x4] sm:$0xf]
      %v312 = vld [vmem:[%s301 + $0x8] sm:$0xf]
      %v313 = vld [vmem:[%s301 + $0xc] sm:$0xf]
      %v314 = vld [vmem:[%s1] sm:$0xf]
      %v315 = vld [vmem:[%s1 + $0x4] sm:$0xf]
      %v316 = vld [vmem:[%s1 + $0x8] sm:$0xf]
      %v317 = vld [vmem:[%s1 + $0xc] sm:$0xf]
      %v318 = vld [vmem:[%s1 + $0x10] sm:$0xf]
      %v319 = vld [vmem:[%s1 + $0x14] sm:$0xf]
      %v320 = vld [vmem:[%s1 + $0x18] sm:$0xf]
      %v321 = vld [vmem:[%s1 + $0x1c] sm:$0xf]
      %v322 = vld [vmem:[%s1 + $0x20] sm:$0x7]
      %v323 = vld [vmem:[%s2] sm:$0x1]
      %v325 = vlaneseq
      %v326 = vshrl.u32 %v325, 7
      %v327 = vsub.s32 0, %v326
      %v328 = vrot.slane %v323, %v327
      %v334 = vunpack.c.l.b16 %v310
      %v335 = vunpack.c.l.b16 %v311
      %v336 = vunpack.c.l.b16 %v312
      %v337 = vunpack.c.l.b16 %v313
      %v338 = vpack.c.b16 %v335, %v334
      %v339 = vpack.c.b16 %v337, %v336
      %v349 = vunpack.c.l.b16 %v314
      %v350 = vunpack.c.l.b16 %v315
      %v351 = vunpack.c.l.b16 %v316
      %v352 = vunpack.c.l.b16 %v317
      %v353 = vunpack.c.l.b16 %v318
      %v354 = vunpack.c.l.b16 %v319
      %v355 = vunpack.c.l.b16 %v320
      %v356 = vunpack.c.l.b16 %v321
      %v357 = vunpack.c.l.b16 %v322
      %v358 = vpack.c.b16 %v350, %v349
      %v359 = vpack.c.b16 %v352, %v351
      %v360 = vpack.c.b16 %v354, %v353
      %v361 = vpack.c.b16 %v356, %v355
      %v362 = vpack.c.b16 %v357, %v357
      %vm367 = vcmask 564224
      %v369 = vsel %vm367, %v338, 0
      %v372 = vsel %vm367, %v339, 0
      %vm374 = vcmask 1041408
      %vm375 = vcmask 1042432
      %v376 = vsel %vm374, 4294967295, 65535
      %v377 = vsel %vm375, %v376, 0
      %v379 = vand.u32 %v362, %v377
      %381 = vmatprep.subr.bf16.mxu0 0
      %382 = vmatpush1.bf16.msra.mxu0 0
      %383 = vmatprep.subr.bf16.mxu0 0
      %384 = vmatpush1.bf16.msra.mxu0 0
      %385 = vmatprep.subr.bf16.mxu0 0
      %386 = vmatpush1.bf16.msra.mxu0 0
      %387 = vmatprep.subr.bf16.mxu0 0
      %388 = vmatpush1.bf16.msra.mxu0 %v379
      %389 = vmatprep.subr.bf16.mxu0 0
      %390 = vmatpush1.bf16.msra.mxu0 %v361
      %391 = vmatprep.subr.bf16.mxu0 0
      %392 = vmatpush1.bf16.msra.mxu0 %v360
      %393 = vmatprep.subr.bf16.mxu0 0
      %394 = vmatpush1.bf16.msra.mxu0 %v359
      %395 = vmatprep.subr.bf16.mxu0 0
      %396 = vmatpush1.bf16.msra.mxu0 %v358
      %397 = vmatprep.subr.bf16.mxu0 0
      %398 = vmatpush2.bf16.msra.mxu0 0
      %399 = vmatprep.subr.bf16.mxu0 0
      %400 = vmatpush2.bf16.msra.mxu0 0
      %401 = vmatprep.subr.bf16.mxu0 0
      %402 = vmatpush2.bf16.msra.mxu0 0
      %403 = vmatprep.subr.bf16.mxu0 0
      %404 = vmatpush2.bf16.msra.mxu0 0
      %405 = vmatprep.subr.bf16.mxu0 0
      %406 = vmatpush2.bf16.msra.mxu0 0
      %407 = vmatprep.subr.bf16.mxu0 0
      %408 = vmatpush2.bf16.msra.mxu0 0
      %409 = vmatprep.subr.bf16.mxu0 0
      %410 = vmatpush2.bf16.msra.mxu0 0
      %411 = vmatprep.subr.bf16.mxu0 0
      %412 = vmatpush2.bf16.msra.mxu0 0
      %413 = vmatprep.mubr.bf16.mxu0 0
      %414 = vmatmul.mubr.bf16.gmra.mxu0 %v369
      %v415 = vpop.f32.mrf.mxu0
      %v416 = vadd.f32 %v328, %v415
      %v417 = vpop.f32.mrf.mxu0
      %v418 = vpop.f32.mrf.mxu0
      %v419 = vadd.f32 %v328, %v418
      %v420 = vpop.f32.mrf.mxu0
      %421 = vmatprep.mubr.bf16.mxu0 0
      %422 = vmatmul.mubr.bf16.gmra.mxu0 %v372
      %v423 = vpop.f32.mrf.mxu0
      %v424 = vadd.f32 %v328, %v423
      %v425 = vpop.f32.mrf.mxu0
      %v426 = vpop.f32.mrf.mxu0
      %v427 = vadd.f32 %v328, %v426
      %v428 = vpop.f32.mrf.mxu0
      %429 = vdwg.mxu0
      %v430 = vxor.u32 %v416, 2147483648
      %v431 = vxor.u32 %v419, 2147483648
      %v432 = vxor.u32 %v424, 2147483648
      %v433 = vxor.u32 %v427, 2147483648
      %v434 = vmul.f32 %v430, 1.442695
      %v435 = vpow.pop %v434
      %v436 = vmul.f32 %v431, 1.442695
      %v437 = vpow.pop %v436
      %v438 = vmul.f32 %v432, 1.442695
      %v439 = vpow.pop %v438
      %v440 = vmul.f32 %v433, 1.442695
      %v441 = vpow.pop %v440
      %v442 = vadd.f32 %v435, 1.0
      %v443 = vadd.f32 %v437, 1.0
      %v444 = vadd.f32 %v439, 1.0
      %v445 = vadd.f32 %v441, 1.0
      %v446 = vrcp.pop %v442
      %v447 = vmul.f32 1.0, %v446
      %v448 = vrcp.pop %v443
      %v449 = vmul.f32 1.0, %v448
      %v450 = vrcp.pop %v444
      %v451 = vmul.f32 1.0, %v450
      %v452 = vrcp.pop %v445
      %v453 = vmul.f32 1.0, %v452
      %v454 = vmul.f32 %v416, %v447
      %v455 = vmul.f32 %v419, %v449
      %v456 = vmul.f32 %v424, %v451
      %v457 = vmul.f32 %v427, %v453
      %v458 = vpack.c.bf16 %v455, %v454
      %v459 = vpack.c.bf16 %v457, %v456
      %v460 = vld [vmem:[%s3] sm:$0xf]
      %v461 = vld [vmem:[%s3 + $0x4] sm:$0xf]
      %v462 = vld [vmem:[%s3 + $0x8] sm:$0xf]
      %v463 = vld [vmem:[%s3 + $0xc] sm:$0xf]
      %v464 = vld [vmem:[%s4] sm:$0x1]
      %v466 = vlaneseq
      %v467 = vshrl.u32 %v466, 7
      %v468 = vsub.s32 0, %v467
      %v469 = vrot.slane %v464, %v468
      %v475 = vunpack.c.l.b16 %v460
      %v476 = vunpack.c.l.b16 %v461
      %v477 = vunpack.c.l.b16 %v462
      %v478 = vunpack.c.l.b16 %v463
      %v479 = vpack.c.b16 %v476, %v475
      %v480 = vpack.c.b16 %v478, %v477
      %vm483 = vcmask 261120
      %v485 = vsel %vm483, %v458, 0
      %v488 = vsel %vm483, %v459, 0
      %490 = vmatprep.subr.bf16.mxu0 0
      %491 = vmatpush1.bf16.msra.mxu0 0
      %492 = vmatprep.subr.bf16.mxu0 0
      %493 = vmatpush1.bf16.msra.mxu0 0
      %494 = vmatprep.subr.bf16.mxu0 0
      %495 = vmatpush1.bf16.msra.mxu0 0
      %496 = vmatprep.subr.bf16.mxu0 0
      %497 = vmatpush1.bf16.msra.mxu0 0
      %498 = vmatprep.subr.bf16.mxu0 0
      %499 = vmatpush1.bf16.msra.mxu0 0
      %500 = vmatprep.subr.bf16.mxu0 0
      %501 = vmatpush1.bf16.msra.mxu0 0
      %502 = vmatprep.subr.bf16.mxu0 0
      %503 = vmatpush1.bf16.msra.mxu0 %v480
      %504 = vmatprep.subr.bf16.mxu0 0
      %505 = vmatpush1.bf16.msra.mxu0 %v479
      %506 = vmatprep.subr.bf16.mxu0 0
      %507 = vmatpush2.bf16.msra.mxu0 0
      %508 = vmatprep.subr.bf16.mxu0 0
      %509 = vmatpush2.bf16.msra.mxu0 0
      %510 = vmatprep.subr.bf16.mxu0 0
      %511 = vmatpush2.bf16.msra.mxu0 0
      %512 = vmatprep.subr.bf16.mxu0 0
      %513 = vmatpush2.bf16.msra.mxu0 0
      %514 = vmatprep.subr.bf16.mxu0 0
      %515 = vmatpush2.bf16.msra.mxu0 0
      %516 = vmatprep.subr.bf16.mxu0 0
      %517 = vmatpush2.bf16.msra.mxu0 0
      %518 = vmatprep.subr.bf16.mxu0 0
      %519 = vmatpush2.bf16.msra.mxu0 0
      %520 = vmatprep.subr.bf16.mxu0 0
      %521 = vmatpush2.bf16.msra.mxu0 0
      %522 = vmatprep.mubr.bf16.mxu0 0
      %523 = vmatmul.mubr.bf16.gmra.mxu0 %v485
      %v524 = vpop.f32.mrf.mxu0
      %v525 = vadd.f32 %v469, %v524
      %v526 = vpop.f32.mrf.mxu0
      %v527 = vpop.f32.mrf.mxu0
      %v528 = vadd.f32 %v469, %v527
      %v529 = vpop.f32.mrf.mxu0
      %530 = vmatprep.mubr.bf16.mxu0 0
      %531 = vmatmul.mubr.bf16.gmra.mxu0 %v488
      %v532 = vpop.f32.mrf.mxu0
      %v533 = vadd.f32 %v469, %v532
      %v534 = vpop.f32.mrf.mxu0
      %v535 = vpop.f32.mrf.mxu0
      %v536 = vadd.f32 %v469, %v535
      %v537 = vpop.f32.mrf.mxu0
      %538 = vdwg.mxu0
      %v539 = vxor.u32 %v525, 2147483648
      %v540 = vxor.u32 %v528, 2147483648
      %v541 = vxor.u32 %v533, 2147483648
      %v542 = vxor.u32 %v536, 2147483648
      %v543 = vmul.f32 %v539, 1.442695
      %v544 = vpow.pop %v543
      %v545 = vmul.f32 %v540, 1.442695
      %v546 = vpow.pop %v545
      %v547 = vmul.f32 %v541, 1.442695
      %v548 = vpow.pop %v547
      %v549 = vmul.f32 %v542, 1.442695
      %v550 = vpow.pop %v549
      %v551 = vadd.f32 %v544, 1.0
      %v552 = vadd.f32 %v546, 1.0
      %v553 = vadd.f32 %v548, 1.0
      %v554 = vadd.f32 %v550, 1.0
      %v555 = vrcp.pop %v551
      %v556 = vmul.f32 1.0, %v555
      %v557 = vrcp.pop %v552
      %v558 = vmul.f32 1.0, %v557
      %v559 = vrcp.pop %v553
      %v560 = vmul.f32 1.0, %v559
      %v561 = vrcp.pop %v554
      %v562 = vmul.f32 1.0, %v561
      %v563 = vmul.f32 %v525, %v556
      %v564 = vmul.f32 %v528, %v558
      %v565 = vmul.f32 %v533, %v560
      %v566 = vmul.f32 %v536, %v562
      %v567 = vpack.c.bf16 %v564, %v563
      %v568 = vpack.c.bf16 %v566, %v565
      %v569 = vld [vmem:[%s5] sm:$0xf]
      %v570 = vld [vmem:[%s5 + $0x4] sm:$0xf]
      %v571 = vld [vmem:[%s5 + $0x8] sm:$0xf]
      %v572 = vld [vmem:[%s5 + $0xc] sm:$0xf]
      %v573 = vld [vmem:[%s6] sm:$0x1]
      %v575 = vlaneseq
      %v576 = vshrl.u32 %v575, 7
      %v577 = vsub.s32 0, %v576
      %v578 = vrot.slane %v573, %v577
      %v584 = vunpack.c.l.b16 %v569
      %v585 = vunpack.c.l.b16 %v570
      %v586 = vunpack.c.l.b16 %v571
      %v587 = vunpack.c.l.b16 %v572
      %v588 = vpack.c.b16 %v585, %v584
      %v589 = vpack.c.b16 %v587, %v586
      %v593 = vsel %vm483, %v567, 0
      %v596 = vsel %vm483, %v568, 0
      %598 = vmatprep.subr.bf16.mxu0 0
      %599 = vmatpush1.bf16.msra.mxu0 0
      %600 = vmatprep.subr.bf16.mxu0 0
      %601 = vmatpush1.bf16.msra.mxu0 0
      %602 = vmatprep.subr.bf16.mxu0 0
      %603 = vmatpush1.bf16.msra.mxu0 0
      %604 = vmatprep.subr.bf16.mxu0 0
      %605 = vmatpush1.bf16.msra.mxu0 0
      %606 = vmatprep.subr.bf16.mxu0 0
      %607 = vmatpush1.bf16.msra.mxu0 0
      %608 = vmatprep.subr.bf16.mxu0 0
      %609 = vmatpush1.bf16.msra.mxu0 0
      %610 = vmatprep.subr.bf16.mxu0 0
      %611 = vmatpush1.bf16.msra.mxu0 %v589
      %612 = vmatprep.subr.bf16.mxu0 0
      %613 = vmatpush1.bf16.msra.mxu0 %v588
      %614 = vmatprep.subr.bf16.mxu0 0
      %615 = vmatpush2.bf16.msra.mxu0 0
      %616 = vmatprep.subr.bf16.mxu0 0
      %617 = vmatpush2.bf16.msra.mxu0 0
      %618 = vmatprep.subr.bf16.mxu0 0
      %619 = vmatpush2.bf16.msra.mxu0 0
      %620 = vmatprep.subr.bf16.mxu0 0
      %621 = vmatpush2.bf16.msra.mxu0 0
      %622 = vmatprep.subr.bf16.mxu0 0
      %623 = vmatpush2.bf16.msra.mxu0 0
      %624 = vmatprep.subr.bf16.mxu0 0
      %625 = vmatpush2.bf16.msra.mxu0 0
      %626 = vmatprep.subr.bf16.mxu0 0
      %627 = vmatpush2.bf16.msra.mxu0 0
      %628 = vmatprep.subr.bf16.mxu0 0
      %629 = vmatpush2.bf16.msra.mxu0 0
      %630 = vmatprep.mubr.bf16.mxu0 0
      %631 = vmatmul.mubr.bf16.gmra.mxu0 %v593
      %v632 = vpop.f32.mrf.mxu0
      %v633 = vadd.f32 %v578, %v632
      %v634 = vpop.f32.mrf.mxu0
      %v635 = vpop.f32.mrf.mxu0
      %v636 = vadd.f32 %v578, %v635
      %v637 = vpop.f32.mrf.mxu0
      %638 = vmatprep.mubr.bf16.mxu0 0
      %639 = vmatmul.mubr.bf16.gmra.mxu0 %v596
      %v640 = vpop.f32.mrf.mxu0
      %v641 = vadd.f32 %v578, %v640
      %v642 = vpop.f32.mrf.mxu0
      %v643 = vpop.f32.mrf.mxu0
      %v644 = vadd.f32 %v578, %v643
      %v645 = vpop.f32.mrf.mxu0
      %646 = vdwg.mxu0
      %v647 = vxor.u32 %v633, 2147483648
      %v648 = vxor.u32 %v636, 2147483648
      %v649 = vxor.u32 %v641, 2147483648
      %v650 = vxor.u32 %v644, 2147483648
      %v651 = vmul.f32 %v647, 1.442695
      %v652 = vpow.pop %v651
      %v653 = vmul.f32 %v648, 1.442695
      %v654 = vpow.pop %v653
      %v655 = vmul.f32 %v649, 1.442695
      %v656 = vpow.pop %v655
      %v657 = vmul.f32 %v650, 1.442695
      %v658 = vpow.pop %v657
      %v659 = vadd.f32 %v652, 1.0
      %v660 = vadd.f32 %v654, 1.0
      %v661 = vadd.f32 %v656, 1.0
      %v662 = vadd.f32 %v658, 1.0
      %v663 = vrcp.pop %v659
      %v664 = vmul.f32 1.0, %v663
      %v665 = vrcp.pop %v660
      %v666 = vmul.f32 1.0, %v665
      %v667 = vrcp.pop %v661
      %v668 = vmul.f32 1.0, %v667
      %v669 = vrcp.pop %v662
      %v670 = vmul.f32 1.0, %v669
      %v671 = vmul.f32 %v633, %v664
      %v672 = vmul.f32 %v636, %v666
      %v673 = vmul.f32 %v641, %v668
      %v674 = vmul.f32 %v644, %v670
      %v675 = vpack.c.bf16 %v672, %v671
      %v676 = vpack.c.bf16 %v674, %v673
      %v677 = vld [vmem:[%s7] sm:$0xf]
      %v678 = vld [vmem:[%s7 + $0x4] sm:$0xf]
      %v679 = vld [vmem:[%s7 + $0x8] sm:$0xf]
      %v680 = vld [vmem:[%s7 + $0xc] sm:$0xf]
      %v681 = vld [vmem:[%s7 + $0x10] sm:$0xf]
      %v682 = vld [vmem:[%s7 + $0x14] sm:$0xf]
      %v683 = vld [vmem:[%s7 + $0x18] sm:$0xf]
      %v684 = vld [vmem:[%s7 + $0x1c] sm:$0xf]
      %v693 = vunpack.c.l.b16 %v677
      %v694 = vunpack.c.l.b16 %v678
      %v695 = vunpack.c.l.b16 %v679
      %v696 = vunpack.c.l.b16 %v680
      %v697 = vunpack.c.l.b16 %v681
      %v698 = vunpack.c.l.b16 %v682
      %v699 = vunpack.c.l.b16 %v683
      %v700 = vunpack.c.l.b16 %v684
      %v701 = vpack.c.b16 %v694, %v693
      %v702 = vpack.c.b16 %v696, %v695
      %v703 = vpack.c.b16 %v698, %v697
      %v704 = vpack.c.b16 %v700, %v699
      %vm709 = vcmask 523264
      %v711 = vsel %vm709, %v675, 0
      %v714 = vsel %vm709, %v676, 0
      %716 = vmatprep.subr.bf16.mxu0 0
      %717 = vmatpush1.bf16.msra.mxu0 0
      %718 = vmatprep.subr.bf16.mxu0 0
      %719 = vmatpush1.bf16.msra.mxu0 0
      %720 = vmatprep.subr.bf16.mxu0 0
      %721 = vmatpush1.bf16.msra.mxu0 0
      %722 = vmatprep.subr.bf16.mxu0 0
      %723 = vmatpush1.bf16.msra.mxu0 0
      %724 = vmatprep.subr.bf16.mxu0 0
      %725 = vmatpush1.bf16.msra.mxu0 %v704
      %726 = vmatprep.subr.bf16.mxu0 0
      %727 = vmatpush1.bf16.msra.mxu0 %v703
      %728 = vmatprep.subr.bf16.mxu0 0
      %729 = vmatpush1.bf16.msra.mxu0 %v702
      %730 = vmatprep.subr.bf16.mxu0 0
      %731 = vmatpush1.bf16.msra.mxu0 %v701
      %732 = vmatprep.subr.bf16.mxu0 0
      %733 = vmatpush2.bf16.msra.mxu0 0
      %734 = vmatprep.subr.bf16.mxu0 0
      %735 = vmatpush2.bf16.msra.mxu0 0
      %736 = vmatprep.subr.bf16.mxu0 0
      %737 = vmatpush2.bf16.msra.mxu0 0
      %738 = vmatprep.subr.bf16.mxu0 0
      %739 = vmatpush2.bf16.msra.mxu0 0
      %740 = vmatprep.subr.bf16.mxu0 0
      %741 = vmatpush2.bf16.msra.mxu0 0
      %742 = vmatprep.subr.bf16.mxu0 0
      %743 = vmatpush2.bf16.msra.mxu0 0
      %744 = vmatprep.subr.bf16.mxu0 0
      %745 = vmatpush2.bf16.msra.mxu0 0
      %746 = vmatprep.subr.bf16.mxu0 0
      %747 = vmatpush2.bf16.msra.mxu0 0
      %748 = vmatprep.mubr.bf16.mxu0 0
      %749 = vmatmul.mubr.bf16.gmra.mxu0 %v711
      %v750 = vpop.f32.mrf.mxu0
      %v751 = vadd.f32 0.0, %v750
      %v752 = vpop.f32.mrf.mxu0
      %v753 = vpop.f32.mrf.mxu0
      %v754 = vadd.f32 0.0, %v753
      %v755 = vpop.f32.mrf.mxu0
      %756 = vmatprep.mubr.bf16.mxu0 0
      %757 = vmatmul.mubr.bf16.gmra.mxu0 %v714
      %v758 = vpop.f32.mrf.mxu0
      %v759 = vadd.f32 0.0, %v758
      %v760 = vpop.f32.mrf.mxu0
      %v761 = vpop.f32.mrf.mxu0
      %v762 = vadd.f32 0.0, %v761
      %v763 = vpop.f32.mrf.mxu0
      %764 = vdwg.mxu0
      %v767 = vunpack.c.l.b16 %v567
      %v768 = vunpack.c.h.b16 %v567
      %v769 = vunpack.c.l.b16 %v568
      %v770 = vunpack.c.h.b16 %v568
      %v771 = vpack.c.b16 %v767, %v767
      %v772 = vpack.c.b16 %v768, %v768
      %v773 = vpack.c.b16 %v769, %v769
      %v774 = vpack.c.b16 %v770, %v770
      %vm779 = vcmask 257024
      %780 = vst.msk [vmem:[%s307] sm:$0xf] %vm779, %v771
      %781 = vst.msk [vmem:[%s307 + $0x4] sm:$0xf] %vm779, %v772
      %782 = vst.msk [vmem:[%s307 + $0x8] sm:$0xf] %vm779, %v773
      %783 = vst.msk [vmem:[%s307 + $0xc] sm:$0xf] %vm779, %v774
      %v784 = vpack.c.bf16 %v754, %v751
      %v785 = vpack.c.bf16 %v762, %v759
      %v788 = vunpack.c.l.b16 %v784
      %v789 = vunpack.c.h.b16 %v784
      %v790 = vunpack.c.l.b16 %v785
      %v791 = vunpack.c.h.b16 %v785
      %v792 = vpack.c.b16 %v788, %v788
      %v793 = vpack.c.b16 %v789, %v789
      %v794 = vpack.c.b16 %v790, %v790
      %v795 = vpack.c.b16 %v791, %v791
      %796 = vrot.lane.b32.xlu0 %v792, 32
      %v797 = vpop.permute.xlu0 %796
      %798 = vrot.lane.b32.xlu0 %v793, 32
      %v799 = vpop.permute.xlu0 %798
      %800 = vrot.lane.b32.xlu0 %v794, 32
      %v801 = vpop.permute.xlu0 %800
      %802 = vrot.lane.b32.xlu0 %v795, 32
      %v803 = vpop.permute.xlu0 %802
      %vm808 = vcmask 273664
      %809 = vst.msk [vmem:[%s307] sm:$0xf] %vm808, %v797
      %810 = vst.msk [vmem:[%s307 + $0x4] sm:$0xf] %vm808, %v799
      %811 = vst.msk [vmem:[%s307 + $0x8] sm:$0xf] %vm808, %v801
      %812 = vst.msk [vmem:[%s307 + $0xc] sm:$0xf] %vm808, %v803
      %vm813 = vcmask 1043728
      %814 = vst.msk [vmem:[%s307] sm:$0xf] %vm813, 0
      %815 = vst.msk [vmem:[%s307 + $0x4] sm:$0xf] %vm813, 0
      %816 = vst.msk [vmem:[%s307 + $0x8] sm:$0xf] %vm813, 0
      %817 = vst.msk [vmem:[%s307 + $0xc] sm:$0xf] %vm813, 0
      %s818 = smul.u32 4, %s19
      %p819 = scmp.lt.s32.totalorder %s818, 7
      %s820 = scalar_select %p819, %s818, 7
      %s821 = smul.addr %s820, 4
      %s822 = scalar_lea.vmem %s8, %s821
      // Predicated region
      $region53: #{schnet_gcl_forward.9} parent=51 // pred_check
        %p823 = pneg %p210
      $region54: #{schnet_gcl_forward.9} parent=51 // pred_check_branch
        %825 = sbr.rel (%p823) target = $region56
      $region55: #{schnet_gcl_forward.9} parent=51 // pred_region
        %s826 = smul.u32 4, %s19
      $region56: #{schnet_gcl_forward.9} parent=51 // pred_fallthru
        _
    $region52: #{schnet_gcl_forward.9} parent=5 // pred_fallthru
      _
    %p827 = scmp.le.s32.totalorder 2, %s14
    // Predicated region
    $region57: #{schnet_gcl_forward.9} parent=5 // pred_check
      %p828 = pneg %p827
    $region58: #{schnet_gcl_forward.9} parent=5 // pred_check_branch
      %830 = sbr.rel (%p828) target = $region60
    $region59: #{schnet_gcl_forward.9} parent=5 // pred_region
      %s831 = ssub.s32 %s14, 2
      // Predicated region
      $region61: #{schnet_gcl_forward.9} parent=59 // pred_check
        %p832 = pneg %p216
      $region62: #{schnet_gcl_forward.9} parent=59 // pred_check_branch
        %834 = sbr.rel (%p832) target = $region64
      $region63: #{schnet_gcl_forward.9} parent=59 // pred_region
        %s835 = smul.u32 4, %s20
        %p836 = scmp.lt.s32.totalorder %s835, 7
        %s837 = scalar_select %p836, %s835, 7
        %s838 = smul.addr %s837, 4
        %s839 = scalar_lea.vmem %s8, %s838
      $region64: #{schnet_gcl_forward.9} parent=59 // pred_fallthru
        _
    $region60: #{schnet_gcl_forward.9} parent=5 // pred_fallthru
      _
  $region6: #{schnet_gcl_forward.9} parent=0 // loop_footer
    %s18 = sadd.s32 1, %s14
  $region7: #{schnet_gcl_forward.9} parent=0 // loop_footer_branch
    %13 = sbr.rel target = $region3
  $region8: #{schnet_gcl_forward.9} parent=0 // loop_exit
    _

// kernel: schnet_gcl_forward.10
$region0: #{schnet_gcl_forward.10}
  #allocation0 [shape = 'u32[]', space=smem, size = 0x4, offset = 0x4, fixed_abs, tag = 'smem constant byte address 0x4 - core index']
  #allocation1 [shape = 'u32[144,128]{1,0:T(1,128)}', space=vmem, size = 0x12000, scoped, tag = 'internal scratch']
  #allocation2 [shape = 'f32[16,128]{1,0:T(8,128)}', space=vmem, size = 0x2000, scoped, tag = 'scratch operand']
  %s0 = inlined_call_operand.vmem [shape: s32[1,64], index: 0, kind: input, shape index: {}]
  %s1 = inlined_call_operand.vmem [shape: bf16[64,128], index: 1, kind: input, shape index: {}]
  %s2 = inlined_call_operand.vmem [shape: f32[16,128], index: 2, kind: output, shape index: {}]
  %s3 = sld [smem:[#allocation0]]
  $region26: #{schnet_gcl_forward.10} parent=0
    _
  %s5 = ssub.s32 1, %s3
  %s6 = scalar_select 0, %s5, %s3
  // Predicated region
  $region2: #{schnet_gcl_forward.10} parent=0 // pred_check
    _
  $region3: #{schnet_gcl_forward.10} parent=0 // pred_check_branch
    %8 = sbr.rel (0) target = $region5
  $region4: #{schnet_gcl_forward.10} parent=0 // pred_region
    _
  $region5: #{schnet_gcl_forward.10} parent=0 // pred_fallthru
    _
  // Predicated region
  $region6: #{schnet_gcl_forward.10} parent=0 // pred_check
    _
  $region7: #{schnet_gcl_forward.10} parent=0 // pred_check_branch
    %10 = sbr.rel (0) target = $region9
  $region8: #{schnet_gcl_forward.10} parent=0 // pred_region
    _
  $region9: #{schnet_gcl_forward.10} parent=0 // pred_fallthru
    _
  %p12 = scmp.eq.s32.totalorder 0, 0
  // Predicated region
  $region10: #{schnet_gcl_forward.10} parent=0 // pred_check
    %p13 = pneg %p12
  $region11: #{schnet_gcl_forward.10} parent=0 // pred_check_branch
    %15 = sbr.rel (%p13) target = $region13
  $region12: #{schnet_gcl_forward.10} parent=0 // pred_region
    %16 = vst [vmem:[#allocation2] sm:$0xff] 0.0
    %17 = vst [vmem:[#allocation2 + $0x8] sm:$0xff] 0.0
  $region13: #{schnet_gcl_forward.10} parent=0 // pred_fallthru
    _
  %v18 = vld [vmem:[%s1] sm:$0xf]
  %v19 = vld [vmem:[%s1 + $0x4] sm:$0xf]
  %v20 = vld [vmem:[%s1 + $0x8] sm:$0xf]
  %v21 = vld [vmem:[%s1 + $0xc] sm:$0xf]
  %v22 = vld [vmem:[%s1 + $0x10] sm:$0xf]
  %v23 = vld [vmem:[%s1 + $0x14] sm:$0xf]
  %v24 = vld [vmem:[%s1 + $0x18] sm:$0xf]
  %v25 = vld [vmem:[%s1 + $0x1c] sm:$0xf]
  %v26 = vld [vmem:[%s0] sm:$0x1]
  %s27 = smul.u32 0, 16
  %v28 = vlaneseq
  %v29 = vshrl.u32 %v28, 7
  %v30 = vadd.s32 %v29, 8
  %v31 = vstv %s27
  %v32 = vadd.s32 %v31, %v29
  %v33 = vadd.s32 %v31, %v30
  %v34 = vlaneseq
  %v35 = vshrl.u32 %v34, 7
  %v36 = vsub.s32 0, %v35
  %v37 = vrot.slane %v26, %v36
  %vm38 = vcmp.eq.s32.totalorder %v32, %v37
  %vm39 = vcmp.eq.s32.totalorder %v33, %v37
  %v40 = vsel %vm38, 1, 0
  %v41 = vsel %vm39, 1, 0
  %v42 = vcvt.s32.f32 %v40
  %v43 = vcvt.s32.f32 %v41
  %v44 = vpack.c.bf16 %v43, %v42
  %v45 = vld [vmem:[#allocation2] sm:$0xff]
  %v46 = vld [vmem:[#allocation2 + $0x8] sm:$0xff]
  %v55 = vunpack.c.l.b16 %v18
  %v56 = vunpack.c.l.b16 %v19
  %v57 = vunpack.c.l.b16 %v20
  %v58 = vunpack.c.l.b16 %v21
  %v59 = vunpack.c.l.b16 %v22
  %v60 = vunpack.c.l.b16 %v23
  %v61 = vunpack.c.l.b16 %v24
  %v62 = vunpack.c.l.b16 %v25
  %v63 = vpack.c.b16 %v56, %v55
  %v64 = vpack.c.b16 %v58, %v57
  %v65 = vpack.c.b16 %v60, %v59
  %v66 = vpack.c.b16 %v62, %v61
  %vm71 = vcmask 523264
  %v73 = vsel %vm71, %v44, 0
  %75 = vmatprep.subr.bf16.mxu0 0
  %76 = vmatpush1.bf16.msra.mxu0 0
  %77 = vmatprep.subr.bf16.mxu0 0
  %78 = vmatpush1.bf16.msra.mxu0 0
  %79 = vmatprep.subr.bf16.mxu0 0
  %80 = vmatpush1.bf16.msra.mxu0 0
  %81 = vmatprep.subr.bf16.mxu0 0
  %82 = vmatpush1.bf16.msra.mxu0 0
  %83 = vmatprep.subr.bf16.mxu0 0
  %84 = vmatpush1.bf16.msra.mxu0 %v66
  %85 = vmatprep.subr.bf16.mxu0 0
  %86 = vmatpush1.bf16.msra.mxu0 %v65
  %87 = vmatprep.subr.bf16.mxu0 0
  %88 = vmatpush1.bf16.msra.mxu0 %v64
  %89 = vmatprep.subr.bf16.mxu0 0
  %90 = vmatpush1.bf16.msra.mxu0 %v63
  %91 = vmatprep.subr.bf16.mxu0 0
  %92 = vmatpush2.bf16.msra.mxu0 0
  %93 = vmatprep.subr.bf16.mxu0 0
  %94 = vmatpush2.bf16.msra.mxu0 0
  %95 = vmatprep.subr.bf16.mxu0 0
  %96 = vmatpush2.bf16.msra.mxu0 0
  %97 = vmatprep.subr.bf16.mxu0 0
  %98 = vmatpush2.bf16.msra.mxu0 0
  %99 = vmatprep.subr.bf16.mxu0 0
  %100 = vmatpush2.bf16.msra.mxu0 0
  %101 = vmatprep.subr.bf16.mxu0 0
  %102 = vmatpush2.bf16.msra.mxu0 0
  %103 = vmatprep.subr.bf16.mxu0 0
  %104 = vmatpush2.bf16.msra.mxu0 0
  %105 = vmatprep.subr.bf16.mxu0 0
  %106 = vmatpush2.bf16.msra.mxu0 0
  %107 = vmatprep.mubr.bf16.mxu0 0
  %108 = vmatmul.mubr.bf16.gmra.mxu0 %v73
  %v109 = vpop.f32.mrf.mxu0
  %v110 = vadd.f32 0.0, %v109
  %v111 = vpop.f32.mrf.mxu0
  %v112 = vpop.f32.mrf.mxu0
  %v113 = vadd.f32 0.0, %v112
  %v114 = vpop.f32.mrf.mxu0
  %115 = vdwg.mxu0
  %v116 = vadd.f32 %v45, %v110
  %v117 = vadd.f32 %v46, %v113
  %118 = vst [vmem:[#allocation2] sm:$0xff] %v116
  %119 = vst [vmem:[#allocation2 + $0x8] sm:$0xff] %v117
  // Predicated region
  $region14: #{schnet_gcl_forward.10} parent=0 // pred_check
    %p120 = pneg %p12
  $region15: #{schnet_gcl_forward.10} parent=0 // pred_check_branch
    %122 = sbr.rel (%p120) target = $region17
  $region16: #{schnet_gcl_forward.10} parent=0 // pred_region
    %v123 = vld [vmem:[#allocation2] sm:$0xff]
    %v124 = vld [vmem:[#allocation2 + $0x8] sm:$0xff]
    %v125 = vmax.f32 %v123, 1.0
    %v126 = vmax.f32 %v124, 1.0
    %128 = vset.pattern.permute.xlu0 127
    %129 = vperm.xlu0 %128, %v125
    %v130 = vpop.permute.xlu0 %129
    %133 = vset.pattern.permute.xlu0 127
    %134 = vperm.xlu0 %133, %v126
    %v135 = vpop.permute.xlu0 %134
    %v137 = vrcp.pop %v130
    %v138 = vmul.f32 %v123, %v137
    %v139 = vrcp.pop %v135
    %v140 = vmul.f32 %v124, %v139
    %141 = vst [vmem:[%s2] sm:$0xff] %v138
    %142 = vst [vmem:[%s2 + $0x8] sm:$0xff] %v140
  $region17: #{schnet_gcl_forward.10} parent=0 // pred_fallthru
    _
  // Predicated region
  $region18: #{schnet_gcl_forward.10} parent=0 // pred_check
    _
  $region19: #{schnet_gcl_forward.10} parent=0 // pred_check_branch
    %144 = sbr.rel (0) target = $region21
  $region20: #{schnet_gcl_forward.10} parent=0 // pred_region
    _
  $region21: #{schnet_gcl_forward.10} parent=0 // pred_fallthru
    _
  // Predicated region
  $region22: #{schnet_gcl_forward.10} parent=0 // pred_check
    _
  $region23: #{schnet_gcl_forward.10} parent=0 // pred_check_branch
    %146 = sbr.rel (0) target = $region25
  $region24: #{schnet_gcl_forward.10} parent=0 // pred_region
    _
  $region25: #{schnet_gcl_forward.10} parent=0 // pred_fallthru
    _

// kernel: schnet_gcl_forward.7
$region0: #{schnet_gcl_forward.7}
  #allocation0 [shape = 'u32[]', space=smem, size = 0x4, offset = 0x4, fixed_abs, tag = 'smem constant byte address 0x4 - core index']
  #allocation1 [shape = 'u32[144,128]{1,0:T(1,128)}', space=vmem, size = 0x12000, scoped, tag = 'internal scratch']
  #allocation2 [shape = 'f32[1,1]{1,0:T(1,128)S(1)}', space=vmem, size = 0x200, scoped, tag = 'scoped memory for schnet_gcl_forward.7']
  %s0 = inlined_call_operand.vmem [shape: bf16[64,68], index: 0, kind: input, shape index: {}]
  %s1 = inlined_call_operand.vmem [shape: f32[64,3], index: 1, kind: input, shape index: {}]
  %s2 = inlined_call_operand.vmem [shape: f32[1,50], index: 2, kind: input, shape index: {}]
  %s3 = inlined_call_operand.vmem [shape: bf16[68,33], index: 3, kind: input, shape index: {}]
  %s4 = inlined_call_operand.vmem [shape: f32[1,32], index: 4, kind: input, shape index: {}]
  %s5 = inlined_call_operand.vmem [shape: f32[1,32], index: 5, kind: input, shape index: {}, may-alias: {5,7}]
  %s6 = inlined_call_operand.vmem [shape: bf16[32,32], index: 6, kind: input, shape index: {}]
  %s7 = inlined_call_operand.vmem [shape: f32[1,32], index: 7, kind: input, shape index: {}, may-alias: {5,7}]
  %s8 = inlined_call_operand.vmem [shape: f32[1,50], index: 8, kind: input, shape index: {}]
  %s9 = inlined_call_operand.<no memory space> [shape: f32[1,1], index: 9, kind: input, shape index: {}]
  %s10 = inlined_call_operand.vmem [shape: bf16[64,128], index: 10, kind: output, shape index: {}]
  %s11 = sld [smem:[#allocation0]]
  $region73: #{schnet_gcl_forward.7} parent=0
    _
  %s13 = ssub.s32 1, %s11
  %s14 = scalar_select 0, %s13, %s11
  %v15 = vstv %s9
  %16 = vst [vmem:[#allocation2] sm:$0x1] %v15
  loop: start=0, step=1, limit=4
  $region2: #{schnet_gcl_forward.7} parent=0 // loop_pre_header
    _
  $region3: #{schnet_gcl_forward.7} parent=0 // loop_header
    %s18 = sphi 0, %s22
    %p19 = scmp.ge.s32.totalorder %s18, 4
    %s28 = sphi 0, %s30
    %s31 = sphi 0, %s28
    %s32 = sphi 0, %s31
    %s48 = sphi 0, %s32
    %s54 = sphi 0, %s56
    %s57 = sphi 0, %s54
    %s58 = sphi 0, %s57
    %s74 = sphi 0, %s58
    %s78 = sphi 0, %s78
    %s80 = sphi 0, %s78
    %s81 = sphi 0, %s80
    %s95 = sphi 0, %s81
    %s99 = sphi 0, %s99
    %s101 = sphi 0, %s99
    %s102 = sphi 0, %s101
    %s116 = sphi 0, %s102
    %s120 = sphi 0, %s120
    %s122 = sphi 0, %s120
    %s123 = sphi 0, %s122
    %s137 = sphi 0, %s123
    %s141 = sphi 0, %s141
    %s143 = sphi 0, %s141
    %s144 = sphi 0, %s143
    %s158 = sphi 0, %s144
    %s162 = sphi 0, %s162
    %s164 = sphi 0, %s162
    %s165 = sphi 0, %s164
    %s179 = sphi 0, %s165
    %s183 = sphi 0, %s183
    %s185 = sphi 0, %s183
    %s186 = sphi 0, %s185
    %s200 = sphi 0, %s186
    %s204 = sphi 0, %s204
    %s206 = sphi 0, %s204
    %s207 = sphi 0, %s206
    %s221 = sphi 0, %s207
    %s225 = sphi 0, %s225
    %s227 = sphi 0, %s225
    %s228 = sphi 0, %s227
    %s242 = sphi 0, %s228
    %s248 = sphi 0, %s250
    %s251 = sphi 0, %s248
    %s252 = sphi 0, %s251
    %s268 = sphi 0, %s252
  $region4: #{schnet_gcl_forward.7} parent=0 // loop_header_branch
    %21 = sbr.rel (%p19) target = $region8
  $region5: #{schnet_gcl_forward.7} parent=0 // loop_body
    %s23 = ssub.s32 %s18, 1
    %s24 = ssub.s32 %s18, 2
    %s25 = sadd.s32 %s18, 1
    %s26 = ssub.s32 %s18, %s25
    %p27 = scmp.eq.s32.totalorder %s26, 0
    %s29 = sadd.s32 %s28, 1
    %s30 = scalar_select %p27, %s28, %s29
    %p33 = pneg %p27
    %p34 = scmp.eq.s32.totalorder %s18, 1
    %p35 = por %p33, %p34
    %p36 = scmp.ne.s32.totalorder %s28, %s31
    %p37 = scmp.eq.s32.totalorder %s18, 0
    %p38 = por %p36, %p37
    %p39 = scmp.ne.s32.totalorder %s28, %s31
    %p40 = scmp.eq.s32.totalorder %s23, 1
    %p41 = por %p39, %p40
    %p42 = scmp.ne.s32.totalorder %s31, %s32
    %p43 = scmp.eq.s32.totalorder %s23, 0
    %p44 = por %p42, %p43
    %p45 = scmp.ne.s32.totalorder %s31, %s32
    %p46 = scmp.eq.s32.totalorder %s24, 1
    %p47 = por %p45, %p46
    %p49 = scmp.ne.s32.totalorder %s32, %s48
    %p50 = scmp.eq.s32.totalorder %s24, 0
    %p51 = por %p49, %p50
    %s52 = ssub.s32 %s18, %s25
    %p53 = scmp.eq.s32.totalorder %s52, 0
    %s55 = sadd.s32 %s54, 1
    %s56 = scalar_select %p53, %s54, %s55
    %p59 = pneg %p53
    %p60 = scmp.eq.s32.totalorder %s18, 1
    %p61 = por %p59, %p60
    %p62 = scmp.ne.s32.totalorder %s54, %s57
    %p63 = scmp.eq.s32.totalorder %s18, 0
    %p64 = por %p62, %p63
    %p65 = scmp.ne.s32.totalorder %s54, %s57
    %p66 = scmp.eq.s32.totalorder %s23, 1
    %p67 = por %p65, %p66
    %p68 = scmp.ne.s32.totalorder %s57, %s58
    %p69 = scmp.eq.s32.totalorder %s23, 0
    %p70 = por %p68, %p69
    %p71 = scmp.ne.s32.totalorder %s57, %s58
    %p72 = scmp.eq.s32.totalorder %s24, 1
    %p73 = por %p71, %p72
    %p75 = scmp.ne.s32.totalorder %s58, %s74
    %p76 = scmp.eq.s32.totalorder %s24, 0
    %p77 = por %p75, %p76
    %s79 = sadd.s32 %s78, 1
    %p82 = scmp.eq.s32.totalorder %s18, 1
    %p83 = scmp.ne.s32.totalorder %s78, %s80
    %p84 = scmp.eq.s32.totalorder %s18, 0
    %p85 = por %p83, %p84
    %p86 = scmp.ne.s32.totalorder %s78, %s80
    %p87 = scmp.eq.s32.totalorder %s23, 1
    %p88 = por %p86, %p87
    %p89 = scmp.ne.s32.totalorder %s80, %s81
    %p90 = scmp.eq.s32.totalorder %s23, 0
    %p91 = por %p89, %p90
    %p92 = scmp.ne.s32.totalorder %s80, %s81
    %p93 = scmp.eq.s32.totalorder %s24, 1
    %p94 = por %p92, %p93
    %p96 = scmp.ne.s32.totalorder %s81, %s95
    %p97 = scmp.eq.s32.totalorder %s24, 0
    %p98 = por %p96, %p97
    %s100 = sadd.s32 %s99, 1
    %p103 = scmp.eq.s32.totalorder %s18, 1
    %p104 = scmp.ne.s32.totalorder %s99, %s101
    %p105 = scmp.eq.s32.totalorder %s18, 0
    %p106 = por %p104, %p105
    %p107 = scmp.ne.s32.totalorder %s99, %s101
    %p108 = scmp.eq.s32.totalorder %s23, 1
    %p109 = por %p107, %p108
    %p110 = scmp.ne.s32.totalorder %s101, %s102
    %p111 = scmp.eq.s32.totalorder %s23, 0
    %p112 = por %p110, %p111
    %p113 = scmp.ne.s32.totalorder %s101, %s102
    %p114 = scmp.eq.s32.totalorder %s24, 1
    %p115 = por %p113, %p114
    %p117 = scmp.ne.s32.totalorder %s102, %s116
    %p118 = scmp.eq.s32.totalorder %s24, 0
    %p119 = por %p117, %p118
    %s121 = sadd.s32 %s120, 1
    %p124 = scmp.eq.s32.totalorder %s18, 1
    %p125 = scmp.ne.s32.totalorder %s120, %s122
    %p126 = scmp.eq.s32.totalorder %s18, 0
    %p127 = por %p125, %p126
    %p128 = scmp.ne.s32.totalorder %s120, %s122
    %p129 = scmp.eq.s32.totalorder %s23, 1
    %p130 = por %p128, %p129
    %p131 = scmp.ne.s32.totalorder %s122, %s123
    %p132 = scmp.eq.s32.totalorder %s23, 0
    %p133 = por %p131, %p132
    %p134 = scmp.ne.s32.totalorder %s122, %s123
    %p135 = scmp.eq.s32.totalorder %s24, 1
    %p136 = por %p134, %p135
    %p138 = scmp.ne.s32.totalorder %s123, %s137
    %p139 = scmp.eq.s32.totalorder %s24, 0
    %p140 = por %p138, %p139
    %s142 = sadd.s32 %s141, 1
    %p145 = scmp.eq.s32.totalorder %s18, 1
    %p146 = scmp.ne.s32.totalorder %s141, %s143
    %p147 = scmp.eq.s32.totalorder %s18, 0
    %p148 = por %p146, %p147
    %p149 = scmp.ne.s32.totalorder %s141, %s143
    %p150 = scmp.eq.s32.totalorder %s23, 1
    %p151 = por %p149, %p150
    %p152 = scmp.ne.s32.totalorder %s143, %s144
    %p153 = scmp.eq.s32.totalorder %s23, 0
    %p154 = por %p152, %p153
    %p155 = scmp.ne.s32.totalorder %s143, %s144
    %p156 = scmp.eq.s32.totalorder %s24, 1
    %p157 = por %p155, %p156
    %p159 = scmp.ne.s32.totalorder %s144, %s158
    %p160 = scmp.eq.s32.totalorder %s24, 0
    %p161 = por %p159, %p160
    %s163 = sadd.s32 %s162, 1
    %p166 = scmp.eq.s32.totalorder %s18, 1
    %p167 = scmp.ne.s32.totalorder %s162, %s164
    %p168 = scmp.eq.s32.totalorder %s18, 0
    %p169 = por %p167, %p168
    %p170 = scmp.ne.s32.totalorder %s162, %s164
    %p171 = scmp.eq.s32.totalorder %s23, 1
    %p172 = por %p170, %p171
    %p173 = scmp.ne.s32.totalorder %s164, %s165
    %p174 = scmp.eq.s32.totalorder %s23, 0
    %p175 = por %p173, %p174
    %p176 = scmp.ne.s32.totalorder %s164, %s165
    %p177 = scmp.eq.s32.totalorder %s24, 1
    %p178 = por %p176, %p177
    %p180 = scmp.ne.s32.totalorder %s165, %s179
    %p181 = scmp.eq.s32.totalorder %s24, 0
    %p182 = por %p180, %p181
    %s184 = sadd.s32 %s183, 1
    %p187 = scmp.eq.s32.totalorder %s18, 1
    %p188 = scmp.ne.s32.totalorder %s183, %s185
    %p189 = scmp.eq.s32.totalorder %s18, 0
    %p190 = por %p188, %p189
    %p191 = scmp.ne.s32.totalorder %s183, %s185
    %p192 = scmp.eq.s32.totalorder %s23, 1
    %p193 = por %p191, %p192
    %p194 = scmp.ne.s32.totalorder %s185, %s186
    %p195 = scmp.eq.s32.totalorder %s23, 0
    %p196 = por %p194, %p195
    %p197 = scmp.ne.s32.totalorder %s185, %s186
    %p198 = scmp.eq.s32.totalorder %s24, 1
    %p199 = por %p197, %p198
    %p201 = scmp.ne.s32.totalorder %s186, %s200
    %p202 = scmp.eq.s32.totalorder %s24, 0
    %p203 = por %p201, %p202
    %s205 = sadd.s32 %s204, 1
    %p208 = scmp.eq.s32.totalorder %s18, 1
    %p209 = scmp.ne.s32.totalorder %s204, %s206
    %p210 = scmp.eq.s32.totalorder %s18, 0
    %p211 = por %p209, %p210
    %p212 = scmp.ne.s32.totalorder %s204, %s206
    %p213 = scmp.eq.s32.totalorder %s23, 1
    %p214 = por %p212, %p213
    %p215 = scmp.ne.s32.totalorder %s206, %s207
    %p216 = scmp.eq.s32.totalorder %s23, 0
    %p217 = por %p215, %p216
    %p218 = scmp.ne.s32.totalorder %s206, %s207
    %p219 = scmp.eq.s32.totalorder %s24, 1
    %p220 = por %p218, %p219
    %p222 = scmp.ne.s32.totalorder %s207, %s221
    %p223 = scmp.eq.s32.totalorder %s24, 0
    %p224 = por %p222, %p223
    %s226 = sadd.s32 %s225, 1
    %p229 = scmp.eq.s32.totalorder %s18, 1
    %p230 = scmp.ne.s32.totalorder %s225, %s227
    %p231 = scmp.eq.s32.totalorder %s18, 0
    %p232 = por %p230, %p231
    %p233 = scmp.ne.s32.totalorder %s225, %s227
    %p234 = scmp.eq.s32.totalorder %s23, 1
    %p235 = por %p233, %p234
    %p236 = scmp.ne.s32.totalorder %s227, %s228
    %p237 = scmp.eq.s32.totalorder %s23, 0
    %p238 = por %p236, %p237
    %p239 = scmp.ne.s32.totalorder %s227, %s228
    %p240 = scmp.eq.s32.totalorder %s24, 1
    %p241 = por %p239, %p240
    %p243 = scmp.ne.s32.totalorder %s228, %s242
    %p244 = scmp.eq.s32.totalorder %s24, 0
    %p245 = por %p243, %p244
    %s246 = ssub.s32 %s18, %s25
    %p247 = scmp.eq.s32.totalorder %s246, 0
    %s249 = sadd.s32 %s248, 1
    %s250 = scalar_select %p247, %s248, %s249
    %p253 = pneg %p247
    %p254 = scmp.eq.s32.totalorder %s18, 1
    %p255 = por %p253, %p254
    %p256 = scmp.ne.s32.totalorder %s248, %s251
    %p257 = scmp.eq.s32.totalorder %s18, 0
    %p258 = por %p256, %p257
    %p259 = scmp.ne.s32.totalorder %s248, %s251
    %p260 = scmp.eq.s32.totalorder %s23, 1
    %p261 = por %p259, %p260
    %p262 = scmp.ne.s32.totalorder %s251, %s252
    %p263 = scmp.eq.s32.totalorder %s23, 0
    %p264 = por %p262, %p263
    %p265 = scmp.ne.s32.totalorder %s251, %s252
    %p266 = scmp.eq.s32.totalorder %s24, 1
    %p267 = por %p265, %p266
    %p269 = scmp.ne.s32.totalorder %s252, %s268
    %p270 = scmp.eq.s32.totalorder %s24, 0
    %p271 = por %p269, %p270
    %p272 = scmp.le.s32.totalorder 1, %s18
    %p273 = scmp.lt.s32.totalorder %s18, 3
    %p274 = pnand %p272, %p273
    %p275 = pneg %p274
    // Predicated region
    $region9: #{schnet_gcl_forward.7} parent=5 // pred_check
      _
    $region10: #{schnet_gcl_forward.7} parent=5 // pred_check_branch
      %277 = sbr.rel (%p274) target = $region12
    $region11: #{schnet_gcl_forward.7} parent=5 // pred_region
      %s278 = ssub.s32 %s18, 1
      // Predicated region
      $region13: #{schnet_gcl_forward.7} parent=11 // pred_check
        %p279 = pneg %p91
      $region14: #{schnet_gcl_forward.7} parent=11 // pred_check_branch
        %281 = sbr.rel (%p279) target = $region16
      $region15: #{schnet_gcl_forward.7} parent=11 // pred_region
        _
      $region16: #{schnet_gcl_forward.7} parent=11 // pred_fallthru
        _
      // Predicated region
      $region17: #{schnet_gcl_forward.7} parent=11 // pred_check
        %p282 = pneg %p112
      $region18: #{schnet_gcl_forward.7} parent=11 // pred_check_branch
        %284 = sbr.rel (%p282) target = $region20
      $region19: #{schnet_gcl_forward.7} parent=11 // pred_region
        _
      $region20: #{schnet_gcl_forward.7} parent=11 // pred_fallthru
        _
      // Predicated region
      $region21: #{schnet_gcl_forward.7} parent=11 // pred_check
        %p285 = pneg %p133
      $region22: #{schnet_gcl_forward.7} parent=11 // pred_check_branch
        %287 = sbr.rel (%p285) target = $region24
      $region23: #{schnet_gcl_forward.7} parent=11 // pred_region
        _
      $region24: #{schnet_gcl_forward.7} parent=11 // pred_fallthru
        _
      // Predicated region
      $region25: #{schnet_gcl_forward.7} parent=11 // pred_check
        %p288 = pneg %p154
      $region26: #{schnet_gcl_forward.7} parent=11 // pred_check_branch
        %290 = sbr.rel (%p288) target = $region28
      $region27: #{schnet_gcl_forward.7} parent=11 // pred_region
        _
      $region28: #{schnet_gcl_forward.7} parent=11 // pred_fallthru
        _
      // Predicated region
      $region29: #{schnet_gcl_forward.7} parent=11 // pred_check
        %p291 = pneg %p175
      $region30: #{schnet_gcl_forward.7} parent=11 // pred_check_branch
        %293 = sbr.rel (%p291) target = $region32
      $region31: #{schnet_gcl_forward.7} parent=11 // pred_region
        _
      $region32: #{schnet_gcl_forward.7} parent=11 // pred_fallthru
        _
      // Predicated region
      $region33: #{schnet_gcl_forward.7} parent=11 // pred_check
        %p294 = pneg %p196
      $region34: #{schnet_gcl_forward.7} parent=11 // pred_check_branch
        %296 = sbr.rel (%p294) target = $region36
      $region35: #{schnet_gcl_forward.7} parent=11 // pred_region
        _
      $region36: #{schnet_gcl_forward.7} parent=11 // pred_fallthru
        _
      // Predicated region
      $region37: #{schnet_gcl_forward.7} parent=11 // pred_check
        %p297 = pneg %p217
      $region38: #{schnet_gcl_forward.7} parent=11 // pred_check_branch
        %299 = sbr.rel (%p297) target = $region40
      $region39: #{schnet_gcl_forward.7} parent=11 // pred_region
        _
      $region40: #{schnet_gcl_forward.7} parent=11 // pred_fallthru
        _
      // Predicated region
      $region41: #{schnet_gcl_forward.7} parent=11 // pred_check
        %p300 = pneg %p238
      $region42: #{schnet_gcl_forward.7} parent=11 // pred_check_branch
        %302 = sbr.rel (%p300) target = $region44
      $region43: #{schnet_gcl_forward.7} parent=11 // pred_region
        _
      $region44: #{schnet_gcl_forward.7} parent=11 // pred_fallthru
        _
    $region12: #{schnet_gcl_forward.7} parent=5 // pred_fallthru
      _
    %p303 = scmp.lt.s32.totalorder %s18, 2
    // Predicated region
    $region45: #{schnet_gcl_forward.7} parent=5 // pred_check
      %p304 = pneg %p303
    $region46: #{schnet_gcl_forward.7} parent=5 // pred_check_branch
      %306 = sbr.rel (%p304) target = $region48
    $region47: #{schnet_gcl_forward.7} parent=5 // pred_region
      // Predicated region
      $region49: #{schnet_gcl_forward.7} parent=47 // pred_check
        %p307 = pneg %p38
      $region50: #{schnet_gcl_forward.7} parent=47 // pred_check_branch
        %309 = sbr.rel (%p307) target = $region52
      $region51: #{schnet_gcl_forward.7} parent=47 // pred_region
        %s310 = smul.u32 4, %s18
        %p311 = scmp.lt.s32.totalorder %s310, 7
        %s312 = scalar_select %p311, %s310, 7
        %s313 = smul.addr %s312, 4
        %s314 = scalar_lea.vmem %s0, %s313
        %s315 = smul.u32 4, %s18
      $region52: #{schnet_gcl_forward.7} parent=47 // pred_fallthru
        _
      // Predicated region
      $region53: #{schnet_gcl_forward.7} parent=47 // pred_check
        %p316 = pneg %p64
      $region54: #{schnet_gcl_forward.7} parent=47 // pred_check_branch
        %318 = sbr.rel (%p316) target = $region56
      $region55: #{schnet_gcl_forward.7} parent=47 // pred_region
        %s319 = smul.u32 4, %s18
        %p320 = scmp.lt.s32.totalorder %s319, 7
        %s321 = scalar_select %p320, %s319, 7
        %s322 = smul.addr %s321, 8
        %s323 = scalar_lea.vmem %s1, %s322
        %s324 = smul.u32 4, %s18
      $region56: #{schnet_gcl_forward.7} parent=47 // pred_fallthru
        _
    $region48: #{schnet_gcl_forward.7} parent=5 // pred_fallthru
      _
    %p325 = scmp.le.s32.totalorder 1, %s18
    %p326 = scmp.lt.s32.totalorder %s18, 3
    %p327 = pnand %p325, %p326
    %p328 = pneg %p327
    // Predicated region
    $region57: #{schnet_gcl_forward.7} parent=5 // pred_check
      _
    $region58: #{schnet_gcl_forward.7} parent=5 // pred_check_branch
      %330 = sbr.rel (%p327) target = $region60
    $region59: #{schnet_gcl_forward.7} parent=5 // pred_region
      %s331 = ssub.s32 %s18, 1
      %s332 = smul.u32 4, %s23
      %p333 = scmp.lt.s32.totalorder %s332, 7
      %s334 = scalar_select %p333, %s332, 7
      %s335 = smul.addr %s334, 4
      %s336 = scalar_lea.vmem %s0, %s335
      %p337 = pneg %p44
      %p338 = pneg %p41
      %s339 = smul.u32 4, %s23
      %p340 = scmp.lt.s32.totalorder %s339, 7
      %s341 = scalar_select %p340, %s339, 7
      %s342 = smul.addr %s341, 8
      %s343 = scalar_lea.vmem %s1, %s342
      %p344 = pneg %p70
      %p345 = pneg %p67
      %p346 = pneg %p91
      %p347 = pneg %p88
      %p348 = pneg %p112
      %p349 = pneg %p109
      %p350 = pneg %p133
      %p351 = pneg %p130
      %p352 = pneg %p154
      %p353 = pneg %p151
      %p354 = pneg %p175
      %p355 = pneg %p172
      %p356 = pneg %p196
      %p357 = pneg %p193
      %p358 = pneg %p217
      %p359 = pneg %p214
      %p360 = pneg %p238
      %p361 = pneg %p235
      %p362 = pneg %p264
      %p363 = pneg %p261
      %s364 = smul.u32 4, %s23
      %p365 = scmp.lt.s32.totalorder %s364, 7
      %s366 = scalar_select %p365, %s364, 7
      %s367 = smul.addr %s366, 4
      %s368 = scalar_lea.vmem %s10, %s367
      %s369 = smul.u32 4, %s23
      %p370 = scmp.lt.s32.totalorder %s369, 7
      %s371 = scalar_select %p370, %s369, 7
      %s372 = smul.addr %s371, 4
      %s373 = scalar_lea.vmem %s0, %s372
      %s374 = smul.u32 4, %s23
      %s375 = smul.u32 4, %s23
      %p376 = scmp.lt.s32.totalorder %s375, 7
      %s377 = scalar_select %p376, %s375, 7
      %s378 = smul.addr %s377, 8
      %s379 = scalar_lea.vmem %s1, %s378
      %s380 = smul.u32 4, %s23
      %s381 = smul.u32 4, %s23
      %p382 = scmp.lt.s32.totalorder %s381, 7
      %s383 = scalar_select %p382, %s381, 7
      %s384 = smul.addr %s383, 4
      %s385 = scalar_lea.vmem %s10, %s384
      %s386 = smul.u32 4, %s23
      %v389 = vld [vmem:[%s379] sm:$0xff]
      %v390 = vld [vmem:[%s379 + $0x8] sm:$0xff]
      %v391 = vld [vmem:[%s379 + $0x10] sm:$0xff]
      %v392 = vld [vmem:[%s379 + $0x18] sm:$0xff]
      %v393 = vmul.f32 %v389, %v389
      %v394 = vmul.f32 %v390, %v390
      %v395 = vmul.f32 %v391, %v391
      %v396 = vmul.f32 %v392, %v392
      %vm397 = vcmask 23552
      %v398 = vsel %vm397, %v393, 0.0
      %399 = vadd.xlane.f32.xlu0 %v398
      %v400 = vpop.xlane.xlu0 %399
      %v401 = vsel %vm397, %v394, 0.0
      %402 = vadd.xlane.f32.xlu0 %v401
      %v403 = vpop.xlane.xlu0 %402
      %v404 = vsel %vm397, %v395, 0.0
      %405 = vadd.xlane.f32.xlu0 %v404
      %v406 = vpop.xlane.xlu0 %405
      %v407 = vsel %vm397, %v396, 0.0
      %408 = vadd.xlane.f32.xlu0 %v407
      %v409 = vpop.xlane.xlu0 %408
      %v410 = vrsqrt.pop %v400
      %v411 = vmul.f32 %v400, %v410
      %vm412 = vcmp.eq.f32.partialorder %v400, inf
      %v413 = vsel %vm412, %v400, %v411
      %vm414 = vcmp.eq.f32.partialorder %v400, 0.0
      %v415 = vand.u32 %v400, 2147483648
      %v416 = vsel %vm414, %v415, %v413
      %v417 = vrsqrt.pop %v403
      %v418 = vmul.f32 %v403, %v417
      %vm419 = vcmp.eq.f32.partialorder %v403, inf
      %v420 = vsel %vm419, %v403, %v418
      %vm421 = vcmp.eq.f32.partialorder %v403, 0.0
      %v422 = vand.u32 %v403, 2147483648
      %v423 = vsel %vm421, %v422, %v420
      %v424 = vrsqrt.pop %v406
      %v425 = vmul.f32 %v406, %v424
      %vm426 = vcmp.eq.f32.partialorder %v406, inf
      %v427 = vsel %vm426, %v406, %v425
      %vm428 = vcmp.eq.f32.partialorder %v406, 0.0
      %v429 = vand.u32 %v406, 2147483648
      %v430 = vsel %vm428, %v429, %v427
      %v431 = vrsqrt.pop %v409
      %v432 = vmul.f32 %v409, %v431
      %vm433 = vcmp.eq.f32.partialorder %v409, inf
      %v434 = vsel %vm433, %v409, %v432
      %vm435 = vcmp.eq.f32.partialorder %v409, 0.0
      %v436 = vand.u32 %v409, 2147483648
      %v437 = vsel %vm435, %v436, %v434
      %v438 = vld [vmem:[%s2] sm:$0x1]
      %v440 = vlaneseq
      %v441 = vshrl.u32 %v440, 7
      %v442 = vsub.s32 0, %v441
      %v443 = vrot.slane %v438, %v442
      %v445 = vsub.f32 %v416, %v443
      %v446 = vsub.f32 %v423, %v443
      %v447 = vsub.f32 %v430, %v443
      %v448 = vsub.f32 %v437, %v443
      %v449 = vmul.f32 %v445, -12.005
      %v450 = vmul.f32 %v446, -12.005
      %v451 = vmul.f32 %v447, -12.005
      %v452 = vmul.f32 %v448, -12.005
      %v453 = vmul.f32 %v449, %v445
      %v454 = vmul.f32 %v450, %v446
      %v455 = vmul.f32 %v451, %v447
      %v456 = vmul.f32 %v452, %v448
      %v457 = vmul.f32 %v453, 1.442695
      %v458 = vpow.pop %v457
      %v459 = vmul.f32 %v454, 1.442695
      %v460 = vpow.pop %v459
      %v461 = vmul.f32 %v455, 1.442695
      %v462 = vpow.pop %v461
      %v463 = vmul.f32 %v456, 1.442695
      %v464 = vpow.pop %v463
      %v465 = vld [vmem:[%s373] sm:$0xf]
      %v466 = vld [vmem:[%s373 + $0x4] sm:$0xf]
      %v467 = vld [vmem:[%s373 + $0x8] sm:$0xf]
      %v468 = vld [vmem:[%s373 + $0xc] sm:$0xf]
      %v469 = vld [vmem:[%s3] sm:$0xf]
      %v470 = vld [vmem:[%s3 + $0x4] sm:$0xf]
      %v471 = vld [vmem:[%s3 + $0x8] sm:$0xf]
      %v472 = vld [vmem:[%s3 + $0xc] sm:$0xf]
      %v473 = vld [vmem:[%s3 + $0x10] sm:$0xf]
      %v474 = vld [vmem:[%s3 + $0x14] sm:$0xf]
      %v475 = vld [vmem:[%s3 + $0x18] sm:$0xf]
      %v476 = vld [vmem:[%s3 + $0x1c] sm:$0xf]
      %v477 = vld [vmem:[%s3 + $0x20] sm:$0x3]
      %v482 = vunpack.c.l.b16 %v465
      %v483 = vunpack.c.l.b16 %v466
      %v484 = vunpack.c.l.b16 %v467
      %v485 = vunpack.c.l.b16 %v468
      %v486 = vpack.c.b16 %v483, %v482
      %v487 = vpack.c.b16 %v485, %v484
      %v497 = vunpack.c.l.b16 %v469
      %v498 = vunpack.c.l.b16 %v470
      %v499 = vunpack.c.l.b16 %v471
      %v500 = vunpack.c.l.b16 %v472
      %v501 = vunpack.c.l.b16 %v473
      %v502 = vunpack.c.l.b16 %v474
      %v503 = vunpack.c.l.b16 %v475
      %v504 = vunpack.c.l.b16 %v476
      %v505 = vunpack.c.l.b16 %v477
      %v506 = vpack.c.b16 %v498, %v497
      %v507 = vpack.c.b16 %v500, %v499
      %v508 = vpack.c.b16 %v502, %v501
      %v509 = vpack.c.b16 %v504, %v503
      %v510 = vpack.c.b16 %v505, %v505
      %vm515 = vcmask 556032
      %v517 = vsel %vm515, %v486, 0
      %v520 = vsel %vm515, %v487, 0
      %vm522 = vcmask 1041408
      %v524 = vsel %vm522, %v510, 0
      %526 = vmatprep.subr.bf16.mxu0 0
      %527 = vmatpush1.bf16.msra.mxu0 0
      %528 = vmatprep.subr.bf16.mxu0 0
      %529 = vmatpush1.bf16.msra.mxu0 0
      %530 = vmatprep.subr.bf16.mxu0 0
      %531 = vmatpush1.bf16.msra.mxu0 0
      %532 = vmatprep.subr.bf16.mxu0 0
      %533 = vmatpush1.bf16.msra.mxu0 %v524
      %534 = vmatprep.subr.bf16.mxu0 0
      %535 = vmatpush1.bf16.msra.mxu0 %v509
      %536 = vmatprep.subr.bf16.mxu0 0
      %537 = vmatpush1.bf16.msra.mxu0 %v508
      %538 = vmatprep.subr.bf16.mxu0 0
      %539 = vmatpush1.bf16.msra.mxu0 %v507
      %540 = vmatprep.subr.bf16.mxu0 0
      %541 = vmatpush1.bf16.msra.mxu0 %v506
      %542 = vmatprep.subr.bf16.mxu0 0
      %543 = vmatpush2.bf16.msra.mxu0 0
      %544 = vmatprep.subr.bf16.mxu0 0
      %545 = vmatpush2.bf16.msra.mxu0 0
      %546 = vmatprep.subr.bf16.mxu0 0
      %547 = vmatpush2.bf16.msra.mxu0 0
      %548 = vmatprep.subr.bf16.mxu0 0
      %549 = vmatpush2.bf16.msra.mxu0 0
      %550 = vmatprep.subr.bf16.mxu0 0
      %551 = vmatpush2.bf16.msra.mxu0 0
      %552 = vmatprep.subr.bf16.mxu0 0
      %553 = vmatpush2.bf16.msra.mxu0 0
      %554 = vmatprep.subr.bf16.mxu0 0
      %555 = vmatpush2.bf16.msra.mxu0 0
      %556 = vmatprep.subr.bf16.mxu0 0
      %557 = vmatpush2.bf16.msra.mxu0 0
      %558 = vmatprep.mubr.bf16.mxu0 0
      %559 = vmatmul.mubr.bf16.gmra.mxu0 %v517
      %v560 = vpop.f32.mrf.mxu0
      %v561 = vadd.f32 0.0, %v560
      %v562 = vpop.f32.mrf.mxu0
      %v563 = vpop.f32.mrf.mxu0
      %v564 = vadd.f32 0.0, %v563
      %v565 = vpop.f32.mrf.mxu0
      %566 = vmatprep.mubr.bf16.mxu0 0
      %567 = vmatmul.mubr.bf16.gmra.mxu0 %v520
      %v568 = vpop.f32.mrf.mxu0
      %v569 = vadd.f32 0.0, %v568
      %v570 = vpop.f32.mrf.mxu0
      %v571 = vpop.f32.mrf.mxu0
      %v572 = vadd.f32 0.0, %v571
      %v573 = vpop.f32.mrf.mxu0
      %574 = vdwg.mxu0
      %v575 = vld [vmem:[%s4] sm:$0x1]
      %v577 = vlaneseq
      %v578 = vshrl.u32 %v577, 7
      %v579 = vsub.s32 0, %v578
      %v580 = vrot.slane %v575, %v579
      %v582 = vmul.f32 %v400, %v580
      %v583 = vmul.f32 %v403, %v580
      %v584 = vmul.f32 %v406, %v580
      %v585 = vmul.f32 %v409, %v580
      %v586 = vadd.f32 %v561, %v582
      %v587 = vadd.f32 %v564, %v583
      %v588 = vadd.f32 %v569, %v584
      %v589 = vadd.f32 %v572, %v585
      %v590 = vld [vmem:[%s5] sm:$0x1]
      %v592 = vlaneseq
      %v593 = vshrl.u32 %v592, 7
      %v594 = vsub.s32 0, %v593
      %v595 = vrot.slane %v590, %v594
      %v597 = vadd.f32 %v586, %v595
      %v598 = vadd.f32 %v587, %v595
      %v599 = vadd.f32 %v588, %v595
      %v600 = vadd.f32 %v589, %v595
      %v601 = vxor.u32 %v597, 2147483648
      %v602 = vxor.u32 %v598, 2147483648
      %v603 = vxor.u32 %v599, 2147483648
      %v604 = vxor.u32 %v600, 2147483648
      %v605 = vmul.f32 %v601, 1.442695
      %v606 = vpow.pop %v605
      %v607 = vmul.f32 %v602, 1.442695
      %v608 = vpow.pop %v607
      %v609 = vmul.f32 %v603, 1.442695
      %v610 = vpow.pop %v609
      %v611 = vmul.f32 %v604, 1.442695
      %v612 = vpow.pop %v611
      %v613 = vadd.f32 %v606, 1.0
      %v614 = vadd.f32 %v608, 1.0
      %v615 = vadd.f32 %v610, 1.0
      %v616 = vadd.f32 %v612, 1.0
      %v617 = vrcp.pop %v613
      %v618 = vmul.f32 1.0, %v617
      %v619 = vrcp.pop %v614
      %v620 = vmul.f32 1.0, %v619
      %v621 = vrcp.pop %v615
      %v622 = vmul.f32 1.0, %v621
      %v623 = vrcp.pop %v616
      %v624 = vmul.f32 1.0, %v623
      %v625 = vmul.f32 %v597, %v618
      %v626 = vmul.f32 %v598, %v620
      %v627 = vmul.f32 %v599, %v622
      %v628 = vmul.f32 %v600, %v624
      %v629 = vpack.c.bf16 %v626, %v625
      %v630 = vpack.c.bf16 %v628, %v627
      %v631 = vld [vmem:[%s6] sm:$0xf]
      %v632 = vld [vmem:[%s6 + $0x4] sm:$0xf]
      %v633 = vld [vmem:[%s6 + $0x8] sm:$0xf]
      %v634 = vld [vmem:[%s6 + $0xc] sm:$0xf]
      %v635 = vld [vmem:[%s7] sm:$0x1]
      %v637 = vlaneseq
      %v638 = vshrl.u32 %v637, 7
      %v639 = vsub.s32 0, %v638
      %v640 = vrot.slane %v635, %v639
      %v646 = vunpack.c.l.b16 %v631
      %v647 = vunpack.c.l.b16 %v632
      %v648 = vunpack.c.l.b16 %v633
      %v649 = vunpack.c.l.b16 %v634
      %v650 = vpack.c.b16 %v647, %v646
      %v651 = vpack.c.b16 %v649, %v648
      %vm654 = vcmask 261120
      %v656 = vsel %vm654, %v629, 0
      %v659 = vsel %vm654, %v630, 0
      %661 = vmatprep.subr.bf16.mxu0 0
      %662 = vmatpush1.bf16.msra.mxu0 0
      %663 = vmatprep.subr.bf16.mxu0 0
      %664 = vmatpush1.bf16.msra.mxu0 0
      %665 = vmatprep.subr.bf16.mxu0 0
      %666 = vmatpush1.bf16.msra.mxu0 0
      %667 = vmatprep.subr.bf16.mxu0 0
      %668 = vmatpush1.bf16.msra.mxu0 0
      %669 = vmatprep.subr.bf16.mxu0 0
      %670 = vmatpush1.bf16.msra.mxu0 0
      %671 = vmatprep.subr.bf16.mxu0 0
      %672 = vmatpush1.bf16.msra.mxu0 0
      %673 = vmatprep.subr.bf16.mxu0 0
      %674 = vmatpush1.bf16.msra.mxu0 %v651
      %675 = vmatprep.subr.bf16.mxu0 0
      %676 = vmatpush1.bf16.msra.mxu0 %v650
      %677 = vmatprep.subr.bf16.mxu0 0
      %678 = vmatpush2.bf16.msra.mxu0 0
      %679 = vmatprep.subr.bf16.mxu0 0
      %680 = vmatpush2.bf16.msra.mxu0 0
      %681 = vmatprep.subr.bf16.mxu0 0
      %682 = vmatpush2.bf16.msra.mxu0 0
      %683 = vmatprep.subr.bf16.mxu0 0
      %684 = vmatpush2.bf16.msra.mxu0 0
      %685 = vmatprep.subr.bf16.mxu0 0
      %686 = vmatpush2.bf16.msra.mxu0 0
      %687 = vmatprep.subr.bf16.mxu0 0
      %688 = vmatpush2.bf16.msra.mxu0 0
      %689 = vmatprep.subr.bf16.mxu0 0
      %690 = vmatpush2.bf16.msra.mxu0 0
      %691 = vmatprep.subr.bf16.mxu0 0
      %692 = vmatpush2.bf16.msra.mxu0 0
      %693 = vmatprep.mubr.bf16.mxu0 0
      %694 = vmatmul.mubr.bf16.gmra.mxu0 %v656
      %v695 = vpop.f32.mrf.mxu0
      %v696 = vadd.f32 %v640, %v695
      %v697 = vpop.f32.mrf.mxu0
      %v698 = vpop.f32.mrf.mxu0
      %v699 = vadd.f32 %v640, %v698
      %v700 = vpop.f32.mrf.mxu0
      %701 = vmatprep.mubr.bf16.mxu0 0
      %702 = vmatmul.mubr.bf16.gmra.mxu0 %v659
      %v703 = vpop.f32.mrf.mxu0
      %v704 = vadd.f32 %v640, %v703
      %v705 = vpop.f32.mrf.mxu0
      %v706 = vpop.f32.mrf.mxu0
      %v707 = vadd.f32 %v640, %v706
      %v708 = vpop.f32.mrf.mxu0
      %709 = vdwg.mxu0
      %v710 = vxor.u32 %v696, 2147483648
      %v711 = vxor.u32 %v699, 2147483648
      %v712 = vxor.u32 %v704, 2147483648
      %v713 = vxor.u32 %v707, 2147483648
      %v714 = vmul.f32 %v710, 1.442695
      %v715 = vpow.pop %v714
      %v716 = vmul.f32 %v711, 1.442695
      %v717 = vpow.pop %v716
      %v718 = vmul.f32 %v712, 1.442695
      %v719 = vpow.pop %v718
      %v720 = vmul.f32 %v713, 1.442695
      %v721 = vpow.pop %v720
      %v722 = vadd.f32 %v715, 1.0
      %v723 = vadd.f32 %v717, 1.0
      %v724 = vadd.f32 %v719, 1.0
      %v725 = vadd.f32 %v721, 1.0
      %v726 = vrcp.pop %v722
      %v727 = vmul.f32 1.0, %v726
      %v728 = vrcp.pop %v723
      %v729 = vmul.f32 1.0, %v728
      %v730 = vrcp.pop %v724
      %v731 = vmul.f32 1.0, %v730
      %v732 = vrcp.pop %v725
      %v733 = vmul.f32 1.0, %v732
      %v734 = vmul.f32 %v696, %v727
      %v735 = vmul.f32 %v699, %v729
      %v736 = vmul.f32 %v704, %v731
      %v737 = vmul.f32 %v707, %v733
      %v738 = vld [vmem:[%s8] sm:$0x1]
      %v740 = vlaneseq
      %v741 = vshrl.u32 %v740, 7
      %v742 = vsub.s32 0, %v741
      %v743 = vrot.slane %v738, %v742
      %v745 = vmul.f32 %v458, %v743
      %v746 = vmul.f32 %v460, %v743
      %v747 = vmul.f32 %v462, %v743
      %v748 = vmul.f32 %v464, %v743
      %vm749 = vcmask 408576
      %v750 = vsel %vm749, %v745, 0.0
      %751 = vadd.xlane.f32.xlu0 %v750
      %v752 = vpop.xlane.xlu0 %751
      %v753 = vsel %vm749, %v746, 0.0
      %754 = vadd.xlane.f32.xlu0 %v753
      %v755 = vpop.xlane.xlu0 %754
      %v756 = vsel %vm749, %v747, 0.0
      %757 = vadd.xlane.f32.xlu0 %v756
      %v758 = vpop.xlane.xlu0 %757
      %v759 = vsel %vm749, %v748, 0.0
      %760 = vadd.xlane.f32.xlu0 %v759
      %v761 = vpop.xlane.xlu0 %760
      %v762 = vadd.f32 %v561, %v752
      %v763 = vadd.f32 %v564, %v755
      %v764 = vadd.f32 %v569, %v758
      %v765 = vadd.f32 %v572, %v761
      %v766 = vld [vmem:[#allocation2] sm:$0x1]
      %v768 = vlaneseq
      %v769 = vshrl.u32 %v768, 7
      %v770 = vsub.s32 0, %v769
      %v771 = vrot.slane %v766, %v770
      %772 = vrot.lane.b32.xlu0 %v771, 32
      %v773 = vpop.permute.xlu0 %772
      %v775 = vadd.f32 %v762, %v773
      %v776 = vadd.f32 %v763, %v773
      %v777 = vadd.f32 %v764, %v773
      %v778 = vadd.f32 %v765, %v773
      %v779 = vpack.c.bf16 %v735, %v734
      %v780 = vpack.c.bf16 %v737, %v736
      %v783 = vunpack.c.l.b16 %v779
      %v784 = vunpack.c.h.b16 %v779
      %v785 = vunpack.c.l.b16 %v780
      %v786 = vunpack.c.h.b16 %v780
      %v787 = vpack.c.b16 %v783, %v783
      %v788 = vpack.c.b16 %v784, %v784
      %v789 = vpack.c.b16 %v785, %v785
      %v790 = vpack.c.b16 %v786, %v786
      %vm795 = vcmask 257024
      %796 = vst.msk [vmem:[%s385] sm:$0xf] %vm795, %v787
      %797 = vst.msk [vmem:[%s385 + $0x4] sm:$0xf] %vm795, %v788
      %798 = vst.msk [vmem:[%s385 + $0x8] sm:$0xf] %vm795, %v789
      %799 = vst.msk [vmem:[%s385 + $0xc] sm:$0xf] %vm795, %v790
      %801 = vset.pattern.permute.xlu0 32
      %802 = vperm.xlu0 %801, %v775
      %v803 = vpop.permute.xlu0 %802
      %806 = vset.pattern.permute.xlu0 32
      %807 = vperm.xlu0 %806, %v776
      %v808 = vpop.permute.xlu0 %807
      %811 = vset.pattern.permute.xlu0 32
      %812 = vperm.xlu0 %811, %v777
      %v813 = vpop.permute.xlu0 %812
      %816 = vset.pattern.permute.xlu0 32
      %817 = vperm.xlu0 %816, %v778
      %v818 = vpop.permute.xlu0 %817
      %v820 = vmul.f32 %v389, %v803
      %v821 = vmul.f32 %v390, %v808
      %v822 = vmul.f32 %v391, %v813
      %v823 = vmul.f32 %v392, %v818
      %v824 = vpack.c.bf16 %v821, %v820
      %v825 = vpack.c.bf16 %v823, %v822
      %v828 = vunpack.c.l.b16 %v824
      %v829 = vunpack.c.h.b16 %v824
      %v830 = vunpack.c.l.b16 %v825
      %v831 = vunpack.c.h.b16 %v825
      %v832 = vpack.c.b16 %v828, %v828
      %v833 = vpack.c.b16 %v829, %v829
      %v834 = vpack.c.b16 %v830, %v830
      %v835 = vpack.c.b16 %v831, %v831
      %836 = vrot.lane.b32.xlu0 %v832, 32
      %v837 = vpop.permute.xlu0 %836
      %838 = vrot.lane.b32.xlu0 %v833, 32
      %v839 = vpop.permute.xlu0 %838
      %840 = vrot.lane.b32.xlu0 %v834, 32
      %v841 = vpop.permute.xlu0 %840
      %842 = vrot.lane.b32.xlu0 %v835, 32
      %v843 = vpop.permute.xlu0 %842
      %vm848 = vcmask 281856
      %849 = vst.msk [vmem:[%s385] sm:$0xf] %vm848, %v837
      %850 = vst.msk [vmem:[%s385 + $0x4] sm:$0xf] %vm848, %v839
      %851 = vst.msk [vmem:[%s385 + $0x8] sm:$0xf] %vm848, %v841
      %852 = vst.msk [vmem:[%s385 + $0xc] sm:$0xf] %vm848, %v843
      %vm853 = vcmask 1035544
      %854 = vst.msk [vmem:[%s385] sm:$0xf] %vm853, 0
      %855 = vst.msk [vmem:[%s385 + $0x4] sm:$0xf] %vm853, 0
      %856 = vst.msk [vmem:[%s385 + $0x8] sm:$0xf] %vm853, 0
      %857 = vst.msk [vmem:[%s385 + $0xc] sm:$0xf] %vm853, 0
      %vm858 = vcmask 1044472
      %859 = vst.msk [vmem:[%s385] sm:$0xf] %vm858, 1065369472
      %860 = vst.msk [vmem:[%s385 + $0x4] sm:$0xf] %vm858, 1065369472
      %861 = vst.msk [vmem:[%s385 + $0x8] sm:$0xf] %vm858, 1065369472
      %862 = vst.msk [vmem:[%s385 + $0xc] sm:$0xf] %vm858, 1065369472
      %s863 = smul.u32 4, %s23
      %p864 = scmp.lt.s32.totalorder %s863, 7
      %s865 = scalar_select %p864, %s863, 7
      %s866 = smul.addr %s865, 4
      %s867 = scalar_lea.vmem %s10, %s866
      // Predicated region
      $region61: #{schnet_gcl_forward.7} parent=59 // pred_check
        %p868 = pneg %p261
      $region62: #{schnet_gcl_forward.7} parent=59 // pred_check_branch
        %870 = sbr.rel (%p868) target = $region64
      $region63: #{schnet_gcl_forward.7} parent=59 // pred_region
        %s871 = smul.u32 4, %s23
      $region64: #{schnet_gcl_forward.7} parent=59 // pred_fallthru
        _
    $region60: #{schnet_gcl_forward.7} parent=5 // pred_fallthru
      _
    %p872 = scmp.le.s32.totalorder 2, %s18
    // Predicated region
    $region65: #{schnet_gcl_forward.7} parent=5 // pred_check
      %p873 = pneg %p872
    $region66: #{schnet_gcl_forward.7} parent=5 // pred_check_branch
      %875 = sbr.rel (%p873) target = $region68
    $region67: #{schnet_gcl_forward.7} parent=5 // pred_region
      %s876 = ssub.s32 %s18, 2
      // Predicated region
      $region69: #{schnet_gcl_forward.7} parent=67 // pred_check
        %p877 = pneg %p267
      $region70: #{schnet_gcl_forward.7} parent=67 // pred_check_branch
        %879 = sbr.rel (%p877) target = $region72
      $region71: #{schnet_gcl_forward.7} parent=67 // pred_region
        %s880 = smul.u32 4, %s24
        %p881 = scmp.lt.s32.totalorder %s880, 7
        %s882 = scalar_select %p881, %s880, 7
        %s883 = smul.addr %s882, 4
        %s884 = scalar_lea.vmem %s10, %s883
      $region72: #{schnet_gcl_forward.7} parent=67 // pred_fallthru
        _
    $region68: #{schnet_gcl_forward.7} parent=5 // pred_fallthru
      _
  $region6: #{schnet_gcl_forward.7} parent=0 // loop_footer
    %s22 = sadd.s32 1, %s18
  $region7: #{schnet_gcl_forward.7} parent=0 // loop_footer_branch
    %17 = sbr.rel target = $region3
  $region8: #{schnet_gcl_forward.7} parent=0 // loop_exit
    _

// kernel: schnet_gcl_forward.11
$region0: #{schnet_gcl_forward.11}
  #allocation0 [shape = 'u32[]', space=smem, size = 0x4, offset = 0x4, fixed_abs, tag = 'smem constant byte address 0x4 - core index']
  #allocation1 [shape = 'u32[144,128]{1,0:T(1,128)}', space=vmem, size = 0x12000, scoped, tag = 'internal scratch']
  #allocation2 [shape = 'f32[8,141]{1,0:T(8,128)}', space=vmem, size = 0x2000, scoped, tag = 'scratch operand']
  %s0 = inlined_call_operand.vmem [shape: s32[1,16], index: 0, kind: input, shape index: {}]
  %s1 = inlined_call_operand.vmem [shape: bf16[16,141], index: 1, kind: input, shape index: {}]
  %s2 = inlined_call_operand.vmem [shape: f32[8,141], index: 2, kind: output, shape index: {}]
  %s3 = sld [smem:[#allocation0]]
  $region26: #{schnet_gcl_forward.11} parent=0
    _
  %s5 = ssub.s32 1, %s3
  %s6 = scalar_select 0, %s5, %s3
  // Predicated region
  $region2: #{schnet_gcl_forward.11} parent=0 // pred_check
    _
  $region3: #{schnet_gcl_forward.11} parent=0 // pred_check_branch
    %8 = sbr.rel (0) target = $region5
  $region4: #{schnet_gcl_forward.11} parent=0 // pred_region
    _
  $region5: #{schnet_gcl_forward.11} parent=0 // pred_fallthru
    _
  // Predicated region
  $region6: #{schnet_gcl_forward.11} parent=0 // pred_check
    _
  $region7: #{schnet_gcl_forward.11} parent=0 // pred_check_branch
    %10 = sbr.rel (0) target = $region9
  $region8: #{schnet_gcl_forward.11} parent=0 // pred_region
    _
  $region9: #{schnet_gcl_forward.11} parent=0 // pred_fallthru
    _
  %p12 = scmp.eq.s32.totalorder 0, 0
  // Predicated region
  $region10: #{schnet_gcl_forward.11} parent=0 // pred_check
    %p13 = pneg %p12
  $region11: #{schnet_gcl_forward.11} parent=0 // pred_check_branch
    %15 = sbr.rel (%p13) target = $region13
  $region12: #{schnet_gcl_forward.11} parent=0 // pred_region
    %16 = vst [vmem:[#allocation2] sm:$0xff] 0.0
    %vm17 = vcmask 105472
    %18 = vst.msk [vmem:[#allocation2 + $0x8] sm:$0xff] %vm17, 0.0
  $region13: #{schnet_gcl_forward.11} parent=0 // pred_fallthru
    _
  %v19 = vld [vmem:[%s1] sm:$0xff]
  %v20 = vld [vmem:[%s1 + $0x8] sm:$0xff]
  %v21 = vld [vmem:[%s0] sm:$0x1]
  %s22 = smul.u32 0, 8
  %v23 = vlaneseq
  %v24 = vshrl.u32 %v23, 7
  %v25 = vstv %s22
  %v26 = vadd.s32 %v25, %v24
  %v27 = vlaneseq
  %v28 = vshrl.u32 %v27, 7
  %v29 = vsub.s32 0, %v28
  %v30 = vrot.slane %v21, %v29
  %vm31 = vcmp.eq.s32.totalorder %v26, %v30
  %v32 = vsel %vm31, 1, 0
  %v33 = vcvt.s32.f32 %v32
  %v34 = vpack.c.bf16 %v33, %v33
  %v35 = vld [vmem:[#allocation2] sm:$0xff]
  %v36 = vld [vmem:[#allocation2 + $0x8] sm:$0xff]
  %v39 = vunpack.c.l.b16 %v19
  %v40 = vunpack.c.h.b16 %v19
  %v41 = vunpack.c.l.b16 %v20
  %v42 = vunpack.c.h.b16 %v20
  %v43 = vpack.c.b16 %v41, %v39
  %v44 = vpack.c.b16 %v42, %v40
  %vm47 = vcmask 130048
  %v49 = vsel %vm47, %v34, 0
  %51 = vmatprep.subr.bf16.mxu0 0
  %52 = vmatpush1.bf16.msra.mxu0 0
  %53 = vmatprep.subr.bf16.mxu0 0
  %54 = vmatpush1.bf16.msra.mxu0 0
  %55 = vmatprep.subr.bf16.mxu0 0
  %56 = vmatpush1.bf16.msra.mxu0 0
  %57 = vmatprep.subr.bf16.mxu0 0
  %58 = vmatpush1.bf16.msra.mxu0 0
  %59 = vmatprep.subr.bf16.mxu0 0
  %60 = vmatpush1.bf16.msra.mxu0 0
  %61 = vmatprep.subr.bf16.mxu0 0
  %62 = vmatpush1.bf16.msra.mxu0 0
  %63 = vmatprep.subr.bf16.mxu0 0
  %64 = vmatpush1.bf16.msra.mxu0 0
  %65 = vmatprep.subr.bf16.mxu0 %v44
  %66 = vmatpush1.bf16.msra.mxu0 %v43
  %67 = vmatprep.subr.bf16.mxu0 0
  %68 = vmatpush2.bf16.msra.mxu0 0
  %69 = vmatprep.subr.bf16.mxu0 0
  %70 = vmatpush2.bf16.msra.mxu0 0
  %71 = vmatprep.subr.bf16.mxu0 0
  %72 = vmatpush2.bf16.msra.mxu0 0
  %73 = vmatprep.subr.bf16.mxu0 0
  %74 = vmatpush2.bf16.msra.mxu0 0
  %75 = vmatprep.subr.bf16.mxu0 0
  %76 = vmatpush2.bf16.msra.mxu0 0
  %77 = vmatprep.subr.bf16.mxu0 0
  %78 = vmatpush2.bf16.msra.mxu0 0
  %79 = vmatprep.subr.bf16.mxu0 0
  %80 = vmatpush2.bf16.msra.mxu0 0
  %81 = vmatprep.subr.bf16.mxu0 0
  %82 = vmatpush2.bf16.msra.mxu0 0
  %83 = vmatprep.mubr.bf16.mxu0 0
  %84 = vmatmul.mubr.bf16.gmra.mxu0 %v49
  %v85 = vpop.f32.mrf.mxu0
  %v86 = vadd.f32 0.0, %v85
  %v87 = vpop.f32.mrf.mxu0
  %v88 = vadd.f32 0.0, %v87
  %v89 = vpop.f32.mrf.mxu0
  %v90 = vpop.f32.mrf.mxu0
  %91 = vdwg.mxu0
  %v92 = vadd.f32 %v35, %v86
  %v93 = vadd.f32 %v36, %v88
  %94 = vst [vmem:[#allocation2] sm:$0xff] %v92
  %vm95 = vcmask 105472
  %96 = vst.msk [vmem:[#allocation2 + $0x8] sm:$0xff] %vm95, %v93
  // Predicated region
  $region14: #{schnet_gcl_forward.11} parent=0 // pred_check
    %p97 = pneg %p12
  $region15: #{schnet_gcl_forward.11} parent=0 // pred_check_branch
    %99 = sbr.rel (%p97) target = $region17
  $region16: #{schnet_gcl_forward.11} parent=0 // pred_region
    %v100 = vld [vmem:[#allocation2] sm:$0xff]
    %v101 = vld [vmem:[#allocation2 + $0x8] sm:$0xff]
    %v102 = vmax.f32 %v101, 1.0
    %104 = vset.pattern.permute.xlu0 12
    %105 = vperm.xlu0 %104, %v102
    %v106 = vpop.permute.xlu0 %105
    %v108 = vrcp.pop %v106
    %v109 = vmul.f32 %v100, %v108
    %v110 = vmul.f32 %v101, %v108
    %111 = vst [vmem:[%s2] sm:$0xff] %v109
    %112 = vst.msk [vmem:[%s2 + $0x8] sm:$0xff] %vm95, %v110
  $region17: #{schnet_gcl_forward.11} parent=0 // pred_fallthru
    _
  // Predicated region
  $region18: #{schnet_gcl_forward.11} parent=0 // pred_check
    _
  $region19: #{schnet_gcl_forward.11} parent=0 // pred_check_branch
    %114 = sbr.rel (0) target = $region21
  $region20: #{schnet_gcl_forward.11} parent=0 // pred_region
    _
  $region21: #{schnet_gcl_forward.11} parent=0 // pred_fallthru
    _
  // Predicated region
  $region22: #{schnet_gcl_forward.11} parent=0 // pred_check
    _
  $region23: #{schnet_gcl_forward.11} parent=0 // pred_check_branch
    %116 = sbr.rel (0) target = $region25
  $region24: #{schnet_gcl_forward.11} parent=0 // pred_region
    _
  $region25: #{schnet_gcl_forward.11} parent=0 // pred_fallthru
    _

// kernel: schnet_gcl_forward.13
$region0: #{schnet_gcl_forward.13}
  #allocation0 [shape = 'u32[]', space=smem, size = 0x4, offset = 0x4, fixed_abs, tag = 'smem constant byte address 0x4 - core index']
  #allocation1 [shape = 'u32[144,128]{1,0:T(1,128)}', space=vmem, size = 0x12000, scoped, tag = 'internal scratch']
  %s0 = inlined_call_operand.vmem [shape: bf16[16,64], index: 0, kind: input, shape index: {}]
  %s1 = inlined_call_operand.vmem [shape: bf16[64,32], index: 1, kind: input, shape index: {}]
  %s2 = inlined_call_operand.vmem [shape: f32[1,32], index: 2, kind: input, shape index: {}]
  %s3 = inlined_call_operand.vmem [shape: bf16[32,128], index: 3, kind: input, shape index: {}]
  %s4 = inlined_call_operand.vmem [shape: f32[1,128], index: 4, kind: input, shape index: {}]
  %s5 = inlined_call_operand.vmem [shape: f32[16,128], index: 5, kind: output, shape index: {}]
  %s6 = sld [smem:[#allocation0]]
  $region30: #{schnet_gcl_forward.13} parent=0
    _
  %s8 = ssub.s32 1, %s6
  %s9 = scalar_select 0, %s8, %s6
  // Predicated region
  $region2: #{schnet_gcl_forward.13} parent=0 // pred_check
    _
  $region3: #{schnet_gcl_forward.13} parent=0 // pred_check_branch
    %11 = sbr.rel (0) target = $region5
  $region4: #{schnet_gcl_forward.13} parent=0 // pred_region
    _
  $region5: #{schnet_gcl_forward.13} parent=0 // pred_fallthru
    _
  // Predicated region
  $region6: #{schnet_gcl_forward.13} parent=0 // pred_check
    _
  $region7: #{schnet_gcl_forward.13} parent=0 // pred_check_branch
    %13 = sbr.rel (0) target = $region9
  $region8: #{schnet_gcl_forward.13} parent=0 // pred_region
    _
  $region9: #{schnet_gcl_forward.13} parent=0 // pred_fallthru
    _
  // Predicated region
  $region10: #{schnet_gcl_forward.13} parent=0 // pred_check
    _
  $region11: #{schnet_gcl_forward.13} parent=0 // pred_check_branch
    %15 = sbr.rel (0) target = $region13
  $region12: #{schnet_gcl_forward.13} parent=0 // pred_region
    _
  $region13: #{schnet_gcl_forward.13} parent=0 // pred_fallthru
    _
  // Predicated region
  $region14: #{schnet_gcl_forward.13} parent=0 // pred_check
    _
  $region15: #{schnet_gcl_forward.13} parent=0 // pred_check_branch
    %17 = sbr.rel (0) target = $region17
  $region16: #{schnet_gcl_forward.13} parent=0 // pred_region
    _
  $region17: #{schnet_gcl_forward.13} parent=0 // pred_fallthru
    _
  // Predicated region
  $region18: #{schnet_gcl_forward.13} parent=0 // pred_check
    _
  $region19: #{schnet_gcl_forward.13} parent=0 // pred_check_branch
    %19 = sbr.rel (0) target = $region21
  $region20: #{schnet_gcl_forward.13} parent=0 // pred_region
    _
  $region21: #{schnet_gcl_forward.13} parent=0 // pred_fallthru
    _
  %v21 = vld [vmem:[%s0] sm:$0xf]
  %v22 = vld [vmem:[%s0 + $0x4] sm:$0xf]
  %v23 = vld [vmem:[%s1] sm:$0xf]
  %v24 = vld [vmem:[%s1 + $0x4] sm:$0xf]
  %v25 = vld [vmem:[%s1 + $0x8] sm:$0xf]
  %v26 = vld [vmem:[%s1 + $0xc] sm:$0xf]
  %v27 = vld [vmem:[%s1 + $0x10] sm:$0xf]
  %v28 = vld [vmem:[%s1 + $0x14] sm:$0xf]
  %v29 = vld [vmem:[%s1 + $0x18] sm:$0xf]
  %v30 = vld [vmem:[%s1 + $0x1c] sm:$0xf]
  %v31 = vld [vmem:[%s2] sm:$0x1]
  %v33 = vlaneseq
  %v34 = vshrl.u32 %v33, 7
  %v35 = vsub.s32 0, %v34
  %v36 = vrot.slane %v31, %v35
  %v40 = vunpack.c.l.b16 %v21
  %v41 = vunpack.c.l.b16 %v22
  %v42 = vpack.c.b16 %v41, %v40
  %v51 = vunpack.c.l.b16 %v23
  %v52 = vunpack.c.l.b16 %v24
  %v53 = vunpack.c.l.b16 %v25
  %v54 = vunpack.c.l.b16 %v26
  %v55 = vunpack.c.l.b16 %v27
  %v56 = vunpack.c.l.b16 %v28
  %v57 = vunpack.c.l.b16 %v29
  %v58 = vunpack.c.l.b16 %v30
  %v59 = vpack.c.b16 %v52, %v51
  %v60 = vpack.c.b16 %v54, %v53
  %v61 = vpack.c.b16 %v56, %v55
  %v62 = vpack.c.b16 %v58, %v57
  %vm67 = vcmask 523264
  %v69 = vsel %vm67, %v42, 0
  %71 = vmatprep.subr.bf16.mxu0 0
  %72 = vmatpush1.bf16.msra.mxu0 0
  %73 = vmatprep.subr.bf16.mxu0 0
  %74 = vmatpush1.bf16.msra.mxu0 0
  %75 = vmatprep.subr.bf16.mxu0 0
  %76 = vmatpush1.bf16.msra.mxu0 0
  %77 = vmatprep.subr.bf16.mxu0 0
  %78 = vmatpush1.bf16.msra.mxu0 0
  %79 = vmatprep.subr.bf16.mxu0 0
  %80 = vmatpush1.bf16.msra.mxu0 %v62
  %81 = vmatprep.subr.bf16.mxu0 0
  %82 = vmatpush1.bf16.msra.mxu0 %v61
  %83 = vmatprep.subr.bf16.mxu0 0
  %84 = vmatpush1.bf16.msra.mxu0 %v60
  %85 = vmatprep.subr.bf16.mxu0 0
  %86 = vmatpush1.bf16.msra.mxu0 %v59
  %87 = vmatprep.subr.bf16.mxu0 0
  %88 = vmatpush2.bf16.msra.mxu0 0
  %89 = vmatprep.subr.bf16.mxu0 0
  %90 = vmatpush2.bf16.msra.mxu0 0
  %91 = vmatprep.subr.bf16.mxu0 0
  %92 = vmatpush2.bf16.msra.mxu0 0
  %93 = vmatprep.subr.bf16.mxu0 0
  %94 = vmatpush2.bf16.msra.mxu0 0
  %95 = vmatprep.subr.bf16.mxu0 0
  %96 = vmatpush2.bf16.msra.mxu0 0
  %97 = vmatprep.subr.bf16.mxu0 0
  %98 = vmatpush2.bf16.msra.mxu0 0
  %99 = vmatprep.subr.bf16.mxu0 0
  %100 = vmatpush2.bf16.msra.mxu0 0
  %101 = vmatprep.subr.bf16.mxu0 0
  %102 = vmatpush2.bf16.msra.mxu0 0
  %103 = vmatprep.mubr.bf16.mxu0 0
  %104 = vmatmul.mubr.bf16.gmra.mxu0 %v69
  %v105 = vpop.f32.mrf.mxu0
  %v106 = vadd.f32 %v36, %v105
  %v107 = vpop.f32.mrf.mxu0
  %v108 = vpop.f32.mrf.mxu0
  %v109 = vadd.f32 %v36, %v108
  %v110 = vpop.f32.mrf.mxu0
  %111 = vdwg.mxu0
  %v112 = vxor.u32 %v106, 2147483648
  %v113 = vxor.u32 %v109, 2147483648
  %v114 = vmul.f32 %v112, 1.442695
  %v115 = vpow.pop %v114
  %v116 = vmul.f32 %v113, 1.442695
  %v117 = vpow.pop %v116
  %v118 = vadd.f32 %v115, 1.0
  %v119 = vadd.f32 %v117, 1.0
  %v120 = vrcp.pop %v118
  %v121 = vmul.f32 1.0, %v120
  %v122 = vrcp.pop %v119
  %v123 = vmul.f32 1.0, %v122
  %v124 = vmul.f32 %v106, %v121
  %v125 = vmul.f32 %v109, %v123
  %v126 = vpack.c.bf16 %v125, %v124
  %v127 = vld [vmem:[%s3] sm:$0xf]
  %v128 = vld [vmem:[%s3 + $0x4] sm:$0xf]
  %v129 = vld [vmem:[%s3 + $0x8] sm:$0xf]
  %v130 = vld [vmem:[%s3 + $0xc] sm:$0xf]
  %v131 = vld [vmem:[%s4] sm:$0x1]
  %v133 = vlaneseq
  %v134 = vshrl.u32 %v133, 7
  %v135 = vsub.s32 0, %v134
  %v136 = vrot.slane %v131, %v135
  %v142 = vunpack.c.l.b16 %v127
  %v143 = vunpack.c.l.b16 %v128
  %v144 = vunpack.c.l.b16 %v129
  %v145 = vunpack.c.l.b16 %v130
  %v146 = vpack.c.b16 %v143, %v142
  %v147 = vpack.c.b16 %v145, %v144
  %vm150 = vcmask 261120
  %v152 = vsel %vm150, %v126, 0
  %154 = vmatprep.subr.bf16.mxu0 0
  %155 = vmatpush1.bf16.msra.mxu0 0
  %156 = vmatprep.subr.bf16.mxu0 0
  %157 = vmatpush1.bf16.msra.mxu0 0
  %158 = vmatprep.subr.bf16.mxu0 0
  %159 = vmatpush1.bf16.msra.mxu0 0
  %160 = vmatprep.subr.bf16.mxu0 0
  %161 = vmatpush1.bf16.msra.mxu0 0
  %162 = vmatprep.subr.bf16.mxu0 0
  %163 = vmatpush1.bf16.msra.mxu0 0
  %164 = vmatprep.subr.bf16.mxu0 0
  %165 = vmatpush1.bf16.msra.mxu0 0
  %166 = vmatprep.subr.bf16.mxu0 0
  %167 = vmatpush1.bf16.msra.mxu0 %v147
  %168 = vmatprep.subr.bf16.mxu0 0
  %169 = vmatpush1.bf16.msra.mxu0 %v146
  %170 = vmatprep.subr.bf16.mxu0 0
  %171 = vmatpush2.bf16.msra.mxu0 0
  %172 = vmatprep.subr.bf16.mxu0 0
  %173 = vmatpush2.bf16.msra.mxu0 0
  %174 = vmatprep.subr.bf16.mxu0 0
  %175 = vmatpush2.bf16.msra.mxu0 0
  %176 = vmatprep.subr.bf16.mxu0 0
  %177 = vmatpush2.bf16.msra.mxu0 0
  %178 = vmatprep.subr.bf16.mxu0 0
  %179 = vmatpush2.bf16.msra.mxu0 0
  %180 = vmatprep.subr.bf16.mxu0 0
  %181 = vmatpush2.bf16.msra.mxu0 0
  %182 = vmatprep.subr.bf16.mxu0 0
  %183 = vmatpush2.bf16.msra.mxu0 0
  %184 = vmatprep.subr.bf16.mxu0 0
  %185 = vmatpush2.bf16.msra.mxu0 0
  %186 = vmatprep.mubr.bf16.mxu0 0
  %187 = vmatmul.mubr.bf16.gmra.mxu0 %v152
  %v188 = vpop.f32.mrf.mxu0
  %v189 = vadd.f32 %v136, %v188
  %v190 = vpop.f32.mrf.mxu0
  %v191 = vpop.f32.mrf.mxu0
  %v192 = vadd.f32 %v136, %v191
  %v193 = vpop.f32.mrf.mxu0
  %194 = vdwg.mxu0
  %195 = vst [vmem:[%s5] sm:$0xff] %v189
  %196 = vst [vmem:[%s5 + $0x8] sm:$0xff] %v192
  // Predicated region
  $region22: #{schnet_gcl_forward.13} parent=0 // pred_check
    _
  $region23: #{schnet_gcl_forward.13} parent=0 // pred_check_branch
    %198 = sbr.rel (0) target = $region25
  $region24: #{schnet_gcl_forward.13} parent=0 // pred_region
    _
  $region25: #{schnet_gcl_forward.13} parent=0 // pred_fallthru
    _
  // Predicated region
  $region26: #{schnet_gcl_forward.13} parent=0 // pred_check
    _
  $region27: #{schnet_gcl_forward.13} parent=0 // pred_check_branch
    %200 = sbr.rel (0) target = $region29
  $region28: #{schnet_gcl_forward.13} parent=0 // pred_region
    _
  $region29: #{schnet_gcl_forward.13} parent=0 // pred_fallthru
    _

// kernel: schnet_gcl_forward.12
$region0: #{schnet_gcl_forward.12}
  #allocation0 [shape = 'u32[]', space=smem, size = 0x4, offset = 0x4, fixed_abs, tag = 'smem constant byte address 0x4 - core index']
  #allocation1 [shape = 'u32[144,128]{1,0:T(1,128)}', space=vmem, size = 0x12000, scoped, tag = 'internal scratch']
  %s0 = inlined_call_operand.vmem [shape: bf16[16,196], index: 0, kind: input, shape index: {}]
  %s1 = inlined_call_operand.vmem [shape: bf16[196,32], index: 1, kind: input, shape index: {}]
  %s2 = inlined_call_operand.vmem [shape: f32[1,32], index: 2, kind: input, shape index: {}]
  %s3 = inlined_call_operand.vmem [shape: bf16[32,128], index: 3, kind: input, shape index: {}]
  %s4 = inlined_call_operand.vmem [shape: f32[1,128], index: 4, kind: input, shape index: {}]
  %s5 = inlined_call_operand.vmem [shape: f32[16,128], index: 5, kind: output, shape index: {}]
  %s6 = sld [smem:[#allocation0]]
  $region30: #{schnet_gcl_forward.12} parent=0
    _
  %s8 = ssub.s32 1, %s6
  %s9 = scalar_select 0, %s8, %s6
  // Predicated region
  $region2: #{schnet_gcl_forward.12} parent=0 // pred_check
    _
  $region3: #{schnet_gcl_forward.12} parent=0 // pred_check_branch
    %11 = sbr.rel (0) target = $region5
  $region4: #{schnet_gcl_forward.12} parent=0 // pred_region
    _
  $region5: #{schnet_gcl_forward.12} parent=0 // pred_fallthru
    _
  // Predicated region
  $region6: #{schnet_gcl_forward.12} parent=0 // pred_check
    _
  $region7: #{schnet_gcl_forward.12} parent=0 // pred_check_branch
    %13 = sbr.rel (0) target = $region9
  $region8: #{schnet_gcl_forward.12} parent=0 // pred_region
    _
  $region9: #{schnet_gcl_forward.12} parent=0 // pred_fallthru
    _
  // Predicated region
  $region10: #{schnet_gcl_forward.12} parent=0 // pred_check
    _
  $region11: #{schnet_gcl_forward.12} parent=0 // pred_check_branch
    %15 = sbr.rel (0) target = $region13
  $region12: #{schnet_gcl_forward.12} parent=0 // pred_region
    _
  $region13: #{schnet_gcl_forward.12} parent=0 // pred_fallthru
    _
  // Predicated region
  $region14: #{schnet_gcl_forward.12} parent=0 // pred_check
    _
  $region15: #{schnet_gcl_forward.12} parent=0 // pred_check_branch
    %17 = sbr.rel (0) target = $region17
  $region16: #{schnet_gcl_forward.12} parent=0 // pred_region
    _
  $region17: #{schnet_gcl_forward.12} parent=0 // pred_fallthru
    _
  // Predicated region
  $region18: #{schnet_gcl_forward.12} parent=0 // pred_check
    _
  $region19: #{schnet_gcl_forward.12} parent=0 // pred_check_branch
    %19 = sbr.rel (0) target = $region21
  $region20: #{schnet_gcl_forward.12} parent=0 // pred_region
    _
  $region21: #{schnet_gcl_forward.12} parent=0 // pred_fallthru
    _
  %v21 = vld [vmem:[%s0] sm:$0xff]
  %v22 = vld [vmem:[%s0 + $0x8] sm:$0xff]
  %v23 = vld [vmem:[%s1] sm:$0xf]
  %v24 = vld [vmem:[%s1 + $0x4] sm:$0xf]
  %v25 = vld [vmem:[%s1 + $0x8] sm:$0xf]
  %v26 = vld [vmem:[%s1 + $0xc] sm:$0xf]
  %v27 = vld [vmem:[%s1 + $0x10] sm:$0xf]
  %v28 = vld [vmem:[%s1 + $0x14] sm:$0xf]
  %v29 = vld [vmem:[%s1 + $0x18] sm:$0xf]
  %v30 = vld [vmem:[%s1 + $0x1c] sm:$0xf]
  %v31 = vld [vmem:[%s1 + $0x20] sm:$0xf]
  %v32 = vld [vmem:[%s1 + $0x24] sm:$0xf]
  %v33 = vld [vmem:[%s1 + $0x28] sm:$0xf]
  %v34 = vld [vmem:[%s1 + $0x2c] sm:$0xf]
  %v35 = vld [vmem:[%s1 + $0x30] sm:$0xf]
  %v36 = vld [vmem:[%s1 + $0x34] sm:$0xf]
  %v37 = vld [vmem:[%s1 + $0x38] sm:$0xf]
  %v38 = vld [vmem:[%s1 + $0x3c] sm:$0xf]
  %v39 = vld [vmem:[%s1 + $0x40] sm:$0xf]
  %v40 = vld [vmem:[%s1 + $0x44] sm:$0xf]
  %v41 = vld [vmem:[%s1 + $0x48] sm:$0xf]
  %v42 = vld [vmem:[%s1 + $0x4c] sm:$0xf]
  %v43 = vld [vmem:[%s1 + $0x50] sm:$0xf]
  %v44 = vld [vmem:[%s1 + $0x54] sm:$0xf]
  %v45 = vld [vmem:[%s1 + $0x58] sm:$0xf]
  %v46 = vld [vmem:[%s1 + $0x5c] sm:$0xf]
  %v47 = vld [vmem:[%s1 + $0x60] sm:$0x3]
  %v48 = vld [vmem:[%s2] sm:$0x1]
  %v50 = vlaneseq
  %v51 = vshrl.u32 %v50, 7
  %v52 = vsub.s32 0, %v51
  %v53 = vrot.slane %v48, %v52
  %v57 = vunpack.c.l.b16 %v21
  %v58 = vunpack.c.h.b16 %v21
  %v59 = vunpack.c.l.b16 %v22
  %v60 = vunpack.c.h.b16 %v22
  %v61 = vpack.c.b16 %v59, %v57
  %v62 = vpack.c.b16 %v60, %v58
  %v89 = vunpack.c.l.b16 %v23
  %v90 = vunpack.c.l.b16 %v24
  %v91 = vunpack.c.l.b16 %v25
  %v92 = vunpack.c.l.b16 %v26
  %v93 = vunpack.c.l.b16 %v27
  %v94 = vunpack.c.l.b16 %v28
  %v95 = vunpack.c.l.b16 %v29
  %v96 = vunpack.c.l.b16 %v30
  %v97 = vunpack.c.l.b16 %v31
  %v98 = vunpack.c.l.b16 %v32
  %v99 = vunpack.c.l.b16 %v33
  %v100 = vunpack.c.l.b16 %v34
  %v101 = vunpack.c.l.b16 %v35
  %v102 = vunpack.c.l.b16 %v36
  %v103 = vunpack.c.l.b16 %v37
  %v104 = vunpack.c.l.b16 %v38
  %v105 = vunpack.c.l.b16 %v39
  %v106 = vunpack.c.l.b16 %v40
  %v107 = vunpack.c.l.b16 %v41
  %v108 = vunpack.c.l.b16 %v42
  %v109 = vunpack.c.l.b16 %v43
  %v110 = vunpack.c.l.b16 %v44
  %v111 = vunpack.c.l.b16 %v45
  %v112 = vunpack.c.l.b16 %v46
  %v113 = vunpack.c.l.b16 %v47
  %v114 = vpack.c.b16 %v90, %v89
  %v115 = vpack.c.b16 %v92, %v91
  %v116 = vpack.c.b16 %v94, %v93
  %v117 = vpack.c.b16 %v96, %v95
  %v118 = vpack.c.b16 %v98, %v97
  %v119 = vpack.c.b16 %v100, %v99
  %v120 = vpack.c.b16 %v102, %v101
  %v121 = vpack.c.b16 %v104, %v103
  %v122 = vpack.c.b16 %v106, %v105
  %v123 = vpack.c.b16 %v108, %v107
  %v124 = vpack.c.b16 %v110, %v109
  %v125 = vpack.c.b16 %v112, %v111
  %v126 = vpack.c.b16 %v113, %v113
  %vm139 = vcmask 556032
  %v141 = vsel %vm139, %v62, 0
  %vm143 = vcmask 1041408
  %v145 = vsel %vm143, %v126, 0
  %147 = vmatprep.subr.bf16.mxu0 0
  %148 = vmatpush1.bf16.msra.mxu0 %v121
  %149 = vmatprep.subr.bf16.mxu0 0
  %150 = vmatpush1.bf16.msra.mxu0 %v120
  %151 = vmatprep.subr.bf16.mxu0 0
  %152 = vmatpush1.bf16.msra.mxu0 %v119
  %153 = vmatprep.subr.bf16.mxu0 0
  %154 = vmatpush1.bf16.msra.mxu0 %v118
  %155 = vmatprep.subr.bf16.mxu0 0
  %156 = vmatpush1.bf16.msra.mxu0 %v117
  %157 = vmatprep.subr.bf16.mxu0 0
  %158 = vmatpush1.bf16.msra.mxu0 %v116
  %159 = vmatprep.subr.bf16.mxu0 0
  %160 = vmatpush1.bf16.msra.mxu0 %v115
  %161 = vmatprep.subr.bf16.mxu0 0
  %162 = vmatpush1.bf16.msra.mxu0 %v114
  %163 = vmatprep.subr.bf16.mxu0 0
  %164 = vmatpush2.bf16.msra.mxu0 0
  %165 = vmatprep.subr.bf16.mxu0 0
  %166 = vmatpush2.bf16.msra.mxu0 0
  %167 = vmatprep.subr.bf16.mxu0 0
  %168 = vmatpush2.bf16.msra.mxu0 0
  %169 = vmatprep.subr.bf16.mxu0 0
  %170 = vmatpush2.bf16.msra.mxu0 %v145
  %171 = vmatprep.subr.bf16.mxu0 0
  %172 = vmatpush2.bf16.msra.mxu0 %v125
  %173 = vmatprep.subr.bf16.mxu0 0
  %174 = vmatpush2.bf16.msra.mxu0 %v124
  %175 = vmatprep.subr.bf16.mxu0 0
  %176 = vmatpush2.bf16.msra.mxu0 %v123
  %177 = vmatprep.subr.bf16.mxu0 0
  %178 = vmatpush2.bf16.msra.mxu0 %v122
  %179 = vmatprep.mubr.bf16.mxu0 %v141
  %180 = vmatmul.mubr.bf16.gmra.mxu0 %v61
  %v181 = vpop.f32.mrf.mxu0
  %v182 = vadd.f32 %v53, %v181
  %v183 = vpop.f32.mrf.mxu0
  %v184 = vpop.f32.mrf.mxu0
  %v185 = vadd.f32 %v53, %v184
  %v186 = vpop.f32.mrf.mxu0
  %187 = vdwg.mxu0
  %v188 = vxor.u32 %v182, 2147483648
  %v189 = vxor.u32 %v185, 2147483648
  %v190 = vmul.f32 %v188, 1.442695
  %v191 = vpow.pop %v190
  %v192 = vmul.f32 %v189, 1.442695
  %v193 = vpow.pop %v192
  %v194 = vadd.f32 %v191, 1.0
  %v195 = vadd.f32 %v193, 1.0
  %v196 = vrcp.pop %v194
  %v197 = vmul.f32 1.0, %v196
  %v198 = vrcp.pop %v195
  %v199 = vmul.f32 1.0, %v198
  %v200 = vmul.f32 %v182, %v197
  %v201 = vmul.f32 %v185, %v199
  %v202 = vpack.c.bf16 %v201, %v200
  %v203 = vld [vmem:[%s3] sm:$0xf]
  %v204 = vld [vmem:[%s3 + $0x4] sm:$0xf]
  %v205 = vld [vmem:[%s3 + $0x8] sm:$0xf]
  %v206 = vld [vmem:[%s3 + $0xc] sm:$0xf]
  %v207 = vld [vmem:[%s4] sm:$0x1]
  %v209 = vlaneseq
  %v210 = vshrl.u32 %v209, 7
  %v211 = vsub.s32 0, %v210
  %v212 = vrot.slane %v207, %v211
  %v218 = vunpack.c.l.b16 %v203
  %v219 = vunpack.c.l.b16 %v204
  %v220 = vunpack.c.l.b16 %v205
  %v221 = vunpack.c.l.b16 %v206
  %v222 = vpack.c.b16 %v219, %v218
  %v223 = vpack.c.b16 %v221, %v220
  %vm226 = vcmask 261120
  %v228 = vsel %vm226, %v202, 0
  %230 = vmatprep.subr.bf16.mxu0 0
  %231 = vmatpush1.bf16.msra.mxu0 0
  %232 = vmatprep.subr.bf16.mxu0 0
  %233 = vmatpush1.bf16.msra.mxu0 0
  %234 = vmatprep.subr.bf16.mxu0 0
  %235 = vmatpush1.bf16.msra.mxu0 0
  %236 = vmatprep.subr.bf16.mxu0 0
  %237 = vmatpush1.bf16.msra.mxu0 0
  %238 = vmatprep.subr.bf16.mxu0 0
  %239 = vmatpush1.bf16.msra.mxu0 0
  %240 = vmatprep.subr.bf16.mxu0 0
  %241 = vmatpush1.bf16.msra.mxu0 0
  %242 = vmatprep.subr.bf16.mxu0 0
  %243 = vmatpush1.bf16.msra.mxu0 %v223
  %244 = vmatprep.subr.bf16.mxu0 0
  %245 = vmatpush1.bf16.msra.mxu0 %v222
  %246 = vmatprep.subr.bf16.mxu0 0
  %247 = vmatpush2.bf16.msra.mxu0 0
  %248 = vmatprep.subr.bf16.mxu0 0
  %249 = vmatpush2.bf16.msra.mxu0 0
  %250 = vmatprep.subr.bf16.mxu0 0
  %251 = vmatpush2.bf16.msra.mxu0 0
  %252 = vmatprep.subr.bf16.mxu0 0
  %253 = vmatpush2.bf16.msra.mxu0 0
  %254 = vmatprep.subr.bf16.mxu0 0
  %255 = vmatpush2.bf16.msra.mxu0 0
  %256 = vmatprep.subr.bf16.mxu0 0
  %257 = vmatpush2.bf16.msra.mxu0 0
  %258 = vmatprep.subr.bf16.mxu0 0
  %259 = vmatpush2.bf16.msra.mxu0 0
  %260 = vmatprep.subr.bf16.mxu0 0
  %261 = vmatpush2.bf16.msra.mxu0 0
  %262 = vmatprep.mubr.bf16.mxu0 0
  %263 = vmatmul.mubr.bf16.gmra.mxu0 %v228
  %v264 = vpop.f32.mrf.mxu0
  %v265 = vadd.f32 %v212, %v264
  %v266 = vpop.f32.mrf.mxu0
  %v267 = vpop.f32.mrf.mxu0
  %v268 = vadd.f32 %v212, %v267
  %v269 = vpop.f32.mrf.mxu0
  %270 = vdwg.mxu0
  %271 = vst [vmem:[%s5] sm:$0xff] %v265
  %272 = vst [vmem:[%s5 + $0x8] sm:$0xff] %v268
  // Predicated region
  $region22: #{schnet_gcl_forward.12} parent=0 // pred_check
    _
  $region23: #{schnet_gcl_forward.12} parent=0 // pred_check_branch
    %274 = sbr.rel (0) target = $region25
  $region24: #{schnet_gcl_forward.12} parent=0 // pred_region
    _
  $region25: #{schnet_gcl_forward.12} parent=0 // pred_fallthru
    _
  // Predicated region
  $region26: #{schnet_gcl_forward.12} parent=0 // pred_check
    _
  $region27: #{schnet_gcl_forward.12} parent=0 // pred_check_branch
    %276 = sbr.rel (0) target = $region29
  $region28: #{schnet_gcl_forward.12} parent=0 // pred_region
    _
  $region29: #{schnet_gcl_forward.12} parent=0 // pred_fallthru
    _

</llo_original>
